<compile_context>
chip_gen: v5e
topology: v5e:2x2
jax: 0.10.0
libtpu: 0.0.40
codegen_flags: <defaults>
</compile_context>

<pallas_src>
import functools

import jax
import jax.numpy as jnp
from jax import lax
from jax.experimental import pallas as pl
from jax.experimental.pallas import tpu as pltpu


BN_EPS = 1e-5
LEAKY_SLOPE = 0.01  # nn.LeakyReLU() default negative_slope


def _leaky_relu(y):
    return jnp.where(y > 0, y, LEAKY_SLOPE * y)


def _fused_kernel(x_ref, w1_ref, b1_ref, gamma_ref, beta_ref, w2_ref, b2_ref,
                  out_ref, stats_ref, ss_ref, *maybe_act,
                  tile_m, m_total, n_tiles, cache_act):
    """grid = (2, n_tiles): pass 0 = batch stats (+ act cache), pass 1 = apply."""
    act_ref = maybe_act[0] if cache_act else None
    p = pl.program_id(0)
    i = pl.program_id(1)

    # ----------------- pass 0: global batch statistics ---------------------
    @pl.when(p == 0)
    def _():
        @pl.when(i == 0)
        def _():
            stats_ref[...] = jnp.zeros_like(stats_ref)

        a = _leaky_relu(
            jnp.dot(x_ref[...], w1_ref[...], preferred_element_type=jnp.float32)
            + b1_ref[...])

        def accumulate(a_valid):
            stats_ref[0:1, :] += jnp.sum(a_valid, axis=0, keepdims=True)
            stats_ref[1:2, :] += jnp.sum(a_valid * a_valid, axis=0, keepdims=True)
            if cache_act:
                act_ref[i] = a_valid

        rem = m_total - (n_tiles - 1) * tile_m  # valid rows in the last tile
        if rem == tile_m:
            # Row count is tile-aligned: no masking anywhere.
            accumulate(a)
        else:
            # Only the last tile carries pad rows; interior tiles skip the mask.
            @pl.when(i == n_tiles - 1)
            def _():
                r = lax.broadcasted_iota(jnp.int32, (tile_m, 1), 0)
                accumulate(jnp.where(r < rem, a, 0.0))

            @pl.when(i != n_tiles - 1)
            def _():
                accumulate(a)

    # ----------------- pass 1: fold BN once, apply, Linear2 ----------------
    @pl.when(p == 1)
    def _():
        @pl.when(i == 0)
        def _():
            inv_m = jnp.float32(1.0 / m_total)
            mean = stats_ref[0:1, :] * inv_m
            var = jnp.maximum(stats_ref[1:2, :] * inv_m - mean * mean, 0.0)
            scale = gamma_ref[...] * lax.rsqrt(var + BN_EPS)
            ss_ref[0:1, :] = scale
            ss_ref[1:2, :] = beta_ref[...] - mean * scale

        if cache_act:
            a = act_ref[i]
        else:
            a = _leaky_relu(
                jnp.dot(x_ref[...], w1_ref[...],
                        preferred_element_type=jnp.float32)
                + b1_ref[...])

        z = a * ss_ref[0:1, :] + ss_ref[1:2, :]
        out = jnp.dot(z, w2_ref[...], preferred_element_type=jnp.float32) + b2_ref[...]
        out_ref[...] = out.astype(out_ref.dtype)


def vertex_readout(h, w1, b1, gamma, beta, w2, b2, *,
                   tile_m=512, act_cache_bytes=8 * 1024 * 1024):
    """h: [B, N, D]; w1: [D, H]; w2: [H, T]; biases / BN params: [1, feat]."""
    B, N, D = h.shape
    H = w1.shape[1]
    T = w2.shape[1]
    M = B * N

    tile_m = max(8, (tile_m // 8) * 8)           # sublane-aligned row tile
    n_tiles = pl.cdiv(M, tile_m)
    Mp = n_tiles * tile_m

    # Cache the [Mp, H] activation in VMEM when it fits a conservative budget
    # (safe under v5e's 16 MiB scoped default); otherwise recompute in pass 1.
    cache_act = (Mp * H * 4) <= act_cache_bytes

    x2d = h.reshape(M, D)                        # no jnp.pad: ragged tile is
                                                 # handled inside the kernel.

    if cache_act:
        # During pass 1 x is not needed: pin the block index so it is not
        # re-DMA'd per step.
        x_spec = pl.BlockSpec((tile_m, D), lambda p, i: (i * (1 - p), 0))
    else:
        x_spec = pl.BlockSpec((tile_m, D), lambda p, i: (i, 0))

    def const(shape):                            # VMEM-resident across the grid
        return pl.BlockSpec(shape, lambda p, i: (0, 0))

    # Collapse the output block index during pass 0 so no uninitialized block
    # is ever written back; pass 1 walks the row tiles.
    out_spec = pl.BlockSpec((tile_m, T), lambda p, i: (i * p, 0))

    scratch = [pltpu.VMEM((2, H), jnp.float32),   # sum / sum-of-squares
               pltpu.VMEM((2, H), jnp.float32)]   # folded BN scale / shift
    if cache_act:
        scratch.append(pltpu.VMEM((n_tiles, tile_m, H), jnp.float32))

    kernel = functools.partial(_fused_kernel, tile_m=tile_m, m_total=M,
                               n_tiles=n_tiles, cache_act=cache_act)

    out = pl.pallas_call(
        kernel,
        out_shape=jax.ShapeDtypeStruct((M, T), jnp.float32),
        grid=(2, n_tiles),
        in_specs=[x_spec, const((D, H)), const((1, H)), const((1, H)),
                  const((1, H)), const((H, T)), const((1, T))],
        out_specs=out_spec,
        scratch_shapes=scratch,
        compiler_params=pltpu.CompilerParams(
            dimension_semantics=("arbitrary", "arbitrary")),
    )(x2d, w1, b1, gamma, beta, w2, b2)

    return out.reshape(B, N, T)


def _reference(h, w1, b1, gamma, beta, w2, b2):
    B, N, D = h.shape
    x = h.reshape(-1, D)
    y = x @ w1 + b1
    a = jnp.where(y > 0, y, LEAKY_SLOPE * y)
    mu = jnp.mean(a, axis=0, keepdims=True)
    var = jnp.mean((a - mu) ** 2, axis=0, keepdims=True)
    z = (a - mu) * lax.rsqrt(var + BN_EPS) * gamma + beta
    out = z @ w2 + b2
    return out.reshape(B, N, -1)


if __name__ == "__main__":
    # config: hidden_dim=32, readout_hidden_dim=64, target_dim=4
    # B*N = 400 is NOT a multiple of tile_m -> exercises the ragged last tile
    # (masked stats, dropped OOB output rows) with no wrapper-side padding.
    B, N, D, H, T = 4, 100, 32, 64, 4

    key = jax.random.PRNGKey(0)
    k_h, k_w1, k_b1, k_w2, k_b2 = jax.random.split(key, 5)

    h = jax.random.normal(k_h, (B, N, D), dtype=jnp.float32)

    # Deterministic PyTorch-style uniform init, [in, out] weight layout.
    lim1 = 1.0 / (D ** 0.5)
    w1 = jax.random.uniform(k_w1, (D, H), jnp.float32, -lim1, lim1)
    b1 = jax.random.uniform(k_b1, (1, H), jnp.float32, -lim1, lim1)
    gamma = jnp.ones((1, H), jnp.float32)   # BatchNorm default weight
    beta = jnp.zeros((1, H), jnp.float32)   # BatchNorm default bias
    lim2 = 1.0 / (H ** 0.5)
    w2 = jax.random.uniform(k_w2, (H, T), jnp.float32, -lim2, lim2)
    b2 = jax.random.uniform(k_b2, (1, T), jnp.float32, -lim2, lim2)

    out = vertex_readout(h, w1, b1, gamma, beta, w2, b2)
    out = jax.block_until_ready(out)

    ref = _reference(h, w1, b1, gamma, beta, w2, b2)
    assert out.shape == (B, N, T)
    assert jnp.allclose(out, ref, rtol=1e-4, atol=1e-4), float(
        jnp.max(jnp.abs(out - ref)))

    print("KERNEL_OK")
</pallas_src>

<mosaic_0001>
module attributes {stable_mosaic.version = 11 : i64} {
  func.func @_fused_kernel(%arg0: i32, %arg1: i32, %arg2: memref<512x32xf32, #tpu.memory_space<vmem>>, %arg3: memref<32x64xf32, #tpu.memory_space<vmem>>, %arg4: memref<1x64xf32, #tpu.memory_space<vmem>>, %arg5: memref<1x64xf32, #tpu.memory_space<vmem>>, %arg6: memref<1x64xf32, #tpu.memory_space<vmem>>, %arg7: memref<64x4xf32, #tpu.memory_space<vmem>>, %arg8: memref<1x4xf32, #tpu.memory_space<vmem>>, %arg9: memref<512x4xf32, #tpu.memory_space<vmem>>, %arg10: memref<2x64xf32, #tpu.memory_space<vmem>>, %arg11: memref<2x64xf32, #tpu.memory_space<vmem>>, %arg12: memref<1x512x64xf32, #tpu.memory_space<vmem>>) attributes {dimension_semantics = [#tpu.dimension_semantics<arbitrary>, #tpu.dimension_semantics<arbitrary>], iteration_bounds = array<i64: 2, 1>, scalar_prefetch = 0 : i64, scratch_operands = 3 : i64, tpu.core_type = #tpu.core_type<tc>, window_params = [{transform_indices = @transform_0, window_bounds = array<i64: 512, 32>}, {pipeline_mode = #tpu.pipeline_mode<synchronous>, transform_indices = @transform_1, window_bounds = array<i64: 32, 64>}, {pipeline_mode = #tpu.pipeline_mode<synchronous>, transform_indices = @transform_2, window_bounds = array<i64: 1, 64>}, {pipeline_mode = #tpu.pipeline_mode<synchronous>, transform_indices = @transform_3, window_bounds = array<i64: 1, 64>}, {pipeline_mode = #tpu.pipeline_mode<synchronous>, transform_indices = @transform_4, window_bounds = array<i64: 1, 64>}, {pipeline_mode = #tpu.pipeline_mode<synchronous>, transform_indices = @transform_5, window_bounds = array<i64: 64, 4>}, {pipeline_mode = #tpu.pipeline_mode<synchronous>, transform_indices = @transform_6, window_bounds = array<i64: 1, 4>}, {transform_indices = @transform_7, window_bounds = array<i64: 512, 4>}]} {
    %c0_i32 = arith.constant 0 : i32
    %0 = arith.cmpi eq, %arg0, %c0_i32 : i32
    %1 = arith.extui %0 : i1 to i32
    %c0_i32_0 = arith.constant 0 : i32
    %2 = arith.cmpi ne, %1, %c0_i32_0 : i32
    scf.if %2 {
      %c0_i32_2 = arith.constant 0 : i32
      %6 = arith.cmpi eq, %arg1, %c0_i32_2 : i32
      %7 = arith.extui %6 : i1 to i32
      %c0_i32_3 = arith.constant 0 : i32
      %8 = arith.cmpi ne, %7, %c0_i32_3 : i32
      scf.if %8 {
        %cst_15 = arith.constant 0.000000e+00 : f32
        %26 = vector.broadcast %cst_15 : f32 to vector<2x64xf32>
        %c0_16 = arith.constant 0 : index
        %c0_17 = arith.constant 0 : index
        %27 = vector.load %arg10[%c0_16, %c0_17] : memref<2x64xf32, #tpu.memory_space<vmem>>, vector<2x64xf32>
        tpu.vector_store %arg10[%c0_16, %c0_17], %26 {strides = array<i32>} : memref<2x64xf32, #tpu.memory_space<vmem>>, vector<2x64xf32>,
      } else {
      }
      %c0 = arith.constant 0 : index
      %c0_4 = arith.constant 0 : index
      %9 = vector.load %arg2[%c0, %c0_4] : memref<512x32xf32, #tpu.memory_space<vmem>>, vector<512x32xf32>
      %c0_5 = arith.constant 0 : index
      %c0_6 = arith.constant 0 : index
      %10 = vector.load %arg3[%c0_5, %c0_6] : memref<32x64xf32, #tpu.memory_space<vmem>>, vector<32x64xf32>
      %cst = arith.constant dense<0.000000e+00> : vector<512x64xf32>
      %11 = tpu.matmul %9, %10, %cst {dimension_numbers = #tpu.dot_dimension_numbers<[1], [0], [0], [1], [0, 0, 1, 1], [], []>} : vector<512x32xf32>, vector<32x64xf32>, vector<512x64xf32> -> vector<512x64xf32>
      %c0_7 = arith.constant 0 : index
      %c0_8 = arith.constant 0 : index
      %12 = vector.load %arg4[%c0_7, %c0_8] : memref<1x64xf32, #tpu.memory_space<vmem>>, vector<1x64xf32>
      %13 = vector.broadcast %12 : vector<1x64xf32> to vector<512x64xf32>
      %14 = arith.addf %11, %13 : vector<512x64xf32>
      %cst_9 = arith.constant 0.000000e+00 : f32
      %15 = vector.broadcast %cst_9 : f32 to vector<512x64xf32>
      %16 = arith.cmpf ogt, %14, %15 : vector<512x64xf32>
      %cst_10 = arith.constant 0.00999999977 : f32
      %17 = vector.broadcast %cst_10 : f32 to vector<512x64xf32>
      %18 = arith.mulf %17, %14 : vector<512x64xf32>
      %19 = arith.select %16, %14, %18 : vector<512x64xi1>, vector<512x64xf32>
      %c0_i32_11 = arith.constant 0 : i32
      %20 = arith.cmpi eq, %arg1, %c0_i32_11 : i32
      %21 = arith.extui %20 : i1 to i32
      %c0_i32_12 = arith.constant 0 : i32
      %22 = arith.cmpi ne, %21, %c0_i32_12 : i32
      scf.if %22 {
        %26 = tpu.iota {dimensions = array<i32: 0>} : vector<512x1xi32>
        %c400_i32 = arith.constant 400 : i32
        %27 = vector.broadcast %c400_i32 : i32 to vector<512x1xi32>
        %28 = arith.cmpi slt, %26, %27 : vector<512x1xi32>
        %cst_15 = arith.constant 0.000000e+00 : f32
        %29 = vector.shape_cast %28 : vector<512x1xi1> to vector<512x1xi1>
        %30 = vector.broadcast %29 : vector<512x1xi1> to vector<512x64xi1>
        %31 = vector.broadcast %cst_15 : f32 to vector<512x64xf32>
        %32 = arith.select %30, %19, %31 : vector<512x64xi1>, vector<512x64xf32>
        %c0_16 = arith.constant 0 : index
        %c0_17 = arith.constant 0 : index
        %33 = vector.load %arg10[%c0_16, %c0_17] : memref<2x64xf32, #tpu.memory_space<vmem>>, vector<1x64xf32>
        %cst_18 = arith.constant dense<0.000000e+00> : vector<64xf32>
        %34 = vector.multi_reduction <add>, %32, %cst_18 [0] : vector<512x64xf32> to vector<64xf32>
        %35 = vector.shape_cast %34 : vector<64xf32> to vector<1x64xf32>
        %36 = arith.addf %33, %35 : vector<1x64xf32>
        %c0_19 = arith.constant 0 : index
        %c0_20 = arith.constant 0 : index
        %37 = vector.load %arg10[%c0_19, %c0_20] : memref<2x64xf32, #tpu.memory_space<vmem>>, vector<1x64xf32>
        tpu.vector_store %arg10[%c0_19, %c0_20], %36 {strides = array<i32>} : memref<2x64xf32, #tpu.memory_space<vmem>>, vector<1x64xf32>,
        %c1 = arith.constant 1 : index
        %c0_21 = arith.constant 0 : index
        %38 = vector.load %arg10[%c1, %c0_21] : memref<2x64xf32, #tpu.memory_space<vmem>>, vector<1x64xf32>
        %39 = arith.mulf %32, %32 : vector<512x64xf32>
        %cst_22 = arith.constant dense<0.000000e+00> : vector<64xf32>
        %40 = vector.multi_reduction <add>, %39, %cst_22 [0] : vector<512x64xf32> to vector<64xf32>
        %41 = vector.shape_cast %40 : vector<64xf32> to vector<1x64xf32>
        %42 = arith.addf %38, %41 : vector<1x64xf32>
        %c1_23 = arith.constant 1 : index
        %c0_24 = arith.constant 0 : index
        %43 = vector.load %arg10[%c1_23, %c0_24] : memref<2x64xf32, #tpu.memory_space<vmem>>, vector<1x64xf32>
        tpu.vector_store %arg10[%c1_23, %c0_24], %42 {strides = array<i32>} : memref<2x64xf32, #tpu.memory_space<vmem>>, vector<1x64xf32>,
        %44 = arith.index_cast %arg1 : i32 to index
        %c0_25 = arith.constant 0 : index
        %c0_26 = arith.constant 0 : index
        %45 = vector.load %arg12[%44, %c0_25, %c0_26] : memref<1x512x64xf32, #tpu.memory_space<vmem>>, vector<1x512x64xf32>
        %46 = vector.shape_cast %45 : vector<1x512x64xf32> to vector<512x64xf32>
        %47 = vector.shape_cast %32 : vector<512x64xf32> to vector<1x512x64xf32>
        tpu.vector_store %arg12[%44, %c0_25, %c0_26], %47 {strides = array<i32>} : memref<1x512x64xf32, #tpu.memory_space<vmem>>, vector<1x512x64xf32>,
      } else {
      }
      %c0_i32_13 = arith.constant 0 : i32
      %23 = arith.cmpi ne, %arg1, %c0_i32_13 : i32
      %24 = arith.extui %23 : i1 to i32
      %c0_i32_14 = arith.constant 0 : i32
      %25 = arith.cmpi ne, %24, %c0_i32_14 : i32
      scf.if %25 {
        %c0_15 = arith.constant 0 : index
        %c0_16 = arith.constant 0 : index
        %26 = vector.load %arg10[%c0_15, %c0_16] : memref<2x64xf32, #tpu.memory_space<vmem>>, vector<1x64xf32>
        %cst_17 = arith.constant dense<0.000000e+00> : vector<64xf32>
        %27 = vector.multi_reduction <add>, %19, %cst_17 [0] : vector<512x64xf32> to vector<64xf32>
        %28 = vector.shape_cast %27 : vector<64xf32> to vector<1x64xf32>
        %29 = arith.addf %26, %28 : vector<1x64xf32>
        %c0_18 = arith.constant 0 : index
        %c0_19 = arith.constant 0 : index
        %30 = vector.load %arg10[%c0_18, %c0_19] : memref<2x64xf32, #tpu.memory_space<vmem>>, vector<1x64xf32>
        tpu.vector_store %arg10[%c0_18, %c0_19], %29 {strides = array<i32>} : memref<2x64xf32, #tpu.memory_space<vmem>>, vector<1x64xf32>,
        %c1 = arith.constant 1 : index
        %c0_20 = arith.constant 0 : index
        %31 = vector.load %arg10[%c1, %c0_20] : memref<2x64xf32, #tpu.memory_space<vmem>>, vector<1x64xf32>
        %32 = arith.mulf %19, %19 : vector<512x64xf32>
        %cst_21 = arith.constant dense<0.000000e+00> : vector<64xf32>
        %33 = vector.multi_reduction <add>, %32, %cst_21 [0] : vector<512x64xf32> to vector<64xf32>
        %34 = vector.shape_cast %33 : vector<64xf32> to vector<1x64xf32>
        %35 = arith.addf %31, %34 : vector<1x64xf32>
        %c1_22 = arith.constant 1 : index
        %c0_23 = arith.constant 0 : index
        %36 = vector.load %arg10[%c1_22, %c0_23] : memref<2x64xf32, #tpu.memory_space<vmem>>, vector<1x64xf32>
        tpu.vector_store %arg10[%c1_22, %c0_23], %35 {strides = array<i32>} : memref<2x64xf32, #tpu.memory_space<vmem>>, vector<1x64xf32>,
        %37 = arith.index_cast %arg1 : i32 to index
        %c0_24 = arith.constant 0 : index
        %c0_25 = arith.constant 0 : index
        %38 = vector.load %arg12[%37, %c0_24, %c0_25] : memref<1x512x64xf32, #tpu.memory_space<vmem>>, vector<1x512x64xf32>
        %39 = vector.shape_cast %38 : vector<1x512x64xf32> to vector<512x64xf32>
        %40 = vector.shape_cast %19 : vector<512x64xf32> to vector<1x512x64xf32>
        tpu.vector_store %arg12[%37, %c0_24, %c0_25], %40 {strides = array<i32>} : memref<1x512x64xf32, #tpu.memory_space<vmem>>, vector<1x512x64xf32>,
      } else {
      }
    } else {
    }
    %c1_i32 = arith.constant 1 : i32
    %3 = arith.cmpi eq, %arg0, %c1_i32 : i32
    %4 = arith.extui %3 : i1 to i32
    %c0_i32_1 = arith.constant 0 : i32
    %5 = arith.cmpi ne, %4, %c0_i32_1 : i32
    scf.if %5 {
      %c0_i32_2 = arith.constant 0 : i32
      %6 = arith.cmpi eq, %arg1, %c0_i32_2 : i32
      %7 = arith.extui %6 : i1 to i32
      %c0_i32_3 = arith.constant 0 : i32
      %8 = arith.cmpi ne, %7, %c0_i32_3 : i32
      scf.if %8 {
        %c0_14 = arith.constant 0 : index
        %c0_15 = arith.constant 0 : index
        %24 = vector.load %arg10[%c0_14, %c0_15] : memref<2x64xf32, #tpu.memory_space<vmem>>, vector<1x64xf32>
        %cst_16 = arith.constant 2.500000e-03 : f32
        %25 = vector.broadcast %cst_16 : f32 to vector<1x64xf32>
        %26 = arith.mulf %24, %25 : vector<1x64xf32>
        %c1_17 = arith.constant 1 : index
        %c0_18 = arith.constant 0 : index
        %27 = vector.load %arg10[%c1_17, %c0_18] : memref<2x64xf32, #tpu.memory_space<vmem>>, vector<1x64xf32>
        %cst_19 = arith.constant 2.500000e-03 : f32
        %28 = vector.broadcast %cst_19 : f32 to vector<1x64xf32>
        %29 = arith.mulf %27, %28 : vector<1x64xf32>
        %30 = arith.mulf %26, %26 : vector<1x64xf32>
        %31 = arith.subf %29, %30 : vector<1x64xf32>
        %cst_20 = arith.constant 0.000000e+00 : f32
        %32 = vector.broadcast %cst_20 : f32 to vector<1x64xf32>
        %33 = arith.maximumf %31, %32 : vector<1x64xf32>
        %c0_21 = arith.constant 0 : index
        %c0_22 = arith.constant 0 : index
        %34 = vector.load %arg5[%c0_21, %c0_22] : memref<1x64xf32, #tpu.memory_space<vmem>>, vector<1x64xf32>
        %cst_23 = arith.constant 9.99999974E-6 : f32
        %35 = vector.broadcast %cst_23 : f32 to vector<1x64xf32>
        %36 = arith.addf %33, %35 : vector<1x64xf32>
        %37 = math.rsqrt %36 : vector<1x64xf32>
        %38 = arith.mulf %34, %37 : vector<1x64xf32>
        %c0_24 = arith.constant 0 : index
        %c0_25 = arith.constant 0 : index
        %39 = vector.load %arg11[%c0_24, %c0_25] : memref<2x64xf32, #tpu.memory_space<vmem>>, vector<1x64xf32>
        tpu.vector_store %arg11[%c0_24, %c0_25], %38 {strides = array<i32>} : memref<2x64xf32, #tpu.memory_space<vmem>>, vector<1x64xf32>,
        %c0_26 = arith.constant 0 : index
        %c0_27 = arith.constant 0 : index
        %40 = vector.load %arg6[%c0_26, %c0_27] : memref<1x64xf32, #tpu.memory_space<vmem>>, vector<1x64xf32>
        %41 = arith.mulf %26, %38 : vector<1x64xf32>
        %42 = arith.subf %40, %41 : vector<1x64xf32>
        %c1_28 = arith.constant 1 : index
        %c0_29 = arith.constant 0 : index
        %43 = vector.load %arg11[%c1_28, %c0_29] : memref<2x64xf32, #tpu.memory_space<vmem>>, vector<1x64xf32>
        tpu.vector_store %arg11[%c1_28, %c0_29], %42 {strides = array<i32>} : memref<2x64xf32, #tpu.memory_space<vmem>>, vector<1x64xf32>,
      } else {
      }
      %9 = arith.index_cast %arg1 : i32 to index
      %c0 = arith.constant 0 : index
      %c0_4 = arith.constant 0 : index
      %10 = vector.load %arg12[%9, %c0, %c0_4] : memref<1x512x64xf32, #tpu.memory_space<vmem>>, vector<1x512x64xf32>
      %11 = vector.shape_cast %10 : vector<1x512x64xf32> to vector<512x64xf32>
      %c0_5 = arith.constant 0 : index
      %c0_6 = arith.constant 0 : index
      %12 = vector.load %arg11[%c0_5, %c0_6] : memref<2x64xf32, #tpu.memory_space<vmem>>, vector<1x64xf32>
      %13 = vector.broadcast %12 : vector<1x64xf32> to vector<512x64xf32>
      %14 = arith.mulf %11, %13 : vector<512x64xf32>
      %c1 = arith.constant 1 : index
      %c0_7 = arith.constant 0 : index
      %15 = vector.load %arg11[%c1, %c0_7] : memref<2x64xf32, #tpu.memory_space<vmem>>, vector<1x64xf32>
      %16 = vector.broadcast %15 : vector<1x64xf32> to vector<512x64xf32>
      %17 = arith.addf %14, %16 : vector<512x64xf32>
      %c0_8 = arith.constant 0 : index
      %c0_9 = arith.constant 0 : index
      %18 = vector.load %arg7[%c0_8, %c0_9] : memref<64x4xf32, #tpu.memory_space<vmem>>, vector<64x4xf32>
      %cst = arith.constant dense<0.000000e+00> : vector<512x4xf32>
      %19 = tpu.matmul %17, %18, %cst {dimension_numbers = #tpu.dot_dimension_numbers<[1], [0], [0], [1], [0, 0, 1, 1], [], []>} : vector<512x64xf32>, vector<64x4xf32>, vector<512x4xf32> -> vector<512x4xf32>
      %c0_10 = arith.constant 0 : index
      %c0_11 = arith.constant 0 : index
      %20 = vector.load %arg8[%c0_10, %c0_11] : memref<1x4xf32, #tpu.memory_space<vmem>>, vector<1x4xf32>
      %21 = vector.broadcast %20 : vector<1x4xf32> to vector<512x4xf32>
      %22 = arith.addf %19, %21 : vector<512x4xf32>
      %c0_12 = arith.constant 0 : index
      %c0_13 = arith.constant 0 : index
      %23 = vector.load %arg9[%c0_12, %c0_13] : memref<512x4xf32, #tpu.memory_space<vmem>>, vector<512x4xf32>
      tpu.vector_store %arg9[%c0_12, %c0_13], %22 {strides = array<i32>} : memref<512x4xf32, #tpu.memory_space<vmem>>, vector<512x4xf32>,
    } else {
    }
    return
  }
  func.func @transform_0(%arg0: i32, %arg1: i32) -> (i32, i32) {
    %c1_i32 = arith.constant 1 : i32
    %0 = arith.subi %c1_i32, %arg0 : i32
    %1 = arith.muli %arg1, %0 : i32
    %c0_i32 = arith.constant 0 : i32
    %c0_i32_0 = arith.constant 0 : i32
    return %1, %c0_i32 : i32, i32
  }
  func.func @transform_1(%arg0: i32, %arg1: i32) -> (i32, i32) {
    %c0_i32 = arith.constant 0 : i32
    %c0_i32_0 = arith.constant 0 : i32
    %c0_i32_1 = arith.constant 0 : i32
    return %c0_i32, %c0_i32_0 : i32, i32
  }
  func.func @transform_2(%arg0: i32, %arg1: i32) -> (i32, i32) {
    %c0_i32 = arith.constant 0 : i32
    %c0_i32_0 = arith.constant 0 : i32
    %c0_i32_1 = arith.constant 0 : i32
    return %c0_i32, %c0_i32_0 : i32, i32
  }
  func.func @transform_3(%arg0: i32, %arg1: i32) -> (i32, i32) {
    %c0_i32 = arith.constant 0 : i32
    %c0_i32_0 = arith.constant 0 : i32
    %c0_i32_1 = arith.constant 0 : i32
    return %c0_i32, %c0_i32_0 : i32, i32
  }
  func.func @transform_4(%arg0: i32, %arg1: i32) -> (i32, i32) {
    %c0_i32 = arith.constant 0 : i32
    %c0_i32_0 = arith.constant 0 : i32
    %c0_i32_1 = arith.constant 0 : i32
    return %c0_i32, %c0_i32_0 : i32, i32
  }
  func.func @transform_5(%arg0: i32, %arg1: i32) -> (i32, i32) {
    %c0_i32 = arith.constant 0 : i32
    %c0_i32_0 = arith.constant 0 : i32
    %c0_i32_1 = arith.constant 0 : i32
    return %c0_i32, %c0_i32_0 : i32, i32
  }
  func.func @transform_6(%arg0: i32, %arg1: i32) -> (i32, i32) {
    %c0_i32 = arith.constant 0 : i32
    %c0_i32_0 = arith.constant 0 : i32
    %c0_i32_1 = arith.constant 0 : i32
    return %c0_i32, %c0_i32_0 : i32, i32
  }
  func.func @transform_7(%arg0: i32, %arg1: i32) -> (i32, i32) {
    %0 = arith.muli %arg1, %arg0 : i32
    %c0_i32 = arith.constant 0 : i32
    %c0_i32_0 = arith.constant 0 : i32
    return %0, %c0_i32 : i32, i32
  }
}

</mosaic_0001>

<llo_original>
// kernel: tpu_custom_call.1
$region0: #{tpu_custom_call.1}
  #allocation0 [shape = 'u32[]', space=smem, size = 0x4, offset = 0x4, fixed_abs, tag = 'smem constant byte address 0x4 - core index']
  #allocation1 [shape = 'u32[72,128]{1,0:T(1,128)}', space=vmem, size = 0x9000, scoped, tag = 'internal scratch']
  #allocation2 [shape = 'f32[2,64]{1,0:T(2,128)}', space=vmem, size = 0x400, scoped, tag = 'scratch operand']
  #allocation3 [shape = 'f32[2,64]{1,0:T(2,128)}', space=vmem, size = 0x400, scoped, tag = 'scratch operand']
  #allocation4 [shape = 'f32[1,512,64]{2,1,0:T(8,128)}', space=vmem, size = 0x40000, scoped, tag = 'scratch operand']
  %s0 = inlined_call_operand.vmem [shape: f32[400,32], index: 0, kind: input, shape index: {}]
  %s1 = inlined_call_operand.vmem [shape: f32[32,64], index: 1, kind: input, shape index: {}]
  %s2 = inlined_call_operand.vmem [shape: f32[1,64], index: 2, kind: input, shape index: {}]
  %s3 = inlined_call_operand.vmem [shape: f32[1,64], index: 3, kind: input, shape index: {}]
  %s4 = inlined_call_operand.vmem [shape: f32[1,64], index: 4, kind: input, shape index: {}]
  %s5 = inlined_call_operand.vmem [shape: f32[64,4], index: 5, kind: input, shape index: {}]
  %s6 = inlined_call_operand.vmem [shape: f32[1,4], index: 6, kind: input, shape index: {}]
  %s7 = inlined_call_operand.vmem [shape: f32[400,4], index: 7, kind: output, shape index: {}]
  %s8 = sld [smem:[#allocation0]]
  $region133: #{tpu_custom_call.1} parent=0
    _
  %s10 = ssub.s32 1, %s8
  %s11 = scalar_select 0, %s10, %s8
  $region1: #{tpu_custom_call.1} parent=0
    #allocation5 [shape = 'u8[524288]{0}', space=vmem, size = 0x80000, scoped, tag = 'output window, operand 0']
    loop: start=0, step=1, limit=4
    $region2: #{tpu_custom_call.1} parent=1 // loop_pre_header
      _
    $region3: #{tpu_custom_call.1} parent=1 // loop_header
      %s13 = sphi 0, %s17
      %p14 = scmp.ge.s32.totalorder %s13, 4
      %s20 = sphi 0, %s32
      %s21 = sphi 0, %s28
      %s22 = sphi 0, %s20
      %s23 = sphi 0, %s21
      %s24 = sphi 0, %s22
      %s25 = sphi 0, %s23
      %s39 = sphi 0, %s41
      %s42 = sphi 0, %s39
      %s43 = sphi 0, %s42
      %s59 = sphi 0, %s43
      %s63 = sphi 0, %s63
      %s65 = sphi 0, %s63
      %s66 = sphi 0, %s65
      %s80 = sphi 0, %s66
      %s84 = sphi 0, %s84
      %s86 = sphi 0, %s84
      %s87 = sphi 0, %s86
      %s101 = sphi 0, %s87
      %s105 = sphi 0, %s105
      %s107 = sphi 0, %s105
      %s108 = sphi 0, %s107
      %s122 = sphi 0, %s108
      %s126 = sphi 0, %s126
      %s128 = sphi 0, %s126
      %s129 = sphi 0, %s128
      %s143 = sphi 0, %s129
      %s147 = sphi 0, %s147
      %s149 = sphi 0, %s147
      %s150 = sphi 0, %s149
      %s164 = sphi 0, %s150
      %s168 = sphi 0, %s168
      %s170 = sphi 0, %s168
      %s171 = sphi 0, %s170
      %s185 = sphi 0, %s171
      %s193 = sphi 0, %s195
      %s196 = sphi 0, %s193
      %s197 = sphi 0, %s196
      %s213 = sphi 0, %s197
    $region4: #{tpu_custom_call.1} parent=1 // loop_header_branch
      %16 = sbr.rel (%p14) target = $region8
    $region5: #{tpu_custom_call.1} parent=1 // loop_body
      %s18 = ssub.s32 %s13, 1
      %s19 = ssub.s32 %s13, 2
      %s26 = sadd.s32 1, %s21
      %p27 = scmp.ge.s32.totalorder %s26, 1
      %s28 = scalar_select %p27, 0, %s26
      %s29 = sadd.s32 1, %s20
      %s30 = scalar_select %p27, %s29, %s20
      %p31 = scmp.ge.s32.totalorder %s30, 2
      %s32 = scalar_select %p31, 0, %s30
      %s33 = ssub.s32 1, %s20
      %s34 = smul.u32 %s21, %s33
      %s35 = ssub.s32 1, %s32
      %s36 = smul.u32 %s28, %s35
      %s37 = ssub.s32 %s34, %s36
      %p38 = scmp.eq.s32.totalorder %s37, 0
      %s40 = sadd.s32 %s39, 1
      %s41 = scalar_select %p38, %s39, %s40
      %p44 = pneg %p38
      %p45 = scmp.eq.s32.totalorder %s13, 1
      %p46 = por %p44, %p45
      %p47 = scmp.ne.s32.totalorder %s39, %s42
      %p48 = scmp.eq.s32.totalorder %s13, 0
      %p49 = por %p47, %p48
      %p50 = scmp.ne.s32.totalorder %s39, %s42
      %p51 = scmp.eq.s32.totalorder %s18, 1
      %p52 = por %p50, %p51
      %p53 = scmp.ne.s32.totalorder %s42, %s43
      %p54 = scmp.eq.s32.totalorder %s18, 0
      %p55 = por %p53, %p54
      %p56 = scmp.ne.s32.totalorder %s42, %s43
      %p57 = scmp.eq.s32.totalorder %s19, 1
      %p58 = por %p56, %p57
      %p60 = scmp.ne.s32.totalorder %s43, %s59
      %p61 = scmp.eq.s32.totalorder %s19, 0
      %p62 = por %p60, %p61
      %s64 = sadd.s32 %s63, 1
      %p67 = scmp.eq.s32.totalorder %s13, 1
      %p68 = scmp.ne.s32.totalorder %s63, %s65
      %p69 = scmp.eq.s32.totalorder %s13, 0
      %p70 = por %p68, %p69
      %p71 = scmp.ne.s32.totalorder %s63, %s65
      %p72 = scmp.eq.s32.totalorder %s18, 1
      %p73 = por %p71, %p72
      %p74 = scmp.ne.s32.totalorder %s65, %s66
      %p75 = scmp.eq.s32.totalorder %s18, 0
      %p76 = por %p74, %p75
      %p77 = scmp.ne.s32.totalorder %s65, %s66
      %p78 = scmp.eq.s32.totalorder %s19, 1
      %p79 = por %p77, %p78
      %p81 = scmp.ne.s32.totalorder %s66, %s80
      %p82 = scmp.eq.s32.totalorder %s19, 0
      %p83 = por %p81, %p82
      %s85 = sadd.s32 %s84, 1
      %p88 = scmp.eq.s32.totalorder %s13, 1
      %p89 = scmp.ne.s32.totalorder %s84, %s86
      %p90 = scmp.eq.s32.totalorder %s13, 0
      %p91 = por %p89, %p90
      %p92 = scmp.ne.s32.totalorder %s84, %s86
      %p93 = scmp.eq.s32.totalorder %s18, 1
      %p94 = por %p92, %p93
      %p95 = scmp.ne.s32.totalorder %s86, %s87
      %p96 = scmp.eq.s32.totalorder %s18, 0
      %p97 = por %p95, %p96
      %p98 = scmp.ne.s32.totalorder %s86, %s87
      %p99 = scmp.eq.s32.totalorder %s19, 1
      %p100 = por %p98, %p99
      %p102 = scmp.ne.s32.totalorder %s87, %s101
      %p103 = scmp.eq.s32.totalorder %s19, 0
      %p104 = por %p102, %p103
      %s106 = sadd.s32 %s105, 1
      %p109 = scmp.eq.s32.totalorder %s13, 1
      %p110 = scmp.ne.s32.totalorder %s105, %s107
      %p111 = scmp.eq.s32.totalorder %s13, 0
      %p112 = por %p110, %p111
      %p113 = scmp.ne.s32.totalorder %s105, %s107
      %p114 = scmp.eq.s32.totalorder %s18, 1
      %p115 = por %p113, %p114
      %p116 = scmp.ne.s32.totalorder %s107, %s108
      %p117 = scmp.eq.s32.totalorder %s18, 0
      %p118 = por %p116, %p117
      %p119 = scmp.ne.s32.totalorder %s107, %s108
      %p120 = scmp.eq.s32.totalorder %s19, 1
      %p121 = por %p119, %p120
      %p123 = scmp.ne.s32.totalorder %s108, %s122
      %p124 = scmp.eq.s32.totalorder %s19, 0
      %p125 = por %p123, %p124
      %s127 = sadd.s32 %s126, 1
      %p130 = scmp.eq.s32.totalorder %s13, 1
      %p131 = scmp.ne.s32.totalorder %s126, %s128
      %p132 = scmp.eq.s32.totalorder %s13, 0
      %p133 = por %p131, %p132
      %p134 = scmp.ne.s32.totalorder %s126, %s128
      %p135 = scmp.eq.s32.totalorder %s18, 1
      %p136 = por %p134, %p135
      %p137 = scmp.ne.s32.totalorder %s128, %s129
      %p138 = scmp.eq.s32.totalorder %s18, 0
      %p139 = por %p137, %p138
      %p140 = scmp.ne.s32.totalorder %s128, %s129
      %p141 = scmp.eq.s32.totalorder %s19, 1
      %p142 = por %p140, %p141
      %p144 = scmp.ne.s32.totalorder %s129, %s143
      %p145 = scmp.eq.s32.totalorder %s19, 0
      %p146 = por %p144, %p145
      %s148 = sadd.s32 %s147, 1
      %p151 = scmp.eq.s32.totalorder %s13, 1
      %p152 = scmp.ne.s32.totalorder %s147, %s149
      %p153 = scmp.eq.s32.totalorder %s13, 0
      %p154 = por %p152, %p153
      %p155 = scmp.ne.s32.totalorder %s147, %s149
      %p156 = scmp.eq.s32.totalorder %s18, 1
      %p157 = por %p155, %p156
      %p158 = scmp.ne.s32.totalorder %s149, %s150
      %p159 = scmp.eq.s32.totalorder %s18, 0
      %p160 = por %p158, %p159
      %p161 = scmp.ne.s32.totalorder %s149, %s150
      %p162 = scmp.eq.s32.totalorder %s19, 1
      %p163 = por %p161, %p162
      %p165 = scmp.ne.s32.totalorder %s150, %s164
      %p166 = scmp.eq.s32.totalorder %s19, 0
      %p167 = por %p165, %p166
      %s169 = sadd.s32 %s168, 1
      %p172 = scmp.eq.s32.totalorder %s13, 1
      %p173 = scmp.ne.s32.totalorder %s168, %s170
      %p174 = scmp.eq.s32.totalorder %s13, 0
      %p175 = por %p173, %p174
      %p176 = scmp.ne.s32.totalorder %s168, %s170
      %p177 = scmp.eq.s32.totalorder %s18, 1
      %p178 = por %p176, %p177
      %p179 = scmp.ne.s32.totalorder %s170, %s171
      %p180 = scmp.eq.s32.totalorder %s18, 0
      %p181 = por %p179, %p180
      %p182 = scmp.ne.s32.totalorder %s170, %s171
      %p183 = scmp.eq.s32.totalorder %s19, 1
      %p184 = por %p182, %p183
      %p186 = scmp.ne.s32.totalorder %s171, %s185
      %p187 = scmp.eq.s32.totalorder %s19, 0
      %p188 = por %p186, %p187
      %s189 = smul.u32 %s21, %s20
      %s190 = smul.u32 %s28, %s32
      %s191 = ssub.s32 %s189, %s190
      %p192 = scmp.eq.s32.totalorder %s191, 0
      %s194 = sadd.s32 %s193, 1
      %s195 = scalar_select %p192, %s193, %s194
      %p198 = pneg %p192
      %p199 = scmp.eq.s32.totalorder %s13, 1
      %p200 = por %p198, %p199
      %p201 = scmp.ne.s32.totalorder %s193, %s196
      %p202 = scmp.eq.s32.totalorder %s13, 0
      %p203 = por %p201, %p202
      %p204 = scmp.ne.s32.totalorder %s193, %s196
      %p205 = scmp.eq.s32.totalorder %s18, 1
      %p206 = por %p204, %p205
      %p207 = scmp.ne.s32.totalorder %s196, %s197
      %p208 = scmp.eq.s32.totalorder %s18, 0
      %p209 = por %p207, %p208
      %p210 = scmp.ne.s32.totalorder %s196, %s197
      %p211 = scmp.eq.s32.totalorder %s19, 1
      %p212 = por %p210, %p211
      %p214 = scmp.ne.s32.totalorder %s197, %s213
      %p215 = scmp.eq.s32.totalorder %s19, 0
      %p216 = por %p214, %p215
      %p217 = scmp.le.s32.totalorder 1, %s13
      %p218 = scmp.lt.s32.totalorder %s13, 3
      %p219 = pnand %p217, %p218
      %p220 = pneg %p219
      // Predicated region
      $region9: #{tpu_custom_call.1} parent=5 // pred_check
        _
      $region10: #{tpu_custom_call.1} parent=5 // pred_check_branch
        %222 = sbr.rel (%p219) target = $region12
      $region11: #{tpu_custom_call.1} parent=5 // pred_region
        %s223 = ssub.s32 %s13, 1
        // Predicated region
        $region13: #{tpu_custom_call.1} parent=11 // pred_check
          %p224 = pneg %p76
        $region14: #{tpu_custom_call.1} parent=11 // pred_check_branch
          %226 = sbr.rel (%p224) target = $region16
        $region15: #{tpu_custom_call.1} parent=11 // pred_region
          _
        $region16: #{tpu_custom_call.1} parent=11 // pred_fallthru
          _
        // Predicated region
        $region17: #{tpu_custom_call.1} parent=11 // pred_check
          %p227 = pneg %p97
        $region18: #{tpu_custom_call.1} parent=11 // pred_check_branch
          %229 = sbr.rel (%p227) target = $region20
        $region19: #{tpu_custom_call.1} parent=11 // pred_region
          _
        $region20: #{tpu_custom_call.1} parent=11 // pred_fallthru
          _
        // Predicated region
        $region21: #{tpu_custom_call.1} parent=11 // pred_check
          %p230 = pneg %p118
        $region22: #{tpu_custom_call.1} parent=11 // pred_check_branch
          %232 = sbr.rel (%p230) target = $region24
        $region23: #{tpu_custom_call.1} parent=11 // pred_region
          _
        $region24: #{tpu_custom_call.1} parent=11 // pred_fallthru
          _
        // Predicated region
        $region25: #{tpu_custom_call.1} parent=11 // pred_check
          %p233 = pneg %p139
        $region26: #{tpu_custom_call.1} parent=11 // pred_check_branch
          %235 = sbr.rel (%p233) target = $region28
        $region27: #{tpu_custom_call.1} parent=11 // pred_region
          _
        $region28: #{tpu_custom_call.1} parent=11 // pred_fallthru
          _
        // Predicated region
        $region29: #{tpu_custom_call.1} parent=11 // pred_check
          %p236 = pneg %p160
        $region30: #{tpu_custom_call.1} parent=11 // pred_check_branch
          %238 = sbr.rel (%p236) target = $region32
        $region31: #{tpu_custom_call.1} parent=11 // pred_region
          _
        $region32: #{tpu_custom_call.1} parent=11 // pred_fallthru
          _
        // Predicated region
        $region33: #{tpu_custom_call.1} parent=11 // pred_check
          %p239 = pneg %p181
        $region34: #{tpu_custom_call.1} parent=11 // pred_check_branch
          %241 = sbr.rel (%p239) target = $region36
        $region35: #{tpu_custom_call.1} parent=11 // pred_region
          _
        $region36: #{tpu_custom_call.1} parent=11 // pred_fallthru
          _
      $region12: #{tpu_custom_call.1} parent=5 // pred_fallthru
        _
      %p242 = scmp.lt.s32.totalorder %s13, 2
      // Predicated region
      $region37: #{tpu_custom_call.1} parent=5 // pred_check
        %p243 = pneg %p242
      $region38: #{tpu_custom_call.1} parent=5 // pred_check_branch
        %245 = sbr.rel (%p243) target = $region40
      $region39: #{tpu_custom_call.1} parent=5 // pred_region
        // Predicated region
        $region41: #{tpu_custom_call.1} parent=39 // pred_check
          %p246 = pneg %p49
        $region42: #{tpu_custom_call.1} parent=39 // pred_check_branch
          %248 = sbr.rel (%p246) target = $region44
        $region43: #{tpu_custom_call.1} parent=39 // pred_region
          %s249 = ssub.s32 1, %s20
          %s250 = smul.u32 %s21, %s249
          %s251 = smul.u32 64, %s250
          %s252 = ssub.s32 50, %s251
          %s253 = smul.u32 8, %s252
          %p254 = scmp.lt.s32.totalorder %s251, 49
          %s255 = scalar_select %p254, %s251, 49
          %s256 = smul.addr %s255, 8
          %s257 = scalar_lea.vmem %s0, %s256
          %s258 = ssub.s32 1, %s20
          %s259 = smul.u32 %s21, %s258
          %s260 = smul.u32 64, %s259
          %s261 = ssub.s32 50, %s260
          %s262 = smul.u32 8, %s261
        $region44: #{tpu_custom_call.1} parent=39 // pred_fallthru
          _
      $region40: #{tpu_custom_call.1} parent=5 // pred_fallthru
        _
      %p263 = scmp.le.s32.totalorder 1, %s13
      %p264 = scmp.lt.s32.totalorder %s13, 3
      %p265 = pnand %p263, %p264
      %p266 = pneg %p265
      // Predicated region
      $region45: #{tpu_custom_call.1} parent=5 // pred_check
        _
      $region46: #{tpu_custom_call.1} parent=5 // pred_check_branch
        %268 = sbr.rel (%p265) target = $region48
      $region47: #{tpu_custom_call.1} parent=5 // pred_region
        %s269 = ssub.s32 %s13, 1
        %s270 = ssub.s32 1, %s22
        %s271 = smul.u32 %s23, %s270
        %s272 = smul.u32 64, %s271
        %s273 = ssub.s32 50, %s272
        %s274 = smul.u32 8, %s273
        %p275 = scmp.lt.s32.totalorder %s272, 49
        %s276 = scalar_select %p275, %s272, 49
        %s277 = smul.addr %s276, 8
        %s278 = scalar_lea.vmem %s0, %s277
        %p279 = pneg %p55
        %p280 = pneg %p52
        %p281 = pneg %p76
        %p282 = pneg %p73
        %p283 = pneg %p97
        %p284 = pneg %p94
        %p285 = pneg %p118
        %p286 = pneg %p115
        %p287 = pneg %p139
        %p288 = pneg %p136
        %p289 = pneg %p160
        %p290 = pneg %p157
        %p291 = pneg %p181
        %p292 = pneg %p178
        %p293 = pneg %p209
        %p294 = pneg %p206
        %s295 = sand.u32 %s196, 1
        %s296 = sand.u32 %s196, 1
        %s297 = smul.addr %s296, 512
        %s298 = scalar_lea.vmem [#allocation5], %s297
        %s299 = ssub.s32 1, %s22
        %s300 = smul.u32 %s23, %s299
        %s301 = smul.u32 64, %s300
        %s302 = ssub.s32 50, %s301
        %s303 = smul.u32 8, %s302
        %p304 = scmp.lt.s32.totalorder %s301, 49
        %s305 = scalar_select %p304, %s301, 49
        %s306 = smul.addr %s305, 8
        %s307 = scalar_lea.vmem %s0, %s306
        %s308 = ssub.s32 1, %s22
        %s309 = smul.u32 %s23, %s308
        %s310 = smul.u32 64, %s309
        %s311 = ssub.s32 50, %s310
        %s312 = smul.u32 8, %s311
        %s313 = smul.u32 %s23, %s22
        %s314 = smul.u32 64, %s313
        %s315 = ssub.s32 50, %s314
        %s316 = smul.u32 8, %s315
        %p317 = scmp.eq.s32.totalorder %s22, 0
        // Predicated region
        $region49: #{tpu_custom_call.1} parent=47 // pred_check
          %p318 = pneg %p317
        $region50: #{tpu_custom_call.1} parent=47 // pred_check_branch
          %320 = sbr.rel (%p318) target = $region52
        $region51: #{tpu_custom_call.1} parent=47 // pred_region
          %p321 = scmp.eq.s32.totalorder %s23, 0
          // Predicated region
          $region53: #{tpu_custom_call.1} parent=51 // pred_check
            %p322 = pneg %p321
          $region54: #{tpu_custom_call.1} parent=51 // pred_check_branch
            %324 = sbr.rel (%p322) target = $region56
          $region55: #{tpu_custom_call.1} parent=51 // pred_region
            %vm325 = vcmask 517120
            %326 = vst.msk [vmem:[#allocation2] sm:$0x3] %vm325, 0.0
          $region56: #{tpu_custom_call.1} parent=51 // pred_fallthru
            _
          %v327 = vld [vmem:[%s307] sm:$0xff]
          %v328 = vld [vmem:[%s307 + $0x8] sm:$0xff]
          %v329 = vld [vmem:[%s307 + $0x10] sm:$0xff]
          %v330 = vld [vmem:[%s307 + $0x18] sm:$0xff]
          %v331 = vld [vmem:[%s307 + $0x20] sm:$0xff]
          %v332 = vld [vmem:[%s307 + $0x28] sm:$0xff]
          %v333 = vld [vmem:[%s307 + $0x30] sm:$0xff]
          %v334 = vld [vmem:[%s307 + $0x38] sm:$0xff]
          %v335 = vld [vmem:[%s307 + $0x40] sm:$0xff]
          %v336 = vld [vmem:[%s307 + $0x48] sm:$0xff]
          %v337 = vld [vmem:[%s307 + $0x50] sm:$0xff]
          %v338 = vld [vmem:[%s307 + $0x58] sm:$0xff]
          %v339 = vld [vmem:[%s307 + $0x60] sm:$0xff]
          %v340 = vld [vmem:[%s307 + $0x68] sm:$0xff]
          %v341 = vld [vmem:[%s307 + $0x70] sm:$0xff]
          %v342 = vld [vmem:[%s307 + $0x78] sm:$0xff]
          %v343 = vld [vmem:[%s307 + $0x80] sm:$0xff]
          %v344 = vld [vmem:[%s307 + $0x88] sm:$0xff]
          %v345 = vld [vmem:[%s307 + $0x90] sm:$0xff]
          %v346 = vld [vmem:[%s307 + $0x98] sm:$0xff]
          %v347 = vld [vmem:[%s307 + $0xa0] sm:$0xff]
          %v348 = vld [vmem:[%s307 + $0xa8] sm:$0xff]
          %v349 = vld [vmem:[%s307 + $0xb0] sm:$0xff]
          %v350 = vld [vmem:[%s307 + $0xb8] sm:$0xff]
          %v351 = vld [vmem:[%s307 + $0xc0] sm:$0xff]
          %v352 = vld [vmem:[%s307 + $0xc8] sm:$0xff]
          %v353 = vld [vmem:[%s307 + $0xd0] sm:$0xff]
          %v354 = vld [vmem:[%s307 + $0xd8] sm:$0xff]
          %v355 = vld [vmem:[%s307 + $0xe0] sm:$0xff]
          %v356 = vld [vmem:[%s307 + $0xe8] sm:$0xff]
          %v357 = vld [vmem:[%s307 + $0xf0] sm:$0xff]
          %v358 = vld [vmem:[%s307 + $0xf8] sm:$0xff]
          %v359 = vld [vmem:[%s307 + $0x100] sm:$0xff]
          %v360 = vld [vmem:[%s307 + $0x108] sm:$0xff]
          %v361 = vld [vmem:[%s307 + $0x110] sm:$0xff]
          %v362 = vld [vmem:[%s307 + $0x118] sm:$0xff]
          %v363 = vld [vmem:[%s307 + $0x120] sm:$0xff]
          %v364 = vld [vmem:[%s307 + $0x128] sm:$0xff]
          %v365 = vld [vmem:[%s307 + $0x130] sm:$0xff]
          %v366 = vld [vmem:[%s307 + $0x138] sm:$0xff]
          %v367 = vld [vmem:[%s307 + $0x140] sm:$0xff]
          %v368 = vld [vmem:[%s307 + $0x148] sm:$0xff]
          %v369 = vld [vmem:[%s307 + $0x150] sm:$0xff]
          %v370 = vld [vmem:[%s307 + $0x158] sm:$0xff]
          %v371 = vld [vmem:[%s307 + $0x160] sm:$0xff]
          %v372 = vld [vmem:[%s307 + $0x168] sm:$0xff]
          %v373 = vld [vmem:[%s307 + $0x170] sm:$0xff]
          %v374 = vld [vmem:[%s307 + $0x178] sm:$0xff]
          %v375 = vld [vmem:[%s307 + $0x180] sm:$0xff]
          %v376 = vld [vmem:[%s307 + $0x188] sm:$0xff]
          %v377 = vld [vmem:[%s307 + $0x190] sm:$0xff]
          %v378 = vld [vmem:[%s307 + $0x198] sm:$0xff]
          %v379 = vld [vmem:[%s307 + $0x1a0] sm:$0xff]
          %v380 = vld [vmem:[%s307 + $0x1a8] sm:$0xff]
          %v381 = vld [vmem:[%s307 + $0x1b0] sm:$0xff]
          %v382 = vld [vmem:[%s307 + $0x1b8] sm:$0xff]
          %v383 = vld [vmem:[%s307 + $0x1c0] sm:$0xff]
          %v384 = vld [vmem:[%s307 + $0x1c8] sm:$0xff]
          %v385 = vld [vmem:[%s307 + $0x1d0] sm:$0xff]
          %v386 = vld [vmem:[%s307 + $0x1d8] sm:$0xff]
          %v387 = vld [vmem:[%s307 + $0x1e0] sm:$0xff]
          %v388 = vld [vmem:[%s307 + $0x1e8] sm:$0xff]
          %v389 = vld [vmem:[%s307 + $0x1f0] sm:$0xff]
          %v390 = vld [vmem:[%s307 + $0x1f8] sm:$0xff]
          %v391 = vld [vmem:[%s1] sm:$0xff]
          %v392 = vld [vmem:[%s1 + $0x8] sm:$0xff]
          %v393 = vld [vmem:[%s1 + $0x10] sm:$0xff]
          %v394 = vld [vmem:[%s1 + $0x18] sm:$0xff]
          %v395 = vld [vmem:[%s2] sm:$0x1]
          %v397 = vperm.slane %v395, 0
          %vm399 = vcmask 261120
          %v401 = vsel %vm399, %v327, 0
          %v404 = vsel %vm399, %v328, 0
          %v407 = vsel %vm399, %v329, 0
          %v410 = vsel %vm399, %v330, 0
          %v413 = vsel %vm399, %v331, 0
          %v416 = vsel %vm399, %v332, 0
          %v419 = vsel %vm399, %v333, 0
          %v422 = vsel %vm399, %v334, 0
          %v425 = vsel %vm399, %v335, 0
          %v428 = vsel %vm399, %v336, 0
          %v431 = vsel %vm399, %v337, 0
          %v434 = vsel %vm399, %v338, 0
          %v437 = vsel %vm399, %v339, 0
          %v440 = vsel %vm399, %v340, 0
          %v443 = vsel %vm399, %v341, 0
          %v446 = vsel %vm399, %v342, 0
          %v449 = vsel %vm399, %v343, 0
          %v452 = vsel %vm399, %v344, 0
          %v455 = vsel %vm399, %v345, 0
          %v458 = vsel %vm399, %v346, 0
          %v461 = vsel %vm399, %v347, 0
          %v464 = vsel %vm399, %v348, 0
          %v467 = vsel %vm399, %v349, 0
          %v470 = vsel %vm399, %v350, 0
          %v473 = vsel %vm399, %v351, 0
          %v476 = vsel %vm399, %v352, 0
          %v479 = vsel %vm399, %v353, 0
          %v482 = vsel %vm399, %v354, 0
          %v485 = vsel %vm399, %v355, 0
          %v488 = vsel %vm399, %v356, 0
          %v491 = vsel %vm399, %v357, 0
          %v494 = vsel %vm399, %v358, 0
          %v497 = vsel %vm399, %v359, 0
          %v500 = vsel %vm399, %v360, 0
          %v503 = vsel %vm399, %v361, 0
          %v506 = vsel %vm399, %v362, 0
          %v509 = vsel %vm399, %v363, 0
          %v512 = vsel %vm399, %v364, 0
          %v515 = vsel %vm399, %v365, 0
          %v518 = vsel %vm399, %v366, 0
          %v521 = vsel %vm399, %v367, 0
          %v524 = vsel %vm399, %v368, 0
          %v527 = vsel %vm399, %v369, 0
          %v530 = vsel %vm399, %v370, 0
          %v533 = vsel %vm399, %v371, 0
          %v536 = vsel %vm399, %v372, 0
          %v539 = vsel %vm399, %v373, 0
          %v542 = vsel %vm399, %v374, 0
          %v545 = vsel %vm399, %v375, 0
          %v548 = vsel %vm399, %v376, 0
          %v551 = vsel %vm399, %v377, 0
          %v554 = vsel %vm399, %v378, 0
          %v557 = vsel %vm399, %v379, 0
          %v560 = vsel %vm399, %v380, 0
          %v563 = vsel %vm399, %v381, 0
          %v566 = vsel %vm399, %v382, 0
          %v569 = vsel %vm399, %v383, 0
          %v572 = vsel %vm399, %v384, 0
          %v575 = vsel %vm399, %v385, 0
          %v578 = vsel %vm399, %v386, 0
          %v581 = vsel %vm399, %v387, 0
          %v584 = vsel %vm399, %v388, 0
          %v587 = vsel %vm399, %v389, 0
          %v590 = vsel %vm399, %v390, 0
          %592 = vmatpush.msra.mxu0 0.0
          %593 = vmatpush.msra.mxu0 0.0
          %594 = vmatpush.msra.mxu0 0.0
          %595 = vmatpush.msra.mxu0 0.0
          %596 = vmatpush.msra.mxu0 0.0
          %597 = vmatpush.msra.mxu0 0.0
          %598 = vmatpush.msra.mxu0 0.0
          %599 = vmatpush.msra.mxu0 0.0
          %600 = vmatpush.msra.mxu0 0.0
          %601 = vmatpush.msra.mxu0 0.0
          %602 = vmatpush.msra.mxu0 0.0
          %603 = vmatpush.msra.mxu0 0.0
          %604 = vmatpush.msra.mxu0 %v394
          %605 = vmatpush.msra.mxu0 %v393
          %606 = vmatpush.msra.mxu0 %v392
          %607 = vmatpush.msra.mxu0 %v391
          %608 = vmatmul.f32.gmra.mxu0 %v401
          %v609 = vpop.f32.mrf.mxu0
          %v610 = vadd.f32 %v397, %v609
          %611 = vmatmul.f32.gmra.mxu0 %v404
          %v612 = vpop.f32.mrf.mxu0
          %v613 = vadd.f32 %v397, %v612
          %614 = vmatmul.f32.gmra.mxu0 %v407
          %v615 = vpop.f32.mrf.mxu0
          %v616 = vadd.f32 %v397, %v615
          %617 = vmatmul.f32.gmra.mxu0 %v410
          %v618 = vpop.f32.mrf.mxu0
          %v619 = vadd.f32 %v397, %v618
          %620 = vmatmul.f32.gmra.mxu0 %v413
          %v621 = vpop.f32.mrf.mxu0
          %v622 = vadd.f32 %v397, %v621
          %623 = vmatmul.f32.gmra.mxu0 %v416
          %v624 = vpop.f32.mrf.mxu0
          %v625 = vadd.f32 %v397, %v624
          %626 = vmatmul.f32.gmra.mxu0 %v419
          %v627 = vpop.f32.mrf.mxu0
          %v628 = vadd.f32 %v397, %v627
          %629 = vmatmul.f32.gmra.mxu0 %v422
          %v630 = vpop.f32.mrf.mxu0
          %v631 = vadd.f32 %v397, %v630
          %632 = vmatmul.f32.gmra.mxu0 %v425
          %v633 = vpop.f32.mrf.mxu0
          %v634 = vadd.f32 %v397, %v633
          %635 = vmatmul.f32.gmra.mxu0 %v428
          %v636 = vpop.f32.mrf.mxu0
          %v637 = vadd.f32 %v397, %v636
          %638 = vmatmul.f32.gmra.mxu0 %v431
          %v639 = vpop.f32.mrf.mxu0
          %v640 = vadd.f32 %v397, %v639
          %641 = vmatmul.f32.gmra.mxu0 %v434
          %v642 = vpop.f32.mrf.mxu0
          %v643 = vadd.f32 %v397, %v642
          %644 = vmatmul.f32.gmra.mxu0 %v437
          %v645 = vpop.f32.mrf.mxu0
          %v646 = vadd.f32 %v397, %v645
          %647 = vmatmul.f32.gmra.mxu0 %v440
          %v648 = vpop.f32.mrf.mxu0
          %v649 = vadd.f32 %v397, %v648
          %650 = vmatmul.f32.gmra.mxu0 %v443
          %v651 = vpop.f32.mrf.mxu0
          %v652 = vadd.f32 %v397, %v651
          %653 = vmatmul.f32.gmra.mxu0 %v446
          %v654 = vpop.f32.mrf.mxu0
          %v655 = vadd.f32 %v397, %v654
          %656 = vmatmul.f32.gmra.mxu0 %v449
          %v657 = vpop.f32.mrf.mxu0
          %v658 = vadd.f32 %v397, %v657
          %659 = vmatmul.f32.gmra.mxu0 %v452
          %v660 = vpop.f32.mrf.mxu0
          %v661 = vadd.f32 %v397, %v660
          %662 = vmatmul.f32.gmra.mxu0 %v455
          %v663 = vpop.f32.mrf.mxu0
          %v664 = vadd.f32 %v397, %v663
          %665 = vmatmul.f32.gmra.mxu0 %v458
          %v666 = vpop.f32.mrf.mxu0
          %v667 = vadd.f32 %v397, %v666
          %668 = vmatmul.f32.gmra.mxu0 %v461
          %v669 = vpop.f32.mrf.mxu0
          %v670 = vadd.f32 %v397, %v669
          %671 = vmatmul.f32.gmra.mxu0 %v464
          %v672 = vpop.f32.mrf.mxu0
          %v673 = vadd.f32 %v397, %v672
          %674 = vmatmul.f32.gmra.mxu0 %v467
          %v675 = vpop.f32.mrf.mxu0
          %v676 = vadd.f32 %v397, %v675
          %677 = vmatmul.f32.gmra.mxu0 %v470
          %v678 = vpop.f32.mrf.mxu0
          %v679 = vadd.f32 %v397, %v678
          %680 = vmatmul.f32.gmra.mxu0 %v473
          %v681 = vpop.f32.mrf.mxu0
          %v682 = vadd.f32 %v397, %v681
          %683 = vmatmul.f32.gmra.mxu0 %v476
          %v684 = vpop.f32.mrf.mxu0
          %v685 = vadd.f32 %v397, %v684
          %686 = vmatmul.f32.gmra.mxu0 %v479
          %v687 = vpop.f32.mrf.mxu0
          %v688 = vadd.f32 %v397, %v687
          %689 = vmatmul.f32.gmra.mxu0 %v482
          %v690 = vpop.f32.mrf.mxu0
          %v691 = vadd.f32 %v397, %v690
          %692 = vmatmul.f32.gmra.mxu0 %v485
          %v693 = vpop.f32.mrf.mxu0
          %v694 = vadd.f32 %v397, %v693
          %695 = vmatmul.f32.gmra.mxu0 %v488
          %v696 = vpop.f32.mrf.mxu0
          %v697 = vadd.f32 %v397, %v696
          %698 = vmatmul.f32.gmra.mxu0 %v491
          %v699 = vpop.f32.mrf.mxu0
          %v700 = vadd.f32 %v397, %v699
          %701 = vmatmul.f32.gmra.mxu0 %v494
          %v702 = vpop.f32.mrf.mxu0
          %v703 = vadd.f32 %v397, %v702
          %704 = vmatmul.f32.gmra.mxu0 %v497
          %v705 = vpop.f32.mrf.mxu0
          %v706 = vadd.f32 %v397, %v705
          %707 = vmatmul.f32.gmra.mxu0 %v500
          %v708 = vpop.f32.mrf.mxu0
          %v709 = vadd.f32 %v397, %v708
          %710 = vmatmul.f32.gmra.mxu0 %v503
          %v711 = vpop.f32.mrf.mxu0
          %v712 = vadd.f32 %v397, %v711
          %713 = vmatmul.f32.gmra.mxu0 %v506
          %v714 = vpop.f32.mrf.mxu0
          %v715 = vadd.f32 %v397, %v714
          %716 = vmatmul.f32.gmra.mxu0 %v509
          %v717 = vpop.f32.mrf.mxu0
          %v718 = vadd.f32 %v397, %v717
          %719 = vmatmul.f32.gmra.mxu0 %v512
          %v720 = vpop.f32.mrf.mxu0
          %v721 = vadd.f32 %v397, %v720
          %722 = vmatmul.f32.gmra.mxu0 %v515
          %v723 = vpop.f32.mrf.mxu0
          %v724 = vadd.f32 %v397, %v723
          %725 = vmatmul.f32.gmra.mxu0 %v518
          %v726 = vpop.f32.mrf.mxu0
          %v727 = vadd.f32 %v397, %v726
          %728 = vmatmul.f32.gmra.mxu0 %v521
          %v729 = vpop.f32.mrf.mxu0
          %v730 = vadd.f32 %v397, %v729
          %731 = vmatmul.f32.gmra.mxu0 %v524
          %v732 = vpop.f32.mrf.mxu0
          %v733 = vadd.f32 %v397, %v732
          %734 = vmatmul.f32.gmra.mxu0 %v527
          %v735 = vpop.f32.mrf.mxu0
          %v736 = vadd.f32 %v397, %v735
          %737 = vmatmul.f32.gmra.mxu0 %v530
          %v738 = vpop.f32.mrf.mxu0
          %v739 = vadd.f32 %v397, %v738
          %740 = vmatmul.f32.gmra.mxu0 %v533
          %v741 = vpop.f32.mrf.mxu0
          %v742 = vadd.f32 %v397, %v741
          %743 = vmatmul.f32.gmra.mxu0 %v536
          %v744 = vpop.f32.mrf.mxu0
          %v745 = vadd.f32 %v397, %v744
          %746 = vmatmul.f32.gmra.mxu0 %v539
          %v747 = vpop.f32.mrf.mxu0
          %v748 = vadd.f32 %v397, %v747
          %749 = vmatmul.f32.gmra.mxu0 %v542
          %v750 = vpop.f32.mrf.mxu0
          %v751 = vadd.f32 %v397, %v750
          %752 = vmatmul.f32.gmra.mxu0 %v545
          %v753 = vpop.f32.mrf.mxu0
          %v754 = vadd.f32 %v397, %v753
          %755 = vmatmul.f32.gmra.mxu0 %v548
          %v756 = vpop.f32.mrf.mxu0
          %v757 = vadd.f32 %v397, %v756
          %758 = vmatmul.f32.gmra.mxu0 %v551
          %v759 = vpop.f32.mrf.mxu0
          %v760 = vadd.f32 %v397, %v759
          %761 = vmatmul.f32.gmra.mxu0 %v554
          %v762 = vpop.f32.mrf.mxu0
          %v763 = vadd.f32 %v397, %v762
          %764 = vmatmul.f32.gmra.mxu0 %v557
          %v765 = vpop.f32.mrf.mxu0
          %v766 = vadd.f32 %v397, %v765
          %767 = vmatmul.f32.gmra.mxu0 %v560
          %v768 = vpop.f32.mrf.mxu0
          %v769 = vadd.f32 %v397, %v768
          %770 = vmatmul.f32.gmra.mxu0 %v563
          %v771 = vpop.f32.mrf.mxu0
          %v772 = vadd.f32 %v397, %v771
          %773 = vmatmul.f32.gmra.mxu0 %v566
          %v774 = vpop.f32.mrf.mxu0
          %v775 = vadd.f32 %v397, %v774
          %776 = vmatmul.f32.gmra.mxu0 %v569
          %v777 = vpop.f32.mrf.mxu0
          %v778 = vadd.f32 %v397, %v777
          %779 = vmatmul.f32.gmra.mxu0 %v572
          %v780 = vpop.f32.mrf.mxu0
          %v781 = vadd.f32 %v397, %v780
          %782 = vmatmul.f32.gmra.mxu0 %v575
          %v783 = vpop.f32.mrf.mxu0
          %v784 = vadd.f32 %v397, %v783
          %785 = vmatmul.f32.gmra.mxu0 %v578
          %v786 = vpop.f32.mrf.mxu0
          %v787 = vadd.f32 %v397, %v786
          %788 = vmatmul.f32.gmra.mxu0 %v581
          %v789 = vpop.f32.mrf.mxu0
          %v790 = vadd.f32 %v397, %v789
          %791 = vmatmul.f32.gmra.mxu0 %v584
          %v792 = vpop.f32.mrf.mxu0
          %v793 = vadd.f32 %v397, %v792
          %794 = vmatmul.f32.gmra.mxu0 %v587
          %v795 = vpop.f32.mrf.mxu0
          %v796 = vadd.f32 %v397, %v795
          %797 = vmatmul.f32.gmra.mxu0 %v590
          %v798 = vpop.f32.mrf.mxu0
          %v799 = vadd.f32 %v397, %v798
          %800 = vdwg.mxu0
          %vm801 = vcmp.gt.f32.partialorder %v610, 0.0
          %vm802 = vcmp.gt.f32.partialorder %v613, 0.0
          %vm803 = vcmp.gt.f32.partialorder %v616, 0.0
          %vm804 = vcmp.gt.f32.partialorder %v619, 0.0
          %vm805 = vcmp.gt.f32.partialorder %v622, 0.0
          %vm806 = vcmp.gt.f32.partialorder %v625, 0.0
          %vm807 = vcmp.gt.f32.partialorder %v628, 0.0
          %vm808 = vcmp.gt.f32.partialorder %v631, 0.0
          %vm809 = vcmp.gt.f32.partialorder %v634, 0.0
          %vm810 = vcmp.gt.f32.partialorder %v637, 0.0
          %vm811 = vcmp.gt.f32.partialorder %v640, 0.0
          %vm812 = vcmp.gt.f32.partialorder %v643, 0.0
          %vm813 = vcmp.gt.f32.partialorder %v646, 0.0
          %vm814 = vcmp.gt.f32.partialorder %v649, 0.0
          %vm815 = vcmp.gt.f32.partialorder %v652, 0.0
          %vm816 = vcmp.gt.f32.partialorder %v655, 0.0
          %vm817 = vcmp.gt.f32.partialorder %v658, 0.0
          %vm818 = vcmp.gt.f32.partialorder %v661, 0.0
          %vm819 = vcmp.gt.f32.partialorder %v664, 0.0
          %vm820 = vcmp.gt.f32.partialorder %v667, 0.0
          %vm821 = vcmp.gt.f32.partialorder %v670, 0.0
          %vm822 = vcmp.gt.f32.partialorder %v673, 0.0
          %vm823 = vcmp.gt.f32.partialorder %v676, 0.0
          %vm824 = vcmp.gt.f32.partialorder %v679, 0.0
          %vm825 = vcmp.gt.f32.partialorder %v682, 0.0
          %vm826 = vcmp.gt.f32.partialorder %v685, 0.0
          %vm827 = vcmp.gt.f32.partialorder %v688, 0.0
          %vm828 = vcmp.gt.f32.partialorder %v691, 0.0
          %vm829 = vcmp.gt.f32.partialorder %v694, 0.0
          %vm830 = vcmp.gt.f32.partialorder %v697, 0.0
          %vm831 = vcmp.gt.f32.partialorder %v700, 0.0
          %vm832 = vcmp.gt.f32.partialorder %v703, 0.0
          %vm833 = vcmp.gt.f32.partialorder %v706, 0.0
          %vm834 = vcmp.gt.f32.partialorder %v709, 0.0
          %vm835 = vcmp.gt.f32.partialorder %v712, 0.0
          %vm836 = vcmp.gt.f32.partialorder %v715, 0.0
          %vm837 = vcmp.gt.f32.partialorder %v718, 0.0
          %vm838 = vcmp.gt.f32.partialorder %v721, 0.0
          %vm839 = vcmp.gt.f32.partialorder %v724, 0.0
          %vm840 = vcmp.gt.f32.partialorder %v727, 0.0
          %vm841 = vcmp.gt.f32.partialorder %v730, 0.0
          %vm842 = vcmp.gt.f32.partialorder %v733, 0.0
          %vm843 = vcmp.gt.f32.partialorder %v736, 0.0
          %vm844 = vcmp.gt.f32.partialorder %v739, 0.0
          %vm845 = vcmp.gt.f32.partialorder %v742, 0.0
          %vm846 = vcmp.gt.f32.partialorder %v745, 0.0
          %vm847 = vcmp.gt.f32.partialorder %v748, 0.0
          %vm848 = vcmp.gt.f32.partialorder %v751, 0.0
          %vm849 = vcmp.gt.f32.partialorder %v754, 0.0
          %vm850 = vcmp.gt.f32.partialorder %v757, 0.0
          %vm851 = vcmp.gt.f32.partialorder %v760, 0.0
          %vm852 = vcmp.gt.f32.partialorder %v763, 0.0
          %vm853 = vcmp.gt.f32.partialorder %v766, 0.0
          %vm854 = vcmp.gt.f32.partialorder %v769, 0.0
          %vm855 = vcmp.gt.f32.partialorder %v772, 0.0
          %vm856 = vcmp.gt.f32.partialorder %v775, 0.0
          %vm857 = vcmp.gt.f32.partialorder %v778, 0.0
          %vm858 = vcmp.gt.f32.partialorder %v781, 0.0
          %vm859 = vcmp.gt.f32.partialorder %v784, 0.0
          %vm860 = vcmp.gt.f32.partialorder %v787, 0.0
          %vm861 = vcmp.gt.f32.partialorder %v790, 0.0
          %vm862 = vcmp.gt.f32.partialorder %v793, 0.0
          %vm863 = vcmp.gt.f32.partialorder %v796, 0.0
          %vm864 = vcmp.gt.f32.partialorder %v799, 0.0
          %v865 = vmul.f32 %v610, 0.01
          %v866 = vmul.f32 %v613, 0.01
          %v867 = vmul.f32 %v616, 0.01
          %v868 = vmul.f32 %v619, 0.01
          %v869 = vmul.f32 %v622, 0.01
          %v870 = vmul.f32 %v625, 0.01
          %v871 = vmul.f32 %v628, 0.01
          %v872 = vmul.f32 %v631, 0.01
          %v873 = vmul.f32 %v634, 0.01
          %v874 = vmul.f32 %v637, 0.01
          %v875 = vmul.f32 %v640, 0.01
          %v876 = vmul.f32 %v643, 0.01
          %v877 = vmul.f32 %v646, 0.01
          %v878 = vmul.f32 %v649, 0.01
          %v879 = vmul.f32 %v652, 0.01
          %v880 = vmul.f32 %v655, 0.01
          %v881 = vmul.f32 %v658, 0.01
          %v882 = vmul.f32 %v661, 0.01
          %v883 = vmul.f32 %v664, 0.01
          %v884 = vmul.f32 %v667, 0.01
          %v885 = vmul.f32 %v670, 0.01
          %v886 = vmul.f32 %v673, 0.01
          %v887 = vmul.f32 %v676, 0.01
          %v888 = vmul.f32 %v679, 0.01
          %v889 = vmul.f32 %v682, 0.01
          %v890 = vmul.f32 %v685, 0.01
          %v891 = vmul.f32 %v688, 0.01
          %v892 = vmul.f32 %v691, 0.01
          %v893 = vmul.f32 %v694, 0.01
          %v894 = vmul.f32 %v697, 0.01
          %v895 = vmul.f32 %v700, 0.01
          %v896 = vmul.f32 %v703, 0.01
          %v897 = vmul.f32 %v706, 0.01
          %v898 = vmul.f32 %v709, 0.01
          %v899 = vmul.f32 %v712, 0.01
          %v900 = vmul.f32 %v715, 0.01
          %v901 = vmul.f32 %v718, 0.01
          %v902 = vmul.f32 %v721, 0.01
          %v903 = vmul.f32 %v724, 0.01
          %v904 = vmul.f32 %v727, 0.01
          %v905 = vmul.f32 %v730, 0.01
          %v906 = vmul.f32 %v733, 0.01
          %v907 = vmul.f32 %v736, 0.01
          %v908 = vmul.f32 %v739, 0.01
          %v909 = vmul.f32 %v742, 0.01
          %v910 = vmul.f32 %v745, 0.01
          %v911 = vmul.f32 %v748, 0.01
          %v912 = vmul.f32 %v751, 0.01
          %v913 = vmul.f32 %v754, 0.01
          %v914 = vmul.f32 %v757, 0.01
          %v915 = vmul.f32 %v760, 0.01
          %v916 = vmul.f32 %v763, 0.01
          %v917 = vmul.f32 %v766, 0.01
          %v918 = vmul.f32 %v769, 0.01
          %v919 = vmul.f32 %v772, 0.01
          %v920 = vmul.f32 %v775, 0.01
          %v921 = vmul.f32 %v778, 0.01
          %v922 = vmul.f32 %v781, 0.01
          %v923 = vmul.f32 %v784, 0.01
          %v924 = vmul.f32 %v787, 0.01
          %v925 = vmul.f32 %v790, 0.01
          %v926 = vmul.f32 %v793, 0.01
          %v927 = vmul.f32 %v796, 0.01
          %v928 = vmul.f32 %v799, 0.01
          %v929 = vsel %vm801, %v610, %v865
          %v930 = vsel %vm802, %v613, %v866
          %v931 = vsel %vm803, %v616, %v867
          %v932 = vsel %vm804, %v619, %v868
          %v933 = vsel %vm805, %v622, %v869
          %v934 = vsel %vm806, %v625, %v870
          %v935 = vsel %vm807, %v628, %v871
          %v936 = vsel %vm808, %v631, %v872
          %v937 = vsel %vm809, %v634, %v873
          %v938 = vsel %vm810, %v637, %v874
          %v939 = vsel %vm811, %v640, %v875
          %v940 = vsel %vm812, %v643, %v876
          %v941 = vsel %vm813, %v646, %v877
          %v942 = vsel %vm814, %v649, %v878
          %v943 = vsel %vm815, %v652, %v879
          %v944 = vsel %vm816, %v655, %v880
          %v945 = vsel %vm817, %v658, %v881
          %v946 = vsel %vm818, %v661, %v882
          %v947 = vsel %vm819, %v664, %v883
          %v948 = vsel %vm820, %v667, %v884
          %v949 = vsel %vm821, %v670, %v885
          %v950 = vsel %vm822, %v673, %v886
          %v951 = vsel %vm823, %v676, %v887
          %v952 = vsel %vm824, %v679, %v888
          %v953 = vsel %vm825, %v682, %v889
          %v954 = vsel %vm826, %v685, %v890
          %v955 = vsel %vm827, %v688, %v891
          %v956 = vsel %vm828, %v691, %v892
          %v957 = vsel %vm829, %v694, %v893
          %v958 = vsel %vm830, %v697, %v894
          %v959 = vsel %vm831, %v700, %v895
          %v960 = vsel %vm832, %v703, %v896
          %v961 = vsel %vm833, %v706, %v897
          %v962 = vsel %vm834, %v709, %v898
          %v963 = vsel %vm835, %v712, %v899
          %v964 = vsel %vm836, %v715, %v900
          %v965 = vsel %vm837, %v718, %v901
          %v966 = vsel %vm838, %v721, %v902
          %v967 = vsel %vm839, %v724, %v903
          %v968 = vsel %vm840, %v727, %v904
          %v969 = vsel %vm841, %v730, %v905
          %v970 = vsel %vm842, %v733, %v906
          %v971 = vsel %vm843, %v736, %v907
          %v972 = vsel %vm844, %v739, %v908
          %v973 = vsel %vm845, %v742, %v909
          %v974 = vsel %vm846, %v745, %v910
          %v975 = vsel %vm847, %v748, %v911
          %v976 = vsel %vm848, %v751, %v912
          %v977 = vsel %vm849, %v754, %v913
          %v978 = vsel %vm850, %v757, %v914
          %v979 = vsel %vm851, %v760, %v915
          %v980 = vsel %vm852, %v763, %v916
          %v981 = vsel %vm853, %v766, %v917
          %v982 = vsel %vm854, %v769, %v918
          %v983 = vsel %vm855, %v772, %v919
          %v984 = vsel %vm856, %v775, %v920
          %v985 = vsel %vm857, %v778, %v921
          %v986 = vsel %vm858, %v781, %v922
          %v987 = vsel %vm859, %v784, %v923
          %v988 = vsel %vm860, %v787, %v924
          %v989 = vsel %vm861, %v790, %v925
          %v990 = vsel %vm862, %v793, %v926
          %v991 = vsel %vm863, %v796, %v927
          %v992 = vsel %vm864, %v799, %v928
          // Predicated region
          $region57: #{tpu_custom_call.1} parent=51 // pred_check
            %p993 = pneg %p321
          $region58: #{tpu_custom_call.1} parent=51 // pred_check_branch
            %995 = sbr.rel (%p993) target = $region60
          $region59: #{tpu_custom_call.1} parent=51 // pred_region
            %v996 = vlaneseq
            %v997 = vshrl.u32 %v996, 7
            %v998 = vadd.s32 %v997, 8
            %v999 = vadd.s32 %v997, 16
            %v1000 = vadd.s32 %v997, 24
            %v1001 = vadd.s32 %v997, 32
            %v1002 = vadd.s32 %v997, 40
            %v1003 = vadd.s32 %v997, 48
            %v1004 = vadd.s32 %v997, 56
            %v1005 = vadd.s32 %v997, 64
            %v1006 = vadd.s32 %v997, 72
            %v1007 = vadd.s32 %v997, 80
            %v1008 = vadd.s32 %v997, 88
            %v1009 = vadd.s32 %v997, 96
            %v1010 = vadd.s32 %v997, 104
            %v1011 = vadd.s32 %v997, 112
            %v1012 = vadd.s32 %v997, 120
            %v1013 = vadd.s32 %v997, 128
            %v1014 = vadd.s32 %v997, 136
            %v1015 = vadd.s32 %v997, 144
            %v1016 = vadd.s32 %v997, 152
            %v1017 = vadd.s32 %v997, 160
            %v1018 = vadd.s32 %v997, 168
            %v1019 = vadd.s32 %v997, 176
            %v1020 = vadd.s32 %v997, 184
            %v1021 = vadd.s32 %v997, 192
            %v1022 = vadd.s32 %v997, 200
            %v1023 = vadd.s32 %v997, 208
            %v1024 = vadd.s32 %v997, 216
            %v1025 = vadd.s32 %v997, 224
            %v1026 = vadd.s32 %v997, 232
            %v1027 = vadd.s32 %v997, 240
            %v1028 = vadd.s32 %v997, 248
            %v1029 = vadd.s32 %v997, 256
            %v1030 = vadd.s32 %v997, 264
            %v1031 = vadd.s32 %v997, 272
            %v1032 = vadd.s32 %v997, 280
            %v1033 = vadd.s32 %v997, 288
            %v1034 = vadd.s32 %v997, 296
            %v1035 = vadd.s32 %v997, 304
            %v1036 = vadd.s32 %v997, 312
            %v1037 = vadd.s32 %v997, 320
            %v1038 = vadd.s32 %v997, 328
            %v1039 = vadd.s32 %v997, 336
            %v1040 = vadd.s32 %v997, 344
            %v1041 = vadd.s32 %v997, 352
            %v1042 = vadd.s32 %v997, 360
            %v1043 = vadd.s32 %v997, 368
            %v1044 = vadd.s32 %v997, 376
            %v1045 = vadd.s32 %v997, 384
            %v1046 = vadd.s32 %v997, 392
            %v1047 = vadd.s32 %v997, 400
            %v1048 = vadd.s32 %v997, 408
            %v1049 = vadd.s32 %v997, 416
            %v1050 = vadd.s32 %v997, 424
            %v1051 = vadd.s32 %v997, 432
            %v1052 = vadd.s32 %v997, 440
            %v1053 = vadd.s32 %v997, 448
            %v1054 = vadd.s32 %v997, 456
            %v1055 = vadd.s32 %v997, 464
            %v1056 = vadd.s32 %v997, 472
            %v1057 = vadd.s32 %v997, 480
            %v1058 = vadd.s32 %v997, 488
            %v1059 = vadd.s32 %v997, 496
            %v1060 = vadd.s32 %v997, 504
            %vm1061 = vcmp.lt.s32.totalorder %v997, 400
            %vm1062 = vcmp.lt.s32.totalorder %v998, 400
            %vm1063 = vcmp.lt.s32.totalorder %v999, 400
            %vm1064 = vcmp.lt.s32.totalorder %v1000, 400
            %vm1065 = vcmp.lt.s32.totalorder %v1001, 400
            %vm1066 = vcmp.lt.s32.totalorder %v1002, 400
            %vm1067 = vcmp.lt.s32.totalorder %v1003, 400
            %vm1068 = vcmp.lt.s32.totalorder %v1004, 400
            %vm1069 = vcmp.lt.s32.totalorder %v1005, 400
            %vm1070 = vcmp.lt.s32.totalorder %v1006, 400
            %vm1071 = vcmp.lt.s32.totalorder %v1007, 400
            %vm1072 = vcmp.lt.s32.totalorder %v1008, 400
            %vm1073 = vcmp.lt.s32.totalorder %v1009, 400
            %vm1074 = vcmp.lt.s32.totalorder %v1010, 400
            %vm1075 = vcmp.lt.s32.totalorder %v1011, 400
            %vm1076 = vcmp.lt.s32.totalorder %v1012, 400
            %vm1077 = vcmp.lt.s32.totalorder %v1013, 400
            %vm1078 = vcmp.lt.s32.totalorder %v1014, 400
            %vm1079 = vcmp.lt.s32.totalorder %v1015, 400
            %vm1080 = vcmp.lt.s32.totalorder %v1016, 400
            %vm1081 = vcmp.lt.s32.totalorder %v1017, 400
            %vm1082 = vcmp.lt.s32.totalorder %v1018, 400
            %vm1083 = vcmp.lt.s32.totalorder %v1019, 400
            %vm1084 = vcmp.lt.s32.totalorder %v1020, 400
            %vm1085 = vcmp.lt.s32.totalorder %v1021, 400
            %vm1086 = vcmp.lt.s32.totalorder %v1022, 400
            %vm1087 = vcmp.lt.s32.totalorder %v1023, 400
            %vm1088 = vcmp.lt.s32.totalorder %v1024, 400
            %vm1089 = vcmp.lt.s32.totalorder %v1025, 400
            %vm1090 = vcmp.lt.s32.totalorder %v1026, 400
            %vm1091 = vcmp.lt.s32.totalorder %v1027, 400
            %vm1092 = vcmp.lt.s32.totalorder %v1028, 400
            %vm1093 = vcmp.lt.s32.totalorder %v1029, 400
            %vm1094 = vcmp.lt.s32.totalorder %v1030, 400
            %vm1095 = vcmp.lt.s32.totalorder %v1031, 400
            %vm1096 = vcmp.lt.s32.totalorder %v1032, 400
            %vm1097 = vcmp.lt.s32.totalorder %v1033, 400
            %vm1098 = vcmp.lt.s32.totalorder %v1034, 400
            %vm1099 = vcmp.lt.s32.totalorder %v1035, 400
            %vm1100 = vcmp.lt.s32.totalorder %v1036, 400
            %vm1101 = vcmp.lt.s32.totalorder %v1037, 400
            %vm1102 = vcmp.lt.s32.totalorder %v1038, 400
            %vm1103 = vcmp.lt.s32.totalorder %v1039, 400
            %vm1104 = vcmp.lt.s32.totalorder %v1040, 400
            %vm1105 = vcmp.lt.s32.totalorder %v1041, 400
            %vm1106 = vcmp.lt.s32.totalorder %v1042, 400
            %vm1107 = vcmp.lt.s32.totalorder %v1043, 400
            %vm1108 = vcmp.lt.s32.totalorder %v1044, 400
            %vm1109 = vcmp.lt.s32.totalorder %v1045, 400
            %vm1110 = vcmp.lt.s32.totalorder %v1046, 400
            %vm1111 = vcmp.lt.s32.totalorder %v1047, 400
            %vm1112 = vcmp.lt.s32.totalorder %v1048, 400
            %vm1113 = vcmp.lt.s32.totalorder %v1049, 400
            %vm1114 = vcmp.lt.s32.totalorder %v1050, 400
            %vm1115 = vcmp.lt.s32.totalorder %v1051, 400
            %vm1116 = vcmp.lt.s32.totalorder %v1052, 400
            %vm1117 = vcmp.lt.s32.totalorder %v1053, 400
            %vm1118 = vcmp.lt.s32.totalorder %v1054, 400
            %vm1119 = vcmp.lt.s32.totalorder %v1055, 400
            %vm1120 = vcmp.lt.s32.totalorder %v1056, 400
            %vm1121 = vcmp.lt.s32.totalorder %v1057, 400
            %vm1122 = vcmp.lt.s32.totalorder %v1058, 400
            %vm1123 = vcmp.lt.s32.totalorder %v1059, 400
            %vm1124 = vcmp.lt.s32.totalorder %v1060, 400
            %v1125 = vsel %vm1061, 1, 0
            %v1126 = vsel %vm1062, 1, 0
            %v1127 = vsel %vm1063, 1, 0
            %v1128 = vsel %vm1064, 1, 0
            %v1129 = vsel %vm1065, 1, 0
            %v1130 = vsel %vm1066, 1, 0
            %v1131 = vsel %vm1067, 1, 0
            %v1132 = vsel %vm1068, 1, 0
            %v1133 = vsel %vm1069, 1, 0
            %v1134 = vsel %vm1070, 1, 0
            %v1135 = vsel %vm1071, 1, 0
            %v1136 = vsel %vm1072, 1, 0
            %v1137 = vsel %vm1073, 1, 0
            %v1138 = vsel %vm1074, 1, 0
            %v1139 = vsel %vm1075, 1, 0
            %v1140 = vsel %vm1076, 1, 0
            %v1141 = vsel %vm1077, 1, 0
            %v1142 = vsel %vm1078, 1, 0
            %v1143 = vsel %vm1079, 1, 0
            %v1144 = vsel %vm1080, 1, 0
            %v1145 = vsel %vm1081, 1, 0
            %v1146 = vsel %vm1082, 1, 0
            %v1147 = vsel %vm1083, 1, 0
            %v1148 = vsel %vm1084, 1, 0
            %v1149 = vsel %vm1085, 1, 0
            %v1150 = vsel %vm1086, 1, 0
            %v1151 = vsel %vm1087, 1, 0
            %v1152 = vsel %vm1088, 1, 0
            %v1153 = vsel %vm1089, 1, 0
            %v1154 = vsel %vm1090, 1, 0
            %v1155 = vsel %vm1091, 1, 0
            %v1156 = vsel %vm1092, 1, 0
            %v1157 = vsel %vm1093, 1, 0
            %v1158 = vsel %vm1094, 1, 0
            %v1159 = vsel %vm1095, 1, 0
            %v1160 = vsel %vm1096, 1, 0
            %v1161 = vsel %vm1097, 1, 0
            %v1162 = vsel %vm1098, 1, 0
            %v1163 = vsel %vm1099, 1, 0
            %v1164 = vsel %vm1100, 1, 0
            %v1165 = vsel %vm1101, 1, 0
            %v1166 = vsel %vm1102, 1, 0
            %v1167 = vsel %vm1103, 1, 0
            %v1168 = vsel %vm1104, 1, 0
            %v1169 = vsel %vm1105, 1, 0
            %v1170 = vsel %vm1106, 1, 0
            %v1171 = vsel %vm1107, 1, 0
            %v1172 = vsel %vm1108, 1, 0
            %v1173 = vsel %vm1109, 1, 0
            %v1174 = vsel %vm1110, 1, 0
            %v1175 = vsel %vm1111, 1, 0
            %v1176 = vsel %vm1112, 1, 0
            %v1177 = vsel %vm1113, 1, 0
            %v1178 = vsel %vm1114, 1, 0
            %v1179 = vsel %vm1115, 1, 0
            %v1180 = vsel %vm1116, 1, 0
            %v1181 = vsel %vm1117, 1, 0
            %v1182 = vsel %vm1118, 1, 0
            %v1183 = vsel %vm1119, 1, 0
            %v1184 = vsel %vm1120, 1, 0
            %v1185 = vsel %vm1121, 1, 0
            %v1186 = vsel %vm1122, 1, 0
            %v1187 = vsel %vm1123, 1, 0
            %v1188 = vsel %vm1124, 1, 0
            %vm1189 = vcmp.eq.s32.totalorder %v1125, 1
            %vm1190 = vcmp.eq.s32.totalorder %v1126, 1
            %vm1191 = vcmp.eq.s32.totalorder %v1127, 1
            %vm1192 = vcmp.eq.s32.totalorder %v1128, 1
            %vm1193 = vcmp.eq.s32.totalorder %v1129, 1
            %vm1194 = vcmp.eq.s32.totalorder %v1130, 1
            %vm1195 = vcmp.eq.s32.totalorder %v1131, 1
            %vm1196 = vcmp.eq.s32.totalorder %v1132, 1
            %vm1197 = vcmp.eq.s32.totalorder %v1133, 1
            %vm1198 = vcmp.eq.s32.totalorder %v1134, 1
            %vm1199 = vcmp.eq.s32.totalorder %v1135, 1
            %vm1200 = vcmp.eq.s32.totalorder %v1136, 1
            %vm1201 = vcmp.eq.s32.totalorder %v1137, 1
            %vm1202 = vcmp.eq.s32.totalorder %v1138, 1
            %vm1203 = vcmp.eq.s32.totalorder %v1139, 1
            %vm1204 = vcmp.eq.s32.totalorder %v1140, 1
            %vm1205 = vcmp.eq.s32.totalorder %v1141, 1
            %vm1206 = vcmp.eq.s32.totalorder %v1142, 1
            %vm1207 = vcmp.eq.s32.totalorder %v1143, 1
            %vm1208 = vcmp.eq.s32.totalorder %v1144, 1
            %vm1209 = vcmp.eq.s32.totalorder %v1145, 1
            %vm1210 = vcmp.eq.s32.totalorder %v1146, 1
            %vm1211 = vcmp.eq.s32.totalorder %v1147, 1
            %vm1212 = vcmp.eq.s32.totalorder %v1148, 1
            %vm1213 = vcmp.eq.s32.totalorder %v1149, 1
            %vm1214 = vcmp.eq.s32.totalorder %v1150, 1
            %vm1215 = vcmp.eq.s32.totalorder %v1151, 1
            %vm1216 = vcmp.eq.s32.totalorder %v1152, 1
            %vm1217 = vcmp.eq.s32.totalorder %v1153, 1
            %vm1218 = vcmp.eq.s32.totalorder %v1154, 1
            %vm1219 = vcmp.eq.s32.totalorder %v1155, 1
            %vm1220 = vcmp.eq.s32.totalorder %v1156, 1
            %vm1221 = vcmp.eq.s32.totalorder %v1157, 1
            %vm1222 = vcmp.eq.s32.totalorder %v1158, 1
            %vm1223 = vcmp.eq.s32.totalorder %v1159, 1
            %vm1224 = vcmp.eq.s32.totalorder %v1160, 1
            %vm1225 = vcmp.eq.s32.totalorder %v1161, 1
            %vm1226 = vcmp.eq.s32.totalorder %v1162, 1
            %vm1227 = vcmp.eq.s32.totalorder %v1163, 1
            %vm1228 = vcmp.eq.s32.totalorder %v1164, 1
            %vm1229 = vcmp.eq.s32.totalorder %v1165, 1
            %vm1230 = vcmp.eq.s32.totalorder %v1166, 1
            %vm1231 = vcmp.eq.s32.totalorder %v1167, 1
            %vm1232 = vcmp.eq.s32.totalorder %v1168, 1
            %vm1233 = vcmp.eq.s32.totalorder %v1169, 1
            %vm1234 = vcmp.eq.s32.totalorder %v1170, 1
            %vm1235 = vcmp.eq.s32.totalorder %v1171, 1
            %vm1236 = vcmp.eq.s32.totalorder %v1172, 1
            %vm1237 = vcmp.eq.s32.totalorder %v1173, 1
            %vm1238 = vcmp.eq.s32.totalorder %v1174, 1
            %vm1239 = vcmp.eq.s32.totalorder %v1175, 1
            %vm1240 = vcmp.eq.s32.totalorder %v1176, 1
            %vm1241 = vcmp.eq.s32.totalorder %v1177, 1
            %vm1242 = vcmp.eq.s32.totalorder %v1178, 1
            %vm1243 = vcmp.eq.s32.totalorder %v1179, 1
            %vm1244 = vcmp.eq.s32.totalorder %v1180, 1
            %vm1245 = vcmp.eq.s32.totalorder %v1181, 1
            %vm1246 = vcmp.eq.s32.totalorder %v1182, 1
            %vm1247 = vcmp.eq.s32.totalorder %v1183, 1
            %vm1248 = vcmp.eq.s32.totalorder %v1184, 1
            %vm1249 = vcmp.eq.s32.totalorder %v1185, 1
            %vm1250 = vcmp.eq.s32.totalorder %v1186, 1
            %vm1251 = vcmp.eq.s32.totalorder %v1187, 1
            %vm1252 = vcmp.eq.s32.totalorder %v1188, 1
            %v1253 = vsel %vm1189, %v929, 0.0
            %v1254 = vsel %vm1190, %v930, 0.0
            %v1255 = vsel %vm1191, %v931, 0.0
            %v1256 = vsel %vm1192, %v932, 0.0
            %v1257 = vsel %vm1193, %v933, 0.0
            %v1258 = vsel %vm1194, %v934, 0.0
            %v1259 = vsel %vm1195, %v935, 0.0
            %v1260 = vsel %vm1196, %v936, 0.0
            %v1261 = vsel %vm1197, %v937, 0.0
            %v1262 = vsel %vm1198, %v938, 0.0
            %v1263 = vsel %vm1199, %v939, 0.0
            %v1264 = vsel %vm1200, %v940, 0.0
            %v1265 = vsel %vm1201, %v941, 0.0
            %v1266 = vsel %vm1202, %v942, 0.0
            %v1267 = vsel %vm1203, %v943, 0.0
            %v1268 = vsel %vm1204, %v944, 0.0
            %v1269 = vsel %vm1205, %v945, 0.0
            %v1270 = vsel %vm1206, %v946, 0.0
            %v1271 = vsel %vm1207, %v947, 0.0
            %v1272 = vsel %vm1208, %v948, 0.0
            %v1273 = vsel %vm1209, %v949, 0.0
            %v1274 = vsel %vm1210, %v950, 0.0
            %v1275 = vsel %vm1211, %v951, 0.0
            %v1276 = vsel %vm1212, %v952, 0.0
            %v1277 = vsel %vm1213, %v953, 0.0
            %v1278 = vsel %vm1214, %v954, 0.0
            %v1279 = vsel %vm1215, %v955, 0.0
            %v1280 = vsel %vm1216, %v956, 0.0
            %v1281 = vsel %vm1217, %v957, 0.0
            %v1282 = vsel %vm1218, %v958, 0.0
            %v1283 = vsel %vm1219, %v959, 0.0
            %v1284 = vsel %vm1220, %v960, 0.0
            %v1285 = vsel %vm1221, %v961, 0.0
            %v1286 = vsel %vm1222, %v962, 0.0
            %v1287 = vsel %vm1223, %v963, 0.0
            %v1288 = vsel %vm1224, %v964, 0.0
            %v1289 = vsel %vm1225, %v965, 0.0
            %v1290 = vsel %vm1226, %v966, 0.0
            %v1291 = vsel %vm1227, %v967, 0.0
            %v1292 = vsel %vm1228, %v968, 0.0
            %v1293 = vsel %vm1229, %v969, 0.0
            %v1294 = vsel %vm1230, %v970, 0.0
            %v1295 = vsel %vm1231, %v971, 0.0
            %v1296 = vsel %vm1232, %v972, 0.0
            %v1297 = vsel %vm1233, %v973, 0.0
            %v1298 = vsel %vm1234, %v974, 0.0
            %v1299 = vsel %vm1235, %v975, 0.0
            %v1300 = vsel %vm1236, %v976, 0.0
            %v1301 = vsel %vm1237, %v977, 0.0
            %v1302 = vsel %vm1238, %v978, 0.0
            %v1303 = vsel %vm1239, %v979, 0.0
            %v1304 = vsel %vm1240, %v980, 0.0
            %v1305 = vsel %vm1241, %v981, 0.0
            %v1306 = vsel %vm1242, %v982, 0.0
            %v1307 = vsel %vm1243, %v983, 0.0
            %v1308 = vsel %vm1244, %v984, 0.0
            %v1309 = vsel %vm1245, %v985, 0.0
            %v1310 = vsel %vm1246, %v986, 0.0
            %v1311 = vsel %vm1247, %v987, 0.0
            %v1312 = vsel %vm1248, %v988, 0.0
            %v1313 = vsel %vm1249, %v989, 0.0
            %v1314 = vsel %vm1250, %v990, 0.0
            %v1315 = vsel %vm1251, %v991, 0.0
            %v1316 = vsel %vm1252, %v992, 0.0
            %v1317 = vld [vmem:[#allocation2] sm:$0x1]
            %vm1318 = vcmask 523264
            %v1319 = vsel %vm1318, %v1253, 0.0
            %v1320 = vsel %vm1318, %v1254, 0.0
            %v1321 = vadd.f32 %v1319, %v1320
            %v1322 = vsel %vm1318, %v1255, 0.0
            %v1323 = vadd.f32 %v1321, %v1322
            %v1324 = vsel %vm1318, %v1256, 0.0
            %v1325 = vadd.f32 %v1323, %v1324
            %v1326 = vsel %vm1318, %v1257, 0.0
            %v1327 = vadd.f32 %v1325, %v1326
            %v1328 = vsel %vm1318, %v1258, 0.0
            %v1329 = vadd.f32 %v1327, %v1328
            %v1330 = vsel %vm1318, %v1259, 0.0
            %v1331 = vadd.f32 %v1329, %v1330
            %v1332 = vsel %vm1318, %v1260, 0.0
            %v1333 = vadd.f32 %v1331, %v1332
            %v1334 = vsel %vm1318, %v1261, 0.0
            %v1335 = vadd.f32 %v1333, %v1334
            %v1336 = vsel %vm1318, %v1262, 0.0
            %v1337 = vadd.f32 %v1335, %v1336
            %v1338 = vsel %vm1318, %v1263, 0.0
            %v1339 = vadd.f32 %v1337, %v1338
            %v1340 = vsel %vm1318, %v1264, 0.0
            %v1341 = vadd.f32 %v1339, %v1340
            %v1342 = vsel %vm1318, %v1265, 0.0
            %v1343 = vadd.f32 %v1341, %v1342
            %v1344 = vsel %vm1318, %v1266, 0.0
            %v1345 = vadd.f32 %v1343, %v1344
            %v1346 = vsel %vm1318, %v1267, 0.0
            %v1347 = vadd.f32 %v1345, %v1346
            %v1348 = vsel %vm1318, %v1268, 0.0
            %v1349 = vadd.f32 %v1347, %v1348
            %v1350 = vsel %vm1318, %v1269, 0.0
            %v1351 = vadd.f32 %v1349, %v1350
            %v1352 = vsel %vm1318, %v1270, 0.0
            %v1353 = vadd.f32 %v1351, %v1352
            %v1354 = vsel %vm1318, %v1271, 0.0
            %v1355 = vadd.f32 %v1353, %v1354
            %v1356 = vsel %vm1318, %v1272, 0.0
            %v1357 = vadd.f32 %v1355, %v1356
            %v1358 = vsel %vm1318, %v1273, 0.0
            %v1359 = vadd.f32 %v1357, %v1358
            %v1360 = vsel %vm1318, %v1274, 0.0
            %v1361 = vadd.f32 %v1359, %v1360
            %v1362 = vsel %vm1318, %v1275, 0.0
            %v1363 = vadd.f32 %v1361, %v1362
            %v1364 = vsel %vm1318, %v1276, 0.0
            %v1365 = vadd.f32 %v1363, %v1364
            %v1366 = vsel %vm1318, %v1277, 0.0
            %v1367 = vadd.f32 %v1365, %v1366
            %v1368 = vsel %vm1318, %v1278, 0.0
            %v1369 = vadd.f32 %v1367, %v1368
            %v1370 = vsel %vm1318, %v1279, 0.0
            %v1371 = vadd.f32 %v1369, %v1370
            %v1372 = vsel %vm1318, %v1280, 0.0
            %v1373 = vadd.f32 %v1371, %v1372
            %v1374 = vsel %vm1318, %v1281, 0.0
            %v1375 = vadd.f32 %v1373, %v1374
            %v1376 = vsel %vm1318, %v1282, 0.0
            %v1377 = vadd.f32 %v1375, %v1376
            %v1378 = vsel %vm1318, %v1283, 0.0
            %v1379 = vadd.f32 %v1377, %v1378
            %v1380 = vsel %vm1318, %v1284, 0.0
            %v1381 = vadd.f32 %v1379, %v1380
            %v1382 = vsel %vm1318, %v1285, 0.0
            %v1383 = vadd.f32 %v1381, %v1382
            %v1384 = vsel %vm1318, %v1286, 0.0
            %v1385 = vadd.f32 %v1383, %v1384
            %v1386 = vsel %vm1318, %v1287, 0.0
            %v1387 = vadd.f32 %v1385, %v1386
            %v1388 = vsel %vm1318, %v1288, 0.0
            %v1389 = vadd.f32 %v1387, %v1388
            %v1390 = vsel %vm1318, %v1289, 0.0
            %v1391 = vadd.f32 %v1389, %v1390
            %v1392 = vsel %vm1318, %v1290, 0.0
            %v1393 = vadd.f32 %v1391, %v1392
            %v1394 = vsel %vm1318, %v1291, 0.0
            %v1395 = vadd.f32 %v1393, %v1394
            %v1396 = vsel %vm1318, %v1292, 0.0
            %v1397 = vadd.f32 %v1395, %v1396
            %v1398 = vsel %vm1318, %v1293, 0.0
            %v1399 = vadd.f32 %v1397, %v1398
            %v1400 = vsel %vm1318, %v1294, 0.0
            %v1401 = vadd.f32 %v1399, %v1400
            %v1402 = vsel %vm1318, %v1295, 0.0
            %v1403 = vadd.f32 %v1401, %v1402
            %v1404 = vsel %vm1318, %v1296, 0.0
            %v1405 = vadd.f32 %v1403, %v1404
            %v1406 = vsel %vm1318, %v1297, 0.0
            %v1407 = vadd.f32 %v1405, %v1406
            %v1408 = vsel %vm1318, %v1298, 0.0
            %v1409 = vadd.f32 %v1407, %v1408
            %v1410 = vsel %vm1318, %v1299, 0.0
            %v1411 = vadd.f32 %v1409, %v1410
            %v1412 = vsel %vm1318, %v1300, 0.0
            %v1413 = vadd.f32 %v1411, %v1412
            %v1414 = vsel %vm1318, %v1301, 0.0
            %v1415 = vadd.f32 %v1413, %v1414
            %v1416 = vsel %vm1318, %v1302, 0.0
            %v1417 = vadd.f32 %v1415, %v1416
            %v1418 = vsel %vm1318, %v1303, 0.0
            %v1419 = vadd.f32 %v1417, %v1418
            %v1420 = vsel %vm1318, %v1304, 0.0
            %v1421 = vadd.f32 %v1419, %v1420
            %v1422 = vsel %vm1318, %v1305, 0.0
            %v1423 = vadd.f32 %v1421, %v1422
            %v1424 = vsel %vm1318, %v1306, 0.0
            %v1425 = vadd.f32 %v1423, %v1424
            %v1426 = vsel %vm1318, %v1307, 0.0
            %v1427 = vadd.f32 %v1425, %v1426
            %v1428 = vsel %vm1318, %v1308, 0.0
            %v1429 = vadd.f32 %v1427, %v1428
            %v1430 = vsel %vm1318, %v1309, 0.0
            %v1431 = vadd.f32 %v1429, %v1430
            %v1432 = vsel %vm1318, %v1310, 0.0
            %v1433 = vadd.f32 %v1431, %v1432
            %v1434 = vsel %vm1318, %v1311, 0.0
            %v1435 = vadd.f32 %v1433, %v1434
            %v1436 = vsel %vm1318, %v1312, 0.0
            %v1437 = vadd.f32 %v1435, %v1436
            %v1438 = vsel %vm1318, %v1313, 0.0
            %v1439 = vadd.f32 %v1437, %v1438
            %v1440 = vsel %vm1318, %v1314, 0.0
            %v1441 = vadd.f32 %v1439, %v1440
            %v1442 = vsel %vm1318, %v1315, 0.0
            %v1443 = vadd.f32 %v1441, %v1442
            %v1444 = vsel %vm1318, %v1316, 0.0
            %v1445 = vadd.f32 %v1443, %v1444
            %v1446 = vrot.slane %v1445, 4
            %v1447 = vadd.f32 %v1445, %v1446
            %v1448 = vrot.slane %v1447, 2
            %v1449 = vadd.f32 %v1447, %v1448
            %v1450 = vrot.slane %v1449, 1
            %v1451 = vadd.f32 %v1449, %v1450
            %v1452 = vadd.f32 %v1317, %v1451
            %vm1453 = vcmask 516096
            %1454 = vst.msk [vmem:[#allocation2] sm:$0x1] %vm1453, %v1452
            %v1455 = vld [vmem:[#allocation2 + $0x1] sm:$0x1]
            %v1456 = vmul.f32 %v1253, %v1253
            %v1457 = vmul.f32 %v1254, %v1254
            %v1458 = vmul.f32 %v1255, %v1255
            %v1459 = vmul.f32 %v1256, %v1256
            %v1460 = vmul.f32 %v1257, %v1257
            %v1461 = vmul.f32 %v1258, %v1258
            %v1462 = vmul.f32 %v1259, %v1259
            %v1463 = vmul.f32 %v1260, %v1260
            %v1464 = vmul.f32 %v1261, %v1261
            %v1465 = vmul.f32 %v1262, %v1262
            %v1466 = vmul.f32 %v1263, %v1263
            %v1467 = vmul.f32 %v1264, %v1264
            %v1468 = vmul.f32 %v1265, %v1265
            %v1469 = vmul.f32 %v1266, %v1266
            %v1470 = vmul.f32 %v1267, %v1267
            %v1471 = vmul.f32 %v1268, %v1268
            %v1472 = vmul.f32 %v1269, %v1269
            %v1473 = vmul.f32 %v1270, %v1270
            %v1474 = vmul.f32 %v1271, %v1271
            %v1475 = vmul.f32 %v1272, %v1272
            %v1476 = vmul.f32 %v1273, %v1273
            %v1477 = vmul.f32 %v1274, %v1274
            %v1478 = vmul.f32 %v1275, %v1275
            %v1479 = vmul.f32 %v1276, %v1276
            %v1480 = vmul.f32 %v1277, %v1277
            %v1481 = vmul.f32 %v1278, %v1278
            %v1482 = vmul.f32 %v1279, %v1279
            %v1483 = vmul.f32 %v1280, %v1280
            %v1484 = vmul.f32 %v1281, %v1281
            %v1485 = vmul.f32 %v1282, %v1282
            %v1486 = vmul.f32 %v1283, %v1283
            %v1487 = vmul.f32 %v1284, %v1284
            %v1488 = vmul.f32 %v1285, %v1285
            %v1489 = vmul.f32 %v1286, %v1286
            %v1490 = vmul.f32 %v1287, %v1287
            %v1491 = vmul.f32 %v1288, %v1288
            %v1492 = vmul.f32 %v1289, %v1289
            %v1493 = vmul.f32 %v1290, %v1290
            %v1494 = vmul.f32 %v1291, %v1291
            %v1495 = vmul.f32 %v1292, %v1292
            %v1496 = vmul.f32 %v1293, %v1293
            %v1497 = vmul.f32 %v1294, %v1294
            %v1498 = vmul.f32 %v1295, %v1295
            %v1499 = vmul.f32 %v1296, %v1296
            %v1500 = vmul.f32 %v1297, %v1297
            %v1501 = vmul.f32 %v1298, %v1298
            %v1502 = vmul.f32 %v1299, %v1299
            %v1503 = vmul.f32 %v1300, %v1300
            %v1504 = vmul.f32 %v1301, %v1301
            %v1505 = vmul.f32 %v1302, %v1302
            %v1506 = vmul.f32 %v1303, %v1303
            %v1507 = vmul.f32 %v1304, %v1304
            %v1508 = vmul.f32 %v1305, %v1305
            %v1509 = vmul.f32 %v1306, %v1306
            %v1510 = vmul.f32 %v1307, %v1307
            %v1511 = vmul.f32 %v1308, %v1308
            %v1512 = vmul.f32 %v1309, %v1309
            %v1513 = vmul.f32 %v1310, %v1310
            %v1514 = vmul.f32 %v1311, %v1311
            %v1515 = vmul.f32 %v1312, %v1312
            %v1516 = vmul.f32 %v1313, %v1313
            %v1517 = vmul.f32 %v1314, %v1314
            %v1518 = vmul.f32 %v1315, %v1315
            %v1519 = vmul.f32 %v1316, %v1316
            %v1520 = vsel %vm1318, %v1456, 0.0
            %v1521 = vsel %vm1318, %v1457, 0.0
            %v1522 = vadd.f32 %v1520, %v1521
            %v1523 = vsel %vm1318, %v1458, 0.0
            %v1524 = vadd.f32 %v1522, %v1523
            %v1525 = vsel %vm1318, %v1459, 0.0
            %v1526 = vadd.f32 %v1524, %v1525
            %v1527 = vsel %vm1318, %v1460, 0.0
            %v1528 = vadd.f32 %v1526, %v1527
            %v1529 = vsel %vm1318, %v1461, 0.0
            %v1530 = vadd.f32 %v1528, %v1529
            %v1531 = vsel %vm1318, %v1462, 0.0
            %v1532 = vadd.f32 %v1530, %v1531
            %v1533 = vsel %vm1318, %v1463, 0.0
            %v1534 = vadd.f32 %v1532, %v1533
            %v1535 = vsel %vm1318, %v1464, 0.0
            %v1536 = vadd.f32 %v1534, %v1535
            %v1537 = vsel %vm1318, %v1465, 0.0
            %v1538 = vadd.f32 %v1536, %v1537
            %v1539 = vsel %vm1318, %v1466, 0.0
            %v1540 = vadd.f32 %v1538, %v1539
            %v1541 = vsel %vm1318, %v1467, 0.0
            %v1542 = vadd.f32 %v1540, %v1541
            %v1543 = vsel %vm1318, %v1468, 0.0
            %v1544 = vadd.f32 %v1542, %v1543
            %v1545 = vsel %vm1318, %v1469, 0.0
            %v1546 = vadd.f32 %v1544, %v1545
            %v1547 = vsel %vm1318, %v1470, 0.0
            %v1548 = vadd.f32 %v1546, %v1547
            %v1549 = vsel %vm1318, %v1471, 0.0
            %v1550 = vadd.f32 %v1548, %v1549
            %v1551 = vsel %vm1318, %v1472, 0.0
            %v1552 = vadd.f32 %v1550, %v1551
            %v1553 = vsel %vm1318, %v1473, 0.0
            %v1554 = vadd.f32 %v1552, %v1553
            %v1555 = vsel %vm1318, %v1474, 0.0
            %v1556 = vadd.f32 %v1554, %v1555
            %v1557 = vsel %vm1318, %v1475, 0.0
            %v1558 = vadd.f32 %v1556, %v1557
            %v1559 = vsel %vm1318, %v1476, 0.0
            %v1560 = vadd.f32 %v1558, %v1559
            %v1561 = vsel %vm1318, %v1477, 0.0
            %v1562 = vadd.f32 %v1560, %v1561
            %v1563 = vsel %vm1318, %v1478, 0.0
            %v1564 = vadd.f32 %v1562, %v1563
            %v1565 = vsel %vm1318, %v1479, 0.0
            %v1566 = vadd.f32 %v1564, %v1565
            %v1567 = vsel %vm1318, %v1480, 0.0
            %v1568 = vadd.f32 %v1566, %v1567
            %v1569 = vsel %vm1318, %v1481, 0.0
            %v1570 = vadd.f32 %v1568, %v1569
            %v1571 = vsel %vm1318, %v1482, 0.0
            %v1572 = vadd.f32 %v1570, %v1571
            %v1573 = vsel %vm1318, %v1483, 0.0
            %v1574 = vadd.f32 %v1572, %v1573
            %v1575 = vsel %vm1318, %v1484, 0.0
            %v1576 = vadd.f32 %v1574, %v1575
            %v1577 = vsel %vm1318, %v1485, 0.0
            %v1578 = vadd.f32 %v1576, %v1577
            %v1579 = vsel %vm1318, %v1486, 0.0
            %v1580 = vadd.f32 %v1578, %v1579
            %v1581 = vsel %vm1318, %v1487, 0.0
            %v1582 = vadd.f32 %v1580, %v1581
            %v1583 = vsel %vm1318, %v1488, 0.0
            %v1584 = vadd.f32 %v1582, %v1583
            %v1585 = vsel %vm1318, %v1489, 0.0
            %v1586 = vadd.f32 %v1584, %v1585
            %v1587 = vsel %vm1318, %v1490, 0.0
            %v1588 = vadd.f32 %v1586, %v1587
            %v1589 = vsel %vm1318, %v1491, 0.0
            %v1590 = vadd.f32 %v1588, %v1589
            %v1591 = vsel %vm1318, %v1492, 0.0
            %v1592 = vadd.f32 %v1590, %v1591
            %v1593 = vsel %vm1318, %v1493, 0.0
            %v1594 = vadd.f32 %v1592, %v1593
            %v1595 = vsel %vm1318, %v1494, 0.0
            %v1596 = vadd.f32 %v1594, %v1595
            %v1597 = vsel %vm1318, %v1495, 0.0
            %v1598 = vadd.f32 %v1596, %v1597
            %v1599 = vsel %vm1318, %v1496, 0.0
            %v1600 = vadd.f32 %v1598, %v1599
            %v1601 = vsel %vm1318, %v1497, 0.0
            %v1602 = vadd.f32 %v1600, %v1601
            %v1603 = vsel %vm1318, %v1498, 0.0
            %v1604 = vadd.f32 %v1602, %v1603
            %v1605 = vsel %vm1318, %v1499, 0.0
            %v1606 = vadd.f32 %v1604, %v1605
            %v1607 = vsel %vm1318, %v1500, 0.0
            %v1608 = vadd.f32 %v1606, %v1607
            %v1609 = vsel %vm1318, %v1501, 0.0
            %v1610 = vadd.f32 %v1608, %v1609
            %v1611 = vsel %vm1318, %v1502, 0.0
            %v1612 = vadd.f32 %v1610, %v1611
            %v1613 = vsel %vm1318, %v1503, 0.0
            %v1614 = vadd.f32 %v1612, %v1613
            %v1615 = vsel %vm1318, %v1504, 0.0
            %v1616 = vadd.f32 %v1614, %v1615
            %v1617 = vsel %vm1318, %v1505, 0.0
            %v1618 = vadd.f32 %v1616, %v1617
            %v1619 = vsel %vm1318, %v1506, 0.0
            %v1620 = vadd.f32 %v1618, %v1619
            %v1621 = vsel %vm1318, %v1507, 0.0
            %v1622 = vadd.f32 %v1620, %v1621
            %v1623 = vsel %vm1318, %v1508, 0.0
            %v1624 = vadd.f32 %v1622, %v1623
            %v1625 = vsel %vm1318, %v1509, 0.0
            %v1626 = vadd.f32 %v1624, %v1625
            %v1627 = vsel %vm1318, %v1510, 0.0
            %v1628 = vadd.f32 %v1626, %v1627
            %v1629 = vsel %vm1318, %v1511, 0.0
            %v1630 = vadd.f32 %v1628, %v1629
            %v1631 = vsel %vm1318, %v1512, 0.0
            %v1632 = vadd.f32 %v1630, %v1631
            %v1633 = vsel %vm1318, %v1513, 0.0
            %v1634 = vadd.f32 %v1632, %v1633
            %v1635 = vsel %vm1318, %v1514, 0.0
            %v1636 = vadd.f32 %v1634, %v1635
            %v1637 = vsel %vm1318, %v1515, 0.0
            %v1638 = vadd.f32 %v1636, %v1637
            %v1639 = vsel %vm1318, %v1516, 0.0
            %v1640 = vadd.f32 %v1638, %v1639
            %v1641 = vsel %vm1318, %v1517, 0.0
            %v1642 = vadd.f32 %v1640, %v1641
            %v1643 = vsel %vm1318, %v1518, 0.0
            %v1644 = vadd.f32 %v1642, %v1643
            %v1645 = vsel %vm1318, %v1519, 0.0
            %v1646 = vadd.f32 %v1644, %v1645
            %v1647 = vrot.slane %v1646, 4
            %v1648 = vadd.f32 %v1646, %v1647
            %v1649 = vrot.slane %v1648, 2
            %v1650 = vadd.f32 %v1648, %v1649
            %v1651 = vrot.slane %v1650, 1
            %v1652 = vadd.f32 %v1650, %v1651
            %v1653 = vadd.f32 %v1455, %v1652
            %1654 = vst.msk [vmem:[#allocation2 + $0x1] sm:$0x1] %vm1453, %v1653
            %s1655 = smul.u32 %s23, 512
            %s1656 = scalar_lea.vmem [#allocation4], %s1655
            %1657 = vst.msk [vmem:[%s1656] sm:$0xff] %vm1318, %v1253
            %1658 = vst.msk [vmem:[%s1656 + $0x8] sm:$0xff] %vm1318, %v1254
            %1659 = vst.msk [vmem:[%s1656 + $0x10] sm:$0xff] %vm1318, %v1255
            %1660 = vst.msk [vmem:[%s1656 + $0x18] sm:$0xff] %vm1318, %v1256
            %1661 = vst.msk [vmem:[%s1656 + $0x20] sm:$0xff] %vm1318, %v1257
            %1662 = vst.msk [vmem:[%s1656 + $0x28] sm:$0xff] %vm1318, %v1258
            %1663 = vst.msk [vmem:[%s1656 + $0x30] sm:$0xff] %vm1318, %v1259
            %1664 = vst.msk [vmem:[%s1656 + $0x38] sm:$0xff] %vm1318, %v1260
            %1665 = vst.msk [vmem:[%s1656 + $0x40] sm:$0xff] %vm1318, %v1261
            %1666 = vst.msk [vmem:[%s1656 + $0x48] sm:$0xff] %vm1318, %v1262
            %1667 = vst.msk [vmem:[%s1656 + $0x50] sm:$0xff] %vm1318, %v1263
            %1668 = vst.msk [vmem:[%s1656 + $0x58] sm:$0xff] %vm1318, %v1264
            %1669 = vst.msk [vmem:[%s1656 + $0x60] sm:$0xff] %vm1318, %v1265
            %1670 = vst.msk [vmem:[%s1656 + $0x68] sm:$0xff] %vm1318, %v1266
            %1671 = vst.msk [vmem:[%s1656 + $0x70] sm:$0xff] %vm1318, %v1267
            %1672 = vst.msk [vmem:[%s1656 + $0x78] sm:$0xff] %vm1318, %v1268
            %1673 = vst.msk [vmem:[%s1656 + $0x80] sm:$0xff] %vm1318, %v1269
            %1674 = vst.msk [vmem:[%s1656 + $0x88] sm:$0xff] %vm1318, %v1270
            %1675 = vst.msk [vmem:[%s1656 + $0x90] sm:$0xff] %vm1318, %v1271
            %1676 = vst.msk [vmem:[%s1656 + $0x98] sm:$0xff] %vm1318, %v1272
            %1677 = vst.msk [vmem:[%s1656 + $0xa0] sm:$0xff] %vm1318, %v1273
            %1678 = vst.msk [vmem:[%s1656 + $0xa8] sm:$0xff] %vm1318, %v1274
            %1679 = vst.msk [vmem:[%s1656 + $0xb0] sm:$0xff] %vm1318, %v1275
            %1680 = vst.msk [vmem:[%s1656 + $0xb8] sm:$0xff] %vm1318, %v1276
            %1681 = vst.msk [vmem:[%s1656 + $0xc0] sm:$0xff] %vm1318, %v1277
            %1682 = vst.msk [vmem:[%s1656 + $0xc8] sm:$0xff] %vm1318, %v1278
            %1683 = vst.msk [vmem:[%s1656 + $0xd0] sm:$0xff] %vm1318, %v1279
            %1684 = vst.msk [vmem:[%s1656 + $0xd8] sm:$0xff] %vm1318, %v1280
            %1685 = vst.msk [vmem:[%s1656 + $0xe0] sm:$0xff] %vm1318, %v1281
            %1686 = vst.msk [vmem:[%s1656 + $0xe8] sm:$0xff] %vm1318, %v1282
            %1687 = vst.msk [vmem:[%s1656 + $0xf0] sm:$0xff] %vm1318, %v1283
            %1688 = vst.msk [vmem:[%s1656 + $0xf8] sm:$0xff] %vm1318, %v1284
            %1689 = vst.msk [vmem:[%s1656 + $0x100] sm:$0xff] %vm1318, %v1285
            %1690 = vst.msk [vmem:[%s1656 + $0x108] sm:$0xff] %vm1318, %v1286
            %1691 = vst.msk [vmem:[%s1656 + $0x110] sm:$0xff] %vm1318, %v1287
            %1692 = vst.msk [vmem:[%s1656 + $0x118] sm:$0xff] %vm1318, %v1288
            %1693 = vst.msk [vmem:[%s1656 + $0x120] sm:$0xff] %vm1318, %v1289
            %1694 = vst.msk [vmem:[%s1656 + $0x128] sm:$0xff] %vm1318, %v1290
            %1695 = vst.msk [vmem:[%s1656 + $0x130] sm:$0xff] %vm1318, %v1291
            %1696 = vst.msk [vmem:[%s1656 + $0x138] sm:$0xff] %vm1318, %v1292
            %1697 = vst.msk [vmem:[%s1656 + $0x140] sm:$0xff] %vm1318, %v1293
            %1698 = vst.msk [vmem:[%s1656 + $0x148] sm:$0xff] %vm1318, %v1294
            %1699 = vst.msk [vmem:[%s1656 + $0x150] sm:$0xff] %vm1318, %v1295
            %1700 = vst.msk [vmem:[%s1656 + $0x158] sm:$0xff] %vm1318, %v1296
            %1701 = vst.msk [vmem:[%s1656 + $0x160] sm:$0xff] %vm1318, %v1297
            %1702 = vst.msk [vmem:[%s1656 + $0x168] sm:$0xff] %vm1318, %v1298
            %1703 = vst.msk [vmem:[%s1656 + $0x170] sm:$0xff] %vm1318, %v1299
            %1704 = vst.msk [vmem:[%s1656 + $0x178] sm:$0xff] %vm1318, %v1300
            %1705 = vst.msk [vmem:[%s1656 + $0x180] sm:$0xff] %vm1318, %v1301
            %1706 = vst.msk [vmem:[%s1656 + $0x188] sm:$0xff] %vm1318, %v1302
            %1707 = vst.msk [vmem:[%s1656 + $0x190] sm:$0xff] %vm1318, %v1303
            %1708 = vst.msk [vmem:[%s1656 + $0x198] sm:$0xff] %vm1318, %v1304
            %1709 = vst.msk [vmem:[%s1656 + $0x1a0] sm:$0xff] %vm1318, %v1305
            %1710 = vst.msk [vmem:[%s1656 + $0x1a8] sm:$0xff] %vm1318, %v1306
            %1711 = vst.msk [vmem:[%s1656 + $0x1b0] sm:$0xff] %vm1318, %v1307
            %1712 = vst.msk [vmem:[%s1656 + $0x1b8] sm:$0xff] %vm1318, %v1308
            %1713 = vst.msk [vmem:[%s1656 + $0x1c0] sm:$0xff] %vm1318, %v1309
            %1714 = vst.msk [vmem:[%s1656 + $0x1c8] sm:$0xff] %vm1318, %v1310
            %1715 = vst.msk [vmem:[%s1656 + $0x1d0] sm:$0xff] %vm1318, %v1311
            %1716 = vst.msk [vmem:[%s1656 + $0x1d8] sm:$0xff] %vm1318, %v1312
            %1717 = vst.msk [vmem:[%s1656 + $0x1e0] sm:$0xff] %vm1318, %v1313
            %1718 = vst.msk [vmem:[%s1656 + $0x1e8] sm:$0xff] %vm1318, %v1314
            %1719 = vst.msk [vmem:[%s1656 + $0x1f0] sm:$0xff] %vm1318, %v1315
            %1720 = vst.msk [vmem:[%s1656 + $0x1f8] sm:$0xff] %vm1318, %v1316
          $region60: #{tpu_custom_call.1} parent=51 // pred_fallthru
            _
          %p1721 = scmp.ne.s32.totalorder %s23, 0
          // Predicated region
          $region61: #{tpu_custom_call.1} parent=51 // pred_check
            %p1722 = pneg %p1721
          $region62: #{tpu_custom_call.1} parent=51 // pred_check_branch
            %1724 = sbr.rel (%p1722) target = $region64
          $region63: #{tpu_custom_call.1} parent=51 // pred_region
            %v1725 = vld [vmem:[#allocation2] sm:$0x1]
            %vm1726 = vcmask 523264
            %v1727 = vsel %vm1726, %v929, 0.0
            %v1728 = vsel %vm1726, %v930, 0.0
            %v1729 = vadd.f32 %v1727, %v1728
            %v1730 = vsel %vm1726, %v931, 0.0
            %v1731 = vadd.f32 %v1729, %v1730
            %v1732 = vsel %vm1726, %v932, 0.0
            %v1733 = vadd.f32 %v1731, %v1732
            %v1734 = vsel %vm1726, %v933, 0.0
            %v1735 = vadd.f32 %v1733, %v1734
            %v1736 = vsel %vm1726, %v934, 0.0
            %v1737 = vadd.f32 %v1735, %v1736
            %v1738 = vsel %vm1726, %v935, 0.0
            %v1739 = vadd.f32 %v1737, %v1738
            %v1740 = vsel %vm1726, %v936, 0.0
            %v1741 = vadd.f32 %v1739, %v1740
            %v1742 = vsel %vm1726, %v937, 0.0
            %v1743 = vadd.f32 %v1741, %v1742
            %v1744 = vsel %vm1726, %v938, 0.0
            %v1745 = vadd.f32 %v1743, %v1744
            %v1746 = vsel %vm1726, %v939, 0.0
            %v1747 = vadd.f32 %v1745, %v1746
            %v1748 = vsel %vm1726, %v940, 0.0
            %v1749 = vadd.f32 %v1747, %v1748
            %v1750 = vsel %vm1726, %v941, 0.0
            %v1751 = vadd.f32 %v1749, %v1750
            %v1752 = vsel %vm1726, %v942, 0.0
            %v1753 = vadd.f32 %v1751, %v1752
            %v1754 = vsel %vm1726, %v943, 0.0
            %v1755 = vadd.f32 %v1753, %v1754
            %v1756 = vsel %vm1726, %v944, 0.0
            %v1757 = vadd.f32 %v1755, %v1756
            %v1758 = vsel %vm1726, %v945, 0.0
            %v1759 = vadd.f32 %v1757, %v1758
            %v1760 = vsel %vm1726, %v946, 0.0
            %v1761 = vadd.f32 %v1759, %v1760
            %v1762 = vsel %vm1726, %v947, 0.0
            %v1763 = vadd.f32 %v1761, %v1762
            %v1764 = vsel %vm1726, %v948, 0.0
            %v1765 = vadd.f32 %v1763, %v1764
            %v1766 = vsel %vm1726, %v949, 0.0
            %v1767 = vadd.f32 %v1765, %v1766
            %v1768 = vsel %vm1726, %v950, 0.0
            %v1769 = vadd.f32 %v1767, %v1768
            %v1770 = vsel %vm1726, %v951, 0.0
            %v1771 = vadd.f32 %v1769, %v1770
            %v1772 = vsel %vm1726, %v952, 0.0
            %v1773 = vadd.f32 %v1771, %v1772
            %v1774 = vsel %vm1726, %v953, 0.0
            %v1775 = vadd.f32 %v1773, %v1774
            %v1776 = vsel %vm1726, %v954, 0.0
            %v1777 = vadd.f32 %v1775, %v1776
            %v1778 = vsel %vm1726, %v955, 0.0
            %v1779 = vadd.f32 %v1777, %v1778
            %v1780 = vsel %vm1726, %v956, 0.0
            %v1781 = vadd.f32 %v1779, %v1780
            %v1782 = vsel %vm1726, %v957, 0.0
            %v1783 = vadd.f32 %v1781, %v1782
            %v1784 = vsel %vm1726, %v958, 0.0
            %v1785 = vadd.f32 %v1783, %v1784
            %v1786 = vsel %vm1726, %v959, 0.0
            %v1787 = vadd.f32 %v1785, %v1786
            %v1788 = vsel %vm1726, %v960, 0.0
            %v1789 = vadd.f32 %v1787, %v1788
            %v1790 = vsel %vm1726, %v961, 0.0
            %v1791 = vadd.f32 %v1789, %v1790
            %v1792 = vsel %vm1726, %v962, 0.0
            %v1793 = vadd.f32 %v1791, %v1792
            %v1794 = vsel %vm1726, %v963, 0.0
            %v1795 = vadd.f32 %v1793, %v1794
            %v1796 = vsel %vm1726, %v964, 0.0
            %v1797 = vadd.f32 %v1795, %v1796
            %v1798 = vsel %vm1726, %v965, 0.0
            %v1799 = vadd.f32 %v1797, %v1798
            %v1800 = vsel %vm1726, %v966, 0.0
            %v1801 = vadd.f32 %v1799, %v1800
            %v1802 = vsel %vm1726, %v967, 0.0
            %v1803 = vadd.f32 %v1801, %v1802
            %v1804 = vsel %vm1726, %v968, 0.0
            %v1805 = vadd.f32 %v1803, %v1804
            %v1806 = vsel %vm1726, %v969, 0.0
            %v1807 = vadd.f32 %v1805, %v1806
            %v1808 = vsel %vm1726, %v970, 0.0
            %v1809 = vadd.f32 %v1807, %v1808
            %v1810 = vsel %vm1726, %v971, 0.0
            %v1811 = vadd.f32 %v1809, %v1810
            %v1812 = vsel %vm1726, %v972, 0.0
            %v1813 = vadd.f32 %v1811, %v1812
            %v1814 = vsel %vm1726, %v973, 0.0
            %v1815 = vadd.f32 %v1813, %v1814
            %v1816 = vsel %vm1726, %v974, 0.0
            %v1817 = vadd.f32 %v1815, %v1816
            %v1818 = vsel %vm1726, %v975, 0.0
            %v1819 = vadd.f32 %v1817, %v1818
            %v1820 = vsel %vm1726, %v976, 0.0
            %v1821 = vadd.f32 %v1819, %v1820
            %v1822 = vsel %vm1726, %v977, 0.0
            %v1823 = vadd.f32 %v1821, %v1822
            %v1824 = vsel %vm1726, %v978, 0.0
            %v1825 = vadd.f32 %v1823, %v1824
            %v1826 = vsel %vm1726, %v979, 0.0
            %v1827 = vadd.f32 %v1825, %v1826
            %v1828 = vsel %vm1726, %v980, 0.0
            %v1829 = vadd.f32 %v1827, %v1828
            %v1830 = vsel %vm1726, %v981, 0.0
            %v1831 = vadd.f32 %v1829, %v1830
            %v1832 = vsel %vm1726, %v982, 0.0
            %v1833 = vadd.f32 %v1831, %v1832
            %v1834 = vsel %vm1726, %v983, 0.0
            %v1835 = vadd.f32 %v1833, %v1834
            %v1836 = vsel %vm1726, %v984, 0.0
            %v1837 = vadd.f32 %v1835, %v1836
            %v1838 = vsel %vm1726, %v985, 0.0
            %v1839 = vadd.f32 %v1837, %v1838
            %v1840 = vsel %vm1726, %v986, 0.0
            %v1841 = vadd.f32 %v1839, %v1840
            %v1842 = vsel %vm1726, %v987, 0.0
            %v1843 = vadd.f32 %v1841, %v1842
            %v1844 = vsel %vm1726, %v988, 0.0
            %v1845 = vadd.f32 %v1843, %v1844
            %v1846 = vsel %vm1726, %v989, 0.0
            %v1847 = vadd.f32 %v1845, %v1846
            %v1848 = vsel %vm1726, %v990, 0.0
            %v1849 = vadd.f32 %v1847, %v1848
            %v1850 = vsel %vm1726, %v991, 0.0
            %v1851 = vadd.f32 %v1849, %v1850
            %v1852 = vsel %vm1726, %v992, 0.0
            %v1853 = vadd.f32 %v1851, %v1852
            %v1854 = vrot.slane %v1853, 4
            %v1855 = vadd.f32 %v1853, %v1854
            %v1856 = vrot.slane %v1855, 2
            %v1857 = vadd.f32 %v1855, %v1856
            %v1858 = vrot.slane %v1857, 1
            %v1859 = vadd.f32 %v1857, %v1858
            %v1860 = vadd.f32 %v1725, %v1859
            %vm1861 = vcmask 516096
            %1862 = vst.msk [vmem:[#allocation2] sm:$0x1] %vm1861, %v1860
            %v1863 = vld [vmem:[#allocation2 + $0x1] sm:$0x1]
            %v1864 = vmul.f32 %v929, %v929
            %v1865 = vmul.f32 %v930, %v930
            %v1866 = vmul.f32 %v931, %v931
            %v1867 = vmul.f32 %v932, %v932
            %v1868 = vmul.f32 %v933, %v933
            %v1869 = vmul.f32 %v934, %v934
            %v1870 = vmul.f32 %v935, %v935
            %v1871 = vmul.f32 %v936, %v936
            %v1872 = vmul.f32 %v937, %v937
            %v1873 = vmul.f32 %v938, %v938
            %v1874 = vmul.f32 %v939, %v939
            %v1875 = vmul.f32 %v940, %v940
            %v1876 = vmul.f32 %v941, %v941
            %v1877 = vmul.f32 %v942, %v942
            %v1878 = vmul.f32 %v943, %v943
            %v1879 = vmul.f32 %v944, %v944
            %v1880 = vmul.f32 %v945, %v945
            %v1881 = vmul.f32 %v946, %v946
            %v1882 = vmul.f32 %v947, %v947
            %v1883 = vmul.f32 %v948, %v948
            %v1884 = vmul.f32 %v949, %v949
            %v1885 = vmul.f32 %v950, %v950
            %v1886 = vmul.f32 %v951, %v951
            %v1887 = vmul.f32 %v952, %v952
            %v1888 = vmul.f32 %v953, %v953
            %v1889 = vmul.f32 %v954, %v954
            %v1890 = vmul.f32 %v955, %v955
            %v1891 = vmul.f32 %v956, %v956
            %v1892 = vmul.f32 %v957, %v957
            %v1893 = vmul.f32 %v958, %v958
            %v1894 = vmul.f32 %v959, %v959
            %v1895 = vmul.f32 %v960, %v960
            %v1896 = vmul.f32 %v961, %v961
            %v1897 = vmul.f32 %v962, %v962
            %v1898 = vmul.f32 %v963, %v963
            %v1899 = vmul.f32 %v964, %v964
            %v1900 = vmul.f32 %v965, %v965
            %v1901 = vmul.f32 %v966, %v966
            %v1902 = vmul.f32 %v967, %v967
            %v1903 = vmul.f32 %v968, %v968
            %v1904 = vmul.f32 %v969, %v969
            %v1905 = vmul.f32 %v970, %v970
            %v1906 = vmul.f32 %v971, %v971
            %v1907 = vmul.f32 %v972, %v972
            %v1908 = vmul.f32 %v973, %v973
            %v1909 = vmul.f32 %v974, %v974
            %v1910 = vmul.f32 %v975, %v975
            %v1911 = vmul.f32 %v976, %v976
            %v1912 = vmul.f32 %v977, %v977
            %v1913 = vmul.f32 %v978, %v978
            %v1914 = vmul.f32 %v979, %v979
            %v1915 = vmul.f32 %v980, %v980
            %v1916 = vmul.f32 %v981, %v981
            %v1917 = vmul.f32 %v982, %v982
            %v1918 = vmul.f32 %v983, %v983
            %v1919 = vmul.f32 %v984, %v984
            %v1920 = vmul.f32 %v985, %v985
            %v1921 = vmul.f32 %v986, %v986
            %v1922 = vmul.f32 %v987, %v987
            %v1923 = vmul.f32 %v988, %v988
            %v1924 = vmul.f32 %v989, %v989
            %v1925 = vmul.f32 %v990, %v990
            %v1926 = vmul.f32 %v991, %v991
            %v1927 = vmul.f32 %v992, %v992
            %v1928 = vsel %vm1726, %v1864, 0.0
            %v1929 = vsel %vm1726, %v1865, 0.0
            %v1930 = vadd.f32 %v1928, %v1929
            %v1931 = vsel %vm1726, %v1866, 0.0
            %v1932 = vadd.f32 %v1930, %v1931
            %v1933 = vsel %vm1726, %v1867, 0.0
            %v1934 = vadd.f32 %v1932, %v1933
            %v1935 = vsel %vm1726, %v1868, 0.0
            %v1936 = vadd.f32 %v1934, %v1935
            %v1937 = vsel %vm1726, %v1869, 0.0
            %v1938 = vadd.f32 %v1936, %v1937
            %v1939 = vsel %vm1726, %v1870, 0.0
            %v1940 = vadd.f32 %v1938, %v1939
            %v1941 = vsel %vm1726, %v1871, 0.0
            %v1942 = vadd.f32 %v1940, %v1941
            %v1943 = vsel %vm1726, %v1872, 0.0
            %v1944 = vadd.f32 %v1942, %v1943
            %v1945 = vsel %vm1726, %v1873, 0.0
            %v1946 = vadd.f32 %v1944, %v1945
            %v1947 = vsel %vm1726, %v1874, 0.0
            %v1948 = vadd.f32 %v1946, %v1947
            %v1949 = vsel %vm1726, %v1875, 0.0
            %v1950 = vadd.f32 %v1948, %v1949
            %v1951 = vsel %vm1726, %v1876, 0.0
            %v1952 = vadd.f32 %v1950, %v1951
            %v1953 = vsel %vm1726, %v1877, 0.0
            %v1954 = vadd.f32 %v1952, %v1953
            %v1955 = vsel %vm1726, %v1878, 0.0
            %v1956 = vadd.f32 %v1954, %v1955
            %v1957 = vsel %vm1726, %v1879, 0.0
            %v1958 = vadd.f32 %v1956, %v1957
            %v1959 = vsel %vm1726, %v1880, 0.0
            %v1960 = vadd.f32 %v1958, %v1959
            %v1961 = vsel %vm1726, %v1881, 0.0
            %v1962 = vadd.f32 %v1960, %v1961
            %v1963 = vsel %vm1726, %v1882, 0.0
            %v1964 = vadd.f32 %v1962, %v1963
            %v1965 = vsel %vm1726, %v1883, 0.0
            %v1966 = vadd.f32 %v1964, %v1965
            %v1967 = vsel %vm1726, %v1884, 0.0
            %v1968 = vadd.f32 %v1966, %v1967
            %v1969 = vsel %vm1726, %v1885, 0.0
            %v1970 = vadd.f32 %v1968, %v1969
            %v1971 = vsel %vm1726, %v1886, 0.0
            %v1972 = vadd.f32 %v1970, %v1971
            %v1973 = vsel %vm1726, %v1887, 0.0
            %v1974 = vadd.f32 %v1972, %v1973
            %v1975 = vsel %vm1726, %v1888, 0.0
            %v1976 = vadd.f32 %v1974, %v1975
            %v1977 = vsel %vm1726, %v1889, 0.0
            %v1978 = vadd.f32 %v1976, %v1977
            %v1979 = vsel %vm1726, %v1890, 0.0
            %v1980 = vadd.f32 %v1978, %v1979
            %v1981 = vsel %vm1726, %v1891, 0.0
            %v1982 = vadd.f32 %v1980, %v1981
            %v1983 = vsel %vm1726, %v1892, 0.0
            %v1984 = vadd.f32 %v1982, %v1983
            %v1985 = vsel %vm1726, %v1893, 0.0
            %v1986 = vadd.f32 %v1984, %v1985
            %v1987 = vsel %vm1726, %v1894, 0.0
            %v1988 = vadd.f32 %v1986, %v1987
            %v1989 = vsel %vm1726, %v1895, 0.0
            %v1990 = vadd.f32 %v1988, %v1989
            %v1991 = vsel %vm1726, %v1896, 0.0
            %v1992 = vadd.f32 %v1990, %v1991
            %v1993 = vsel %vm1726, %v1897, 0.0
            %v1994 = vadd.f32 %v1992, %v1993
            %v1995 = vsel %vm1726, %v1898, 0.0
            %v1996 = vadd.f32 %v1994, %v1995
            %v1997 = vsel %vm1726, %v1899, 0.0
            %v1998 = vadd.f32 %v1996, %v1997
            %v1999 = vsel %vm1726, %v1900, 0.0
            %v2000 = vadd.f32 %v1998, %v1999
            %v2001 = vsel %vm1726, %v1901, 0.0
            %v2002 = vadd.f32 %v2000, %v2001
            %v2003 = vsel %vm1726, %v1902, 0.0
            %v2004 = vadd.f32 %v2002, %v2003
            %v2005 = vsel %vm1726, %v1903, 0.0
            %v2006 = vadd.f32 %v2004, %v2005
            %v2007 = vsel %vm1726, %v1904, 0.0
            %v2008 = vadd.f32 %v2006, %v2007
            %v2009 = vsel %vm1726, %v1905, 0.0
            %v2010 = vadd.f32 %v2008, %v2009
            %v2011 = vsel %vm1726, %v1906, 0.0
            %v2012 = vadd.f32 %v2010, %v2011
            %v2013 = vsel %vm1726, %v1907, 0.0
            %v2014 = vadd.f32 %v2012, %v2013
            %v2015 = vsel %vm1726, %v1908, 0.0
            %v2016 = vadd.f32 %v2014, %v2015
            %v2017 = vsel %vm1726, %v1909, 0.0
            %v2018 = vadd.f32 %v2016, %v2017
            %v2019 = vsel %vm1726, %v1910, 0.0
            %v2020 = vadd.f32 %v2018, %v2019
            %v2021 = vsel %vm1726, %v1911, 0.0
            %v2022 = vadd.f32 %v2020, %v2021
            %v2023 = vsel %vm1726, %v1912, 0.0
            %v2024 = vadd.f32 %v2022, %v2023
            %v2025 = vsel %vm1726, %v1913, 0.0
            %v2026 = vadd.f32 %v2024, %v2025
            %v2027 = vsel %vm1726, %v1914, 0.0
            %v2028 = vadd.f32 %v2026, %v2027
            %v2029 = vsel %vm1726, %v1915, 0.0
            %v2030 = vadd.f32 %v2028, %v2029
            %v2031 = vsel %vm1726, %v1916, 0.0
            %v2032 = vadd.f32 %v2030, %v2031
            %v2033 = vsel %vm1726, %v1917, 0.0
            %v2034 = vadd.f32 %v2032, %v2033
            %v2035 = vsel %vm1726, %v1918, 0.0
            %v2036 = vadd.f32 %v2034, %v2035
            %v2037 = vsel %vm1726, %v1919, 0.0
            %v2038 = vadd.f32 %v2036, %v2037
            %v2039 = vsel %vm1726, %v1920, 0.0
            %v2040 = vadd.f32 %v2038, %v2039
            %v2041 = vsel %vm1726, %v1921, 0.0
            %v2042 = vadd.f32 %v2040, %v2041
            %v2043 = vsel %vm1726, %v1922, 0.0
            %v2044 = vadd.f32 %v2042, %v2043
            %v2045 = vsel %vm1726, %v1923, 0.0
            %v2046 = vadd.f32 %v2044, %v2045
            %v2047 = vsel %vm1726, %v1924, 0.0
            %v2048 = vadd.f32 %v2046, %v2047
            %v2049 = vsel %vm1726, %v1925, 0.0
            %v2050 = vadd.f32 %v2048, %v2049
            %v2051 = vsel %vm1726, %v1926, 0.0
            %v2052 = vadd.f32 %v2050, %v2051
            %v2053 = vsel %vm1726, %v1927, 0.0
            %v2054 = vadd.f32 %v2052, %v2053
            %v2055 = vrot.slane %v2054, 4
            %v2056 = vadd.f32 %v2054, %v2055
            %v2057 = vrot.slane %v2056, 2
            %v2058 = vadd.f32 %v2056, %v2057
            %v2059 = vrot.slane %v2058, 1
            %v2060 = vadd.f32 %v2058, %v2059
            %v2061 = vadd.f32 %v1863, %v2060
            %2062 = vst.msk [vmem:[#allocation2 + $0x1] sm:$0x1] %vm1861, %v2061
            %s2063 = smul.u32 %s23, 512
            %s2064 = scalar_lea.vmem [#allocation4], %s2063
            %2065 = vst.msk [vmem:[%s2064] sm:$0xff] %vm1726, %v929
            %2066 = vst.msk [vmem:[%s2064 + $0x8] sm:$0xff] %vm1726, %v930
            %2067 = vst.msk [vmem:[%s2064 + $0x10] sm:$0xff] %vm1726, %v931
            %2068 = vst.msk [vmem:[%s2064 + $0x18] sm:$0xff] %vm1726, %v932
            %2069 = vst.msk [vmem:[%s2064 + $0x20] sm:$0xff] %vm1726, %v933
            %2070 = vst.msk [vmem:[%s2064 + $0x28] sm:$0xff] %vm1726, %v934
            %2071 = vst.msk [vmem:[%s2064 + $0x30] sm:$0xff] %vm1726, %v935
            %2072 = vst.msk [vmem:[%s2064 + $0x38] sm:$0xff] %vm1726, %v936
            %2073 = vst.msk [vmem:[%s2064 + $0x40] sm:$0xff] %vm1726, %v937
            %2074 = vst.msk [vmem:[%s2064 + $0x48] sm:$0xff] %vm1726, %v938
            %2075 = vst.msk [vmem:[%s2064 + $0x50] sm:$0xff] %vm1726, %v939
            %2076 = vst.msk [vmem:[%s2064 + $0x58] sm:$0xff] %vm1726, %v940
            %2077 = vst.msk [vmem:[%s2064 + $0x60] sm:$0xff] %vm1726, %v941
            %2078 = vst.msk [vmem:[%s2064 + $0x68] sm:$0xff] %vm1726, %v942
            %2079 = vst.msk [vmem:[%s2064 + $0x70] sm:$0xff] %vm1726, %v943
            %2080 = vst.msk [vmem:[%s2064 + $0x78] sm:$0xff] %vm1726, %v944
            %2081 = vst.msk [vmem:[%s2064 + $0x80] sm:$0xff] %vm1726, %v945
            %2082 = vst.msk [vmem:[%s2064 + $0x88] sm:$0xff] %vm1726, %v946
            %2083 = vst.msk [vmem:[%s2064 + $0x90] sm:$0xff] %vm1726, %v947
            %2084 = vst.msk [vmem:[%s2064 + $0x98] sm:$0xff] %vm1726, %v948
            %2085 = vst.msk [vmem:[%s2064 + $0xa0] sm:$0xff] %vm1726, %v949
            %2086 = vst.msk [vmem:[%s2064 + $0xa8] sm:$0xff] %vm1726, %v950
            %2087 = vst.msk [vmem:[%s2064 + $0xb0] sm:$0xff] %vm1726, %v951
            %2088 = vst.msk [vmem:[%s2064 + $0xb8] sm:$0xff] %vm1726, %v952
            %2089 = vst.msk [vmem:[%s2064 + $0xc0] sm:$0xff] %vm1726, %v953
            %2090 = vst.msk [vmem:[%s2064 + $0xc8] sm:$0xff] %vm1726, %v954
            %2091 = vst.msk [vmem:[%s2064 + $0xd0] sm:$0xff] %vm1726, %v955
            %2092 = vst.msk [vmem:[%s2064 + $0xd8] sm:$0xff] %vm1726, %v956
            %2093 = vst.msk [vmem:[%s2064 + $0xe0] sm:$0xff] %vm1726, %v957
            %2094 = vst.msk [vmem:[%s2064 + $0xe8] sm:$0xff] %vm1726, %v958
            %2095 = vst.msk [vmem:[%s2064 + $0xf0] sm:$0xff] %vm1726, %v959
            %2096 = vst.msk [vmem:[%s2064 + $0xf8] sm:$0xff] %vm1726, %v960
            %2097 = vst.msk [vmem:[%s2064 + $0x100] sm:$0xff] %vm1726, %v961
            %2098 = vst.msk [vmem:[%s2064 + $0x108] sm:$0xff] %vm1726, %v962
            %2099 = vst.msk [vmem:[%s2064 + $0x110] sm:$0xff] %vm1726, %v963
            %2100 = vst.msk [vmem:[%s2064 + $0x118] sm:$0xff] %vm1726, %v964
            %2101 = vst.msk [vmem:[%s2064 + $0x120] sm:$0xff] %vm1726, %v965
            %2102 = vst.msk [vmem:[%s2064 + $0x128] sm:$0xff] %vm1726, %v966
            %2103 = vst.msk [vmem:[%s2064 + $0x130] sm:$0xff] %vm1726, %v967
            %2104 = vst.msk [vmem:[%s2064 + $0x138] sm:$0xff] %vm1726, %v968
            %2105 = vst.msk [vmem:[%s2064 + $0x140] sm:$0xff] %vm1726, %v969
            %2106 = vst.msk [vmem:[%s2064 + $0x148] sm:$0xff] %vm1726, %v970
            %2107 = vst.msk [vmem:[%s2064 + $0x150] sm:$0xff] %vm1726, %v971
            %2108 = vst.msk [vmem:[%s2064 + $0x158] sm:$0xff] %vm1726, %v972
            %2109 = vst.msk [vmem:[%s2064 + $0x160] sm:$0xff] %vm1726, %v973
            %2110 = vst.msk [vmem:[%s2064 + $0x168] sm:$0xff] %vm1726, %v974
            %2111 = vst.msk [vmem:[%s2064 + $0x170] sm:$0xff] %vm1726, %v975
            %2112 = vst.msk [vmem:[%s2064 + $0x178] sm:$0xff] %vm1726, %v976
            %2113 = vst.msk [vmem:[%s2064 + $0x180] sm:$0xff] %vm1726, %v977
            %2114 = vst.msk [vmem:[%s2064 + $0x188] sm:$0xff] %vm1726, %v978
            %2115 = vst.msk [vmem:[%s2064 + $0x190] sm:$0xff] %vm1726, %v979
            %2116 = vst.msk [vmem:[%s2064 + $0x198] sm:$0xff] %vm1726, %v980
            %2117 = vst.msk [vmem:[%s2064 + $0x1a0] sm:$0xff] %vm1726, %v981
            %2118 = vst.msk [vmem:[%s2064 + $0x1a8] sm:$0xff] %vm1726, %v982
            %2119 = vst.msk [vmem:[%s2064 + $0x1b0] sm:$0xff] %vm1726, %v983
            %2120 = vst.msk [vmem:[%s2064 + $0x1b8] sm:$0xff] %vm1726, %v984
            %2121 = vst.msk [vmem:[%s2064 + $0x1c0] sm:$0xff] %vm1726, %v985
            %2122 = vst.msk [vmem:[%s2064 + $0x1c8] sm:$0xff] %vm1726, %v986
            %2123 = vst.msk [vmem:[%s2064 + $0x1d0] sm:$0xff] %vm1726, %v987
            %2124 = vst.msk [vmem:[%s2064 + $0x1d8] sm:$0xff] %vm1726, %v988
            %2125 = vst.msk [vmem:[%s2064 + $0x1e0] sm:$0xff] %vm1726, %v989
            %2126 = vst.msk [vmem:[%s2064 + $0x1e8] sm:$0xff] %vm1726, %v990
            %2127 = vst.msk [vmem:[%s2064 + $0x1f0] sm:$0xff] %vm1726, %v991
            %2128 = vst.msk [vmem:[%s2064 + $0x1f8] sm:$0xff] %vm1726, %v992
          $region64: #{tpu_custom_call.1} parent=51 // pred_fallthru
            _
        $region52: #{tpu_custom_call.1} parent=47 // pred_fallthru
          _
        %p2129 = scmp.eq.s32.totalorder %s22, 1
        // Predicated region
        $region65: #{tpu_custom_call.1} parent=47 // pred_check
          %p2130 = pneg %p2129
        $region66: #{tpu_custom_call.1} parent=47 // pred_check_branch
          %2132 = sbr.rel (%p2130) target = $region68
        $region67: #{tpu_custom_call.1} parent=47 // pred_region
          %p2133 = scmp.eq.s32.totalorder %s23, 0
          // Predicated region
          $region69: #{tpu_custom_call.1} parent=67 // pred_check
            %p2134 = pneg %p2133
          $region70: #{tpu_custom_call.1} parent=67 // pred_check_branch
            %2136 = sbr.rel (%p2134) target = $region72
          $region71: #{tpu_custom_call.1} parent=67 // pred_region
            %v2137 = vld [vmem:[#allocation2] sm:$0x1]
            %v2138 = vmul.f32 %v2137, 0.0025
            %v2139 = vld [vmem:[#allocation2 + $0x1] sm:$0x1]
            %v2140 = vmul.f32 %v2139, 0.0025
            %v2141 = vmul.f32 %v2138, %v2138
            %v2142 = vsub.f32 %v2140, %v2141
            %v2143 = vmax.f32 %v2142, 0.0
            %v2144 = vld [vmem:[%s3] sm:$0x1]
            %v2145 = vadd.f32 %v2143, 1e-05
            %v2146 = vrsqrt.pop %v2145
            %v2147 = vmul.f32 %v2146, %v2145
            %v2148 = vmul.f32 %v2147, %v2146
            %v2149 = vmul.f32 0.5, %v2148
            %v2150 = vsub.f32 1.5, %v2149
            %v2151 = vmul.f32 %v2146, %v2150
            %vm2152 = vweird.f32 %v2145
            %vm2153 = vweird.f32 %v2146
            %vm2154 = vmor %vm2152, %vm2153
            %v2155 = vsel %vm2154, %v2146, %v2151
            %v2156 = vmul.f32 %v2144, %v2155
            %vm2157 = vcmask 516096
            %2158 = vst.msk [vmem:[#allocation3] sm:$0x1] %vm2157, %v2156
            %v2159 = vld [vmem:[%s4] sm:$0x1]
            %v2160 = vmul.f32 %v2138, %v2156
            %v2161 = vsub.f32 %v2159, %v2160
            %2162 = vst.msk [vmem:[#allocation3 + $0x1] sm:$0x1] %vm2157, %v2161
          $region72: #{tpu_custom_call.1} parent=67 // pred_fallthru
            _
          %s2163 = smul.u32 %s23, 512
          %s2164 = scalar_lea.vmem [#allocation4], %s2163
          %v2165 = vld [vmem:[%s2164] sm:$0xff]
          %v2166 = vld [vmem:[%s2164 + $0x8] sm:$0xff]
          %v2167 = vld [vmem:[%s2164 + $0x10] sm:$0xff]
          %v2168 = vld [vmem:[%s2164 + $0x18] sm:$0xff]
          %v2169 = vld [vmem:[%s2164 + $0x20] sm:$0xff]
          %v2170 = vld [vmem:[%s2164 + $0x28] sm:$0xff]
          %v2171 = vld [vmem:[%s2164 + $0x30] sm:$0xff]
          %v2172 = vld [vmem:[%s2164 + $0x38] sm:$0xff]
          %v2173 = vld [vmem:[%s2164 + $0x40] sm:$0xff]
          %v2174 = vld [vmem:[%s2164 + $0x48] sm:$0xff]
          %v2175 = vld [vmem:[%s2164 + $0x50] sm:$0xff]
          %v2176 = vld [vmem:[%s2164 + $0x58] sm:$0xff]
          %v2177 = vld [vmem:[%s2164 + $0x60] sm:$0xff]
          %v2178 = vld [vmem:[%s2164 + $0x68] sm:$0xff]
          %v2179 = vld [vmem:[%s2164 + $0x70] sm:$0xff]
          %v2180 = vld [vmem:[%s2164 + $0x78] sm:$0xff]
          %v2181 = vld [vmem:[%s2164 + $0x80] sm:$0xff]
          %v2182 = vld [vmem:[%s2164 + $0x88] sm:$0xff]
          %v2183 = vld [vmem:[%s2164 + $0x90] sm:$0xff]
          %v2184 = vld [vmem:[%s2164 + $0x98] sm:$0xff]
          %v2185 = vld [vmem:[%s2164 + $0xa0] sm:$0xff]
          %v2186 = vld [vmem:[%s2164 + $0xa8] sm:$0xff]
          %v2187 = vld [vmem:[%s2164 + $0xb0] sm:$0xff]
          %v2188 = vld [vmem:[%s2164 + $0xb8] sm:$0xff]
          %v2189 = vld [vmem:[%s2164 + $0xc0] sm:$0xff]
          %v2190 = vld [vmem:[%s2164 + $0xc8] sm:$0xff]
          %v2191 = vld [vmem:[%s2164 + $0xd0] sm:$0xff]
          %v2192 = vld [vmem:[%s2164 + $0xd8] sm:$0xff]
          %v2193 = vld [vmem:[%s2164 + $0xe0] sm:$0xff]
          %v2194 = vld [vmem:[%s2164 + $0xe8] sm:$0xff]
          %v2195 = vld [vmem:[%s2164 + $0xf0] sm:$0xff]
          %v2196 = vld [vmem:[%s2164 + $0xf8] sm:$0xff]
          %v2197 = vld [vmem:[%s2164 + $0x100] sm:$0xff]
          %v2198 = vld [vmem:[%s2164 + $0x108] sm:$0xff]
          %v2199 = vld [vmem:[%s2164 + $0x110] sm:$0xff]
          %v2200 = vld [vmem:[%s2164 + $0x118] sm:$0xff]
          %v2201 = vld [vmem:[%s2164 + $0x120] sm:$0xff]
          %v2202 = vld [vmem:[%s2164 + $0x128] sm:$0xff]
          %v2203 = vld [vmem:[%s2164 + $0x130] sm:$0xff]
          %v2204 = vld [vmem:[%s2164 + $0x138] sm:$0xff]
          %v2205 = vld [vmem:[%s2164 + $0x140] sm:$0xff]
          %v2206 = vld [vmem:[%s2164 + $0x148] sm:$0xff]
          %v2207 = vld [vmem:[%s2164 + $0x150] sm:$0xff]
          %v2208 = vld [vmem:[%s2164 + $0x158] sm:$0xff]
          %v2209 = vld [vmem:[%s2164 + $0x160] sm:$0xff]
          %v2210 = vld [vmem:[%s2164 + $0x168] sm:$0xff]
          %v2211 = vld [vmem:[%s2164 + $0x170] sm:$0xff]
          %v2212 = vld [vmem:[%s2164 + $0x178] sm:$0xff]
          %v2213 = vld [vmem:[%s2164 + $0x180] sm:$0xff]
          %v2214 = vld [vmem:[%s2164 + $0x188] sm:$0xff]
          %v2215 = vld [vmem:[%s2164 + $0x190] sm:$0xff]
          %v2216 = vld [vmem:[%s2164 + $0x198] sm:$0xff]
          %v2217 = vld [vmem:[%s2164 + $0x1a0] sm:$0xff]
          %v2218 = vld [vmem:[%s2164 + $0x1a8] sm:$0xff]
          %v2219 = vld [vmem:[%s2164 + $0x1b0] sm:$0xff]
          %v2220 = vld [vmem:[%s2164 + $0x1b8] sm:$0xff]
          %v2221 = vld [vmem:[%s2164 + $0x1c0] sm:$0xff]
          %v2222 = vld [vmem:[%s2164 + $0x1c8] sm:$0xff]
          %v2223 = vld [vmem:[%s2164 + $0x1d0] sm:$0xff]
          %v2224 = vld [vmem:[%s2164 + $0x1d8] sm:$0xff]
          %v2225 = vld [vmem:[%s2164 + $0x1e0] sm:$0xff]
          %v2226 = vld [vmem:[%s2164 + $0x1e8] sm:$0xff]
          %v2227 = vld [vmem:[%s2164 + $0x1f0] sm:$0xff]
          %v2228 = vld [vmem:[%s2164 + $0x1f8] sm:$0xff]
          %v2229 = vld [vmem:[#allocation3] sm:$0x1]
          %v2230 = vperm.slane %v2229, 0
          %v2231 = vmul.f32 %v2165, %v2230
          %v2232 = vmul.f32 %v2166, %v2230
          %v2233 = vmul.f32 %v2167, %v2230
          %v2234 = vmul.f32 %v2168, %v2230
          %v2235 = vmul.f32 %v2169, %v2230
          %v2236 = vmul.f32 %v2170, %v2230
          %v2237 = vmul.f32 %v2171, %v2230
          %v2238 = vmul.f32 %v2172, %v2230
          %v2239 = vmul.f32 %v2173, %v2230
          %v2240 = vmul.f32 %v2174, %v2230
          %v2241 = vmul.f32 %v2175, %v2230
          %v2242 = vmul.f32 %v2176, %v2230
          %v2243 = vmul.f32 %v2177, %v2230
          %v2244 = vmul.f32 %v2178, %v2230
          %v2245 = vmul.f32 %v2179, %v2230
          %v2246 = vmul.f32 %v2180, %v2230
          %v2247 = vmul.f32 %v2181, %v2230
          %v2248 = vmul.f32 %v2182, %v2230
          %v2249 = vmul.f32 %v2183, %v2230
          %v2250 = vmul.f32 %v2184, %v2230
          %v2251 = vmul.f32 %v2185, %v2230
          %v2252 = vmul.f32 %v2186, %v2230
          %v2253 = vmul.f32 %v2187, %v2230
          %v2254 = vmul.f32 %v2188, %v2230
          %v2255 = vmul.f32 %v2189, %v2230
          %v2256 = vmul.f32 %v2190, %v2230
          %v2257 = vmul.f32 %v2191, %v2230
          %v2258 = vmul.f32 %v2192, %v2230
          %v2259 = vmul.f32 %v2193, %v2230
          %v2260 = vmul.f32 %v2194, %v2230
          %v2261 = vmul.f32 %v2195, %v2230
          %v2262 = vmul.f32 %v2196, %v2230
          %v2263 = vmul.f32 %v2197, %v2230
          %v2264 = vmul.f32 %v2198, %v2230
          %v2265 = vmul.f32 %v2199, %v2230
          %v2266 = vmul.f32 %v2200, %v2230
          %v2267 = vmul.f32 %v2201, %v2230
          %v2268 = vmul.f32 %v2202, %v2230
          %v2269 = vmul.f32 %v2203, %v2230
          %v2270 = vmul.f32 %v2204, %v2230
          %v2271 = vmul.f32 %v2205, %v2230
          %v2272 = vmul.f32 %v2206, %v2230
          %v2273 = vmul.f32 %v2207, %v2230
          %v2274 = vmul.f32 %v2208, %v2230
          %v2275 = vmul.f32 %v2209, %v2230
          %v2276 = vmul.f32 %v2210, %v2230
          %v2277 = vmul.f32 %v2211, %v2230
          %v2278 = vmul.f32 %v2212, %v2230
          %v2279 = vmul.f32 %v2213, %v2230
          %v2280 = vmul.f32 %v2214, %v2230
          %v2281 = vmul.f32 %v2215, %v2230
          %v2282 = vmul.f32 %v2216, %v2230
          %v2283 = vmul.f32 %v2217, %v2230
          %v2284 = vmul.f32 %v2218, %v2230
          %v2285 = vmul.f32 %v2219, %v2230
          %v2286 = vmul.f32 %v2220, %v2230
          %v2287 = vmul.f32 %v2221, %v2230
          %v2288 = vmul.f32 %v2222, %v2230
          %v2289 = vmul.f32 %v2223, %v2230
          %v2290 = vmul.f32 %v2224, %v2230
          %v2291 = vmul.f32 %v2225, %v2230
          %v2292 = vmul.f32 %v2226, %v2230
          %v2293 = vmul.f32 %v2227, %v2230
          %v2294 = vmul.f32 %v2228, %v2230
          %v2295 = vld [vmem:[#allocation3 + $0x1] sm:$0x1]
          %v2296 = vperm.slane %v2295, 0
          %v2297 = vadd.f32 %v2231, %v2296
          %v2298 = vadd.f32 %v2232, %v2296
          %v2299 = vadd.f32 %v2233, %v2296
          %v2300 = vadd.f32 %v2234, %v2296
          %v2301 = vadd.f32 %v2235, %v2296
          %v2302 = vadd.f32 %v2236, %v2296
          %v2303 = vadd.f32 %v2237, %v2296
          %v2304 = vadd.f32 %v2238, %v2296
          %v2305 = vadd.f32 %v2239, %v2296
          %v2306 = vadd.f32 %v2240, %v2296
          %v2307 = vadd.f32 %v2241, %v2296
          %v2308 = vadd.f32 %v2242, %v2296
          %v2309 = vadd.f32 %v2243, %v2296
          %v2310 = vadd.f32 %v2244, %v2296
          %v2311 = vadd.f32 %v2245, %v2296
          %v2312 = vadd.f32 %v2246, %v2296
          %v2313 = vadd.f32 %v2247, %v2296
          %v2314 = vadd.f32 %v2248, %v2296
          %v2315 = vadd.f32 %v2249, %v2296
          %v2316 = vadd.f32 %v2250, %v2296
          %v2317 = vadd.f32 %v2251, %v2296
          %v2318 = vadd.f32 %v2252, %v2296
          %v2319 = vadd.f32 %v2253, %v2296
          %v2320 = vadd.f32 %v2254, %v2296
          %v2321 = vadd.f32 %v2255, %v2296
          %v2322 = vadd.f32 %v2256, %v2296
          %v2323 = vadd.f32 %v2257, %v2296
          %v2324 = vadd.f32 %v2258, %v2296
          %v2325 = vadd.f32 %v2259, %v2296
          %v2326 = vadd.f32 %v2260, %v2296
          %v2327 = vadd.f32 %v2261, %v2296
          %v2328 = vadd.f32 %v2262, %v2296
          %v2329 = vadd.f32 %v2263, %v2296
          %v2330 = vadd.f32 %v2264, %v2296
          %v2331 = vadd.f32 %v2265, %v2296
          %v2332 = vadd.f32 %v2266, %v2296
          %v2333 = vadd.f32 %v2267, %v2296
          %v2334 = vadd.f32 %v2268, %v2296
          %v2335 = vadd.f32 %v2269, %v2296
          %v2336 = vadd.f32 %v2270, %v2296
          %v2337 = vadd.f32 %v2271, %v2296
          %v2338 = vadd.f32 %v2272, %v2296
          %v2339 = vadd.f32 %v2273, %v2296
          %v2340 = vadd.f32 %v2274, %v2296
          %v2341 = vadd.f32 %v2275, %v2296
          %v2342 = vadd.f32 %v2276, %v2296
          %v2343 = vadd.f32 %v2277, %v2296
          %v2344 = vadd.f32 %v2278, %v2296
          %v2345 = vadd.f32 %v2279, %v2296
          %v2346 = vadd.f32 %v2280, %v2296
          %v2347 = vadd.f32 %v2281, %v2296
          %v2348 = vadd.f32 %v2282, %v2296
          %v2349 = vadd.f32 %v2283, %v2296
          %v2350 = vadd.f32 %v2284, %v2296
          %v2351 = vadd.f32 %v2285, %v2296
          %v2352 = vadd.f32 %v2286, %v2296
          %v2353 = vadd.f32 %v2287, %v2296
          %v2354 = vadd.f32 %v2288, %v2296
          %v2355 = vadd.f32 %v2289, %v2296
          %v2356 = vadd.f32 %v2290, %v2296
          %v2357 = vadd.f32 %v2291, %v2296
          %v2358 = vadd.f32 %v2292, %v2296
          %v2359 = vadd.f32 %v2293, %v2296
          %v2360 = vadd.f32 %v2294, %v2296
          %v2361 = vld [vmem:[%s5] sm:$0xff]
          %v2362 = vld [vmem:[%s5 + $0x8] sm:$0xff]
          %v2363 = vld [vmem:[%s5 + $0x10] sm:$0xff]
          %v2364 = vld [vmem:[%s5 + $0x18] sm:$0xff]
          %v2365 = vld [vmem:[%s5 + $0x20] sm:$0xff]
          %v2366 = vld [vmem:[%s5 + $0x28] sm:$0xff]
          %v2367 = vld [vmem:[%s5 + $0x30] sm:$0xff]
          %v2368 = vld [vmem:[%s5 + $0x38] sm:$0xff]
          %v2369 = vld [vmem:[%s6] sm:$0x1]
          %v2371 = vperm.slane %v2369, 0
          %vm2373 = vcmask 523264
          %v2375 = vsel %vm2373, %v2297, 0
          %v2378 = vsel %vm2373, %v2298, 0
          %v2381 = vsel %vm2373, %v2299, 0
          %v2384 = vsel %vm2373, %v2300, 0
          %v2387 = vsel %vm2373, %v2301, 0
          %v2390 = vsel %vm2373, %v2302, 0
          %v2393 = vsel %vm2373, %v2303, 0
          %v2396 = vsel %vm2373, %v2304, 0
          %v2399 = vsel %vm2373, %v2305, 0
          %v2402 = vsel %vm2373, %v2306, 0
          %v2405 = vsel %vm2373, %v2307, 0
          %v2408 = vsel %vm2373, %v2308, 0
          %v2411 = vsel %vm2373, %v2309, 0
          %v2414 = vsel %vm2373, %v2310, 0
          %v2417 = vsel %vm2373, %v2311, 0
          %v2420 = vsel %vm2373, %v2312, 0
          %v2423 = vsel %vm2373, %v2313, 0
          %v2426 = vsel %vm2373, %v2314, 0
          %v2429 = vsel %vm2373, %v2315, 0
          %v2432 = vsel %vm2373, %v2316, 0
          %v2435 = vsel %vm2373, %v2317, 0
          %v2438 = vsel %vm2373, %v2318, 0
          %v2441 = vsel %vm2373, %v2319, 0
          %v2444 = vsel %vm2373, %v2320, 0
          %v2447 = vsel %vm2373, %v2321, 0
          %v2450 = vsel %vm2373, %v2322, 0
          %v2453 = vsel %vm2373, %v2323, 0
          %v2456 = vsel %vm2373, %v2324, 0
          %v2459 = vsel %vm2373, %v2325, 0
          %v2462 = vsel %vm2373, %v2326, 0
          %v2465 = vsel %vm2373, %v2327, 0
          %v2468 = vsel %vm2373, %v2328, 0
          %v2471 = vsel %vm2373, %v2329, 0
          %v2474 = vsel %vm2373, %v2330, 0
          %v2477 = vsel %vm2373, %v2331, 0
          %v2480 = vsel %vm2373, %v2332, 0
          %v2483 = vsel %vm2373, %v2333, 0
          %v2486 = vsel %vm2373, %v2334, 0
          %v2489 = vsel %vm2373, %v2335, 0
          %v2492 = vsel %vm2373, %v2336, 0
          %v2495 = vsel %vm2373, %v2337, 0
          %v2498 = vsel %vm2373, %v2338, 0
          %v2501 = vsel %vm2373, %v2339, 0
          %v2504 = vsel %vm2373, %v2340, 0
          %v2507 = vsel %vm2373, %v2341, 0
          %v2510 = vsel %vm2373, %v2342, 0
          %v2513 = vsel %vm2373, %v2343, 0
          %v2516 = vsel %vm2373, %v2344, 0
          %v2519 = vsel %vm2373, %v2345, 0
          %v2522 = vsel %vm2373, %v2346, 0
          %v2525 = vsel %vm2373, %v2347, 0
          %v2528 = vsel %vm2373, %v2348, 0
          %v2531 = vsel %vm2373, %v2349, 0
          %v2534 = vsel %vm2373, %v2350, 0
          %v2537 = vsel %vm2373, %v2351, 0
          %v2540 = vsel %vm2373, %v2352, 0
          %v2543 = vsel %vm2373, %v2353, 0
          %v2546 = vsel %vm2373, %v2354, 0
          %v2549 = vsel %vm2373, %v2355, 0
          %v2552 = vsel %vm2373, %v2356, 0
          %v2555 = vsel %vm2373, %v2357, 0
          %v2558 = vsel %vm2373, %v2358, 0
          %v2561 = vsel %vm2373, %v2359, 0
          %v2564 = vsel %vm2373, %v2360, 0
          %2566 = vmatpush.msra.mxu0 0.0
          %2567 = vmatpush.msra.mxu0 0.0
          %2568 = vmatpush.msra.mxu0 0.0
          %2569 = vmatpush.msra.mxu0 0.0
          %2570 = vmatpush.msra.mxu0 0.0
          %2571 = vmatpush.msra.mxu0 0.0
          %2572 = vmatpush.msra.mxu0 0.0
          %2573 = vmatpush.msra.mxu0 0.0
          %2574 = vmatpush.msra.mxu0 %v2368
          %2575 = vmatpush.msra.mxu0 %v2367
          %2576 = vmatpush.msra.mxu0 %v2366
          %2577 = vmatpush.msra.mxu0 %v2365
          %2578 = vmatpush.msra.mxu0 %v2364
          %2579 = vmatpush.msra.mxu0 %v2363
          %2580 = vmatpush.msra.mxu0 %v2362
          %2581 = vmatpush.msra.mxu0 %v2361
          %2582 = vmatmul.f32.gmra.mxu0 %v2375
          %v2583 = vpop.f32.mrf.mxu0
          %v2584 = vadd.f32 %v2371, %v2583
          %2585 = vmatmul.f32.gmra.mxu0 %v2378
          %v2586 = vpop.f32.mrf.mxu0
          %v2587 = vadd.f32 %v2371, %v2586
          %2588 = vmatmul.f32.gmra.mxu0 %v2381
          %v2589 = vpop.f32.mrf.mxu0
          %v2590 = vadd.f32 %v2371, %v2589
          %2591 = vmatmul.f32.gmra.mxu0 %v2384
          %v2592 = vpop.f32.mrf.mxu0
          %v2593 = vadd.f32 %v2371, %v2592
          %2594 = vmatmul.f32.gmra.mxu0 %v2387
          %v2595 = vpop.f32.mrf.mxu0
          %v2596 = vadd.f32 %v2371, %v2595
          %2597 = vmatmul.f32.gmra.mxu0 %v2390
          %v2598 = vpop.f32.mrf.mxu0
          %v2599 = vadd.f32 %v2371, %v2598
          %2600 = vmatmul.f32.gmra.mxu0 %v2393
          %v2601 = vpop.f32.mrf.mxu0
          %v2602 = vadd.f32 %v2371, %v2601
          %2603 = vmatmul.f32.gmra.mxu0 %v2396
          %v2604 = vpop.f32.mrf.mxu0
          %v2605 = vadd.f32 %v2371, %v2604
          %2606 = vmatmul.f32.gmra.mxu0 %v2399
          %v2607 = vpop.f32.mrf.mxu0
          %v2608 = vadd.f32 %v2371, %v2607
          %2609 = vmatmul.f32.gmra.mxu0 %v2402
          %v2610 = vpop.f32.mrf.mxu0
          %v2611 = vadd.f32 %v2371, %v2610
          %2612 = vmatmul.f32.gmra.mxu0 %v2405
          %v2613 = vpop.f32.mrf.mxu0
          %v2614 = vadd.f32 %v2371, %v2613
          %2615 = vmatmul.f32.gmra.mxu0 %v2408
          %v2616 = vpop.f32.mrf.mxu0
          %v2617 = vadd.f32 %v2371, %v2616
          %2618 = vmatmul.f32.gmra.mxu0 %v2411
          %v2619 = vpop.f32.mrf.mxu0
          %v2620 = vadd.f32 %v2371, %v2619
          %2621 = vmatmul.f32.gmra.mxu0 %v2414
          %v2622 = vpop.f32.mrf.mxu0
          %v2623 = vadd.f32 %v2371, %v2622
          %2624 = vmatmul.f32.gmra.mxu0 %v2417
          %v2625 = vpop.f32.mrf.mxu0
          %v2626 = vadd.f32 %v2371, %v2625
          %2627 = vmatmul.f32.gmra.mxu0 %v2420
          %v2628 = vpop.f32.mrf.mxu0
          %v2629 = vadd.f32 %v2371, %v2628
          %2630 = vmatmul.f32.gmra.mxu0 %v2423
          %v2631 = vpop.f32.mrf.mxu0
          %v2632 = vadd.f32 %v2371, %v2631
          %2633 = vmatmul.f32.gmra.mxu0 %v2426
          %v2634 = vpop.f32.mrf.mxu0
          %v2635 = vadd.f32 %v2371, %v2634
          %2636 = vmatmul.f32.gmra.mxu0 %v2429
          %v2637 = vpop.f32.mrf.mxu0
          %v2638 = vadd.f32 %v2371, %v2637
          %2639 = vmatmul.f32.gmra.mxu0 %v2432
          %v2640 = vpop.f32.mrf.mxu0
          %v2641 = vadd.f32 %v2371, %v2640
          %2642 = vmatmul.f32.gmra.mxu0 %v2435
          %v2643 = vpop.f32.mrf.mxu0
          %v2644 = vadd.f32 %v2371, %v2643
          %2645 = vmatmul.f32.gmra.mxu0 %v2438
          %v2646 = vpop.f32.mrf.mxu0
          %v2647 = vadd.f32 %v2371, %v2646
          %2648 = vmatmul.f32.gmra.mxu0 %v2441
          %v2649 = vpop.f32.mrf.mxu0
          %v2650 = vadd.f32 %v2371, %v2649
          %2651 = vmatmul.f32.gmra.mxu0 %v2444
          %v2652 = vpop.f32.mrf.mxu0
          %v2653 = vadd.f32 %v2371, %v2652
          %2654 = vmatmul.f32.gmra.mxu0 %v2447
          %v2655 = vpop.f32.mrf.mxu0
          %v2656 = vadd.f32 %v2371, %v2655
          %2657 = vmatmul.f32.gmra.mxu0 %v2450
          %v2658 = vpop.f32.mrf.mxu0
          %v2659 = vadd.f32 %v2371, %v2658
          %2660 = vmatmul.f32.gmra.mxu0 %v2453
          %v2661 = vpop.f32.mrf.mxu0
          %v2662 = vadd.f32 %v2371, %v2661
          %2663 = vmatmul.f32.gmra.mxu0 %v2456
          %v2664 = vpop.f32.mrf.mxu0
          %v2665 = vadd.f32 %v2371, %v2664
          %2666 = vmatmul.f32.gmra.mxu0 %v2459
          %v2667 = vpop.f32.mrf.mxu0
          %v2668 = vadd.f32 %v2371, %v2667
          %2669 = vmatmul.f32.gmra.mxu0 %v2462
          %v2670 = vpop.f32.mrf.mxu0
          %v2671 = vadd.f32 %v2371, %v2670
          %2672 = vmatmul.f32.gmra.mxu0 %v2465
          %v2673 = vpop.f32.mrf.mxu0
          %v2674 = vadd.f32 %v2371, %v2673
          %2675 = vmatmul.f32.gmra.mxu0 %v2468
          %v2676 = vpop.f32.mrf.mxu0
          %v2677 = vadd.f32 %v2371, %v2676
          %2678 = vmatmul.f32.gmra.mxu0 %v2471
          %v2679 = vpop.f32.mrf.mxu0
          %v2680 = vadd.f32 %v2371, %v2679
          %2681 = vmatmul.f32.gmra.mxu0 %v2474
          %v2682 = vpop.f32.mrf.mxu0
          %v2683 = vadd.f32 %v2371, %v2682
          %2684 = vmatmul.f32.gmra.mxu0 %v2477
          %v2685 = vpop.f32.mrf.mxu0
          %v2686 = vadd.f32 %v2371, %v2685
          %2687 = vmatmul.f32.gmra.mxu0 %v2480
          %v2688 = vpop.f32.mrf.mxu0
          %v2689 = vadd.f32 %v2371, %v2688
          %2690 = vmatmul.f32.gmra.mxu0 %v2483
          %v2691 = vpop.f32.mrf.mxu0
          %v2692 = vadd.f32 %v2371, %v2691
          %2693 = vmatmul.f32.gmra.mxu0 %v2486
          %v2694 = vpop.f32.mrf.mxu0
          %v2695 = vadd.f32 %v2371, %v2694
          %2696 = vmatmul.f32.gmra.mxu0 %v2489
          %v2697 = vpop.f32.mrf.mxu0
          %v2698 = vadd.f32 %v2371, %v2697
          %2699 = vmatmul.f32.gmra.mxu0 %v2492
          %v2700 = vpop.f32.mrf.mxu0
          %v2701 = vadd.f32 %v2371, %v2700
          %2702 = vmatmul.f32.gmra.mxu0 %v2495
          %v2703 = vpop.f32.mrf.mxu0
          %v2704 = vadd.f32 %v2371, %v2703
          %2705 = vmatmul.f32.gmra.mxu0 %v2498
          %v2706 = vpop.f32.mrf.mxu0
          %v2707 = vadd.f32 %v2371, %v2706
          %2708 = vmatmul.f32.gmra.mxu0 %v2501
          %v2709 = vpop.f32.mrf.mxu0
          %v2710 = vadd.f32 %v2371, %v2709
          %2711 = vmatmul.f32.gmra.mxu0 %v2504
          %v2712 = vpop.f32.mrf.mxu0
          %v2713 = vadd.f32 %v2371, %v2712
          %2714 = vmatmul.f32.gmra.mxu0 %v2507
          %v2715 = vpop.f32.mrf.mxu0
          %v2716 = vadd.f32 %v2371, %v2715
          %2717 = vmatmul.f32.gmra.mxu0 %v2510
          %v2718 = vpop.f32.mrf.mxu0
          %v2719 = vadd.f32 %v2371, %v2718
          %2720 = vmatmul.f32.gmra.mxu0 %v2513
          %v2721 = vpop.f32.mrf.mxu0
          %v2722 = vadd.f32 %v2371, %v2721
          %2723 = vmatmul.f32.gmra.mxu0 %v2516
          %v2724 = vpop.f32.mrf.mxu0
          %v2725 = vadd.f32 %v2371, %v2724
          %2726 = vmatmul.f32.gmra.mxu0 %v2519
          %v2727 = vpop.f32.mrf.mxu0
          %v2728 = vadd.f32 %v2371, %v2727
          %2729 = vmatmul.f32.gmra.mxu0 %v2522
          %v2730 = vpop.f32.mrf.mxu0
          %v2731 = vadd.f32 %v2371, %v2730
          %2732 = vmatmul.f32.gmra.mxu0 %v2525
          %v2733 = vpop.f32.mrf.mxu0
          %v2734 = vadd.f32 %v2371, %v2733
          %2735 = vmatmul.f32.gmra.mxu0 %v2528
          %v2736 = vpop.f32.mrf.mxu0
          %v2737 = vadd.f32 %v2371, %v2736
          %2738 = vmatmul.f32.gmra.mxu0 %v2531
          %v2739 = vpop.f32.mrf.mxu0
          %v2740 = vadd.f32 %v2371, %v2739
          %2741 = vmatmul.f32.gmra.mxu0 %v2534
          %v2742 = vpop.f32.mrf.mxu0
          %v2743 = vadd.f32 %v2371, %v2742
          %2744 = vmatmul.f32.gmra.mxu0 %v2537
          %v2745 = vpop.f32.mrf.mxu0
          %v2746 = vadd.f32 %v2371, %v2745
          %2747 = vmatmul.f32.gmra.mxu0 %v2540
          %v2748 = vpop.f32.mrf.mxu0
          %v2749 = vadd.f32 %v2371, %v2748
          %2750 = vmatmul.f32.gmra.mxu0 %v2543
          %v2751 = vpop.f32.mrf.mxu0
          %v2752 = vadd.f32 %v2371, %v2751
          %2753 = vmatmul.f32.gmra.mxu0 %v2546
          %v2754 = vpop.f32.mrf.mxu0
          %v2755 = vadd.f32 %v2371, %v2754
          %2756 = vmatmul.f32.gmra.mxu0 %v2549
          %v2757 = vpop.f32.mrf.mxu0
          %v2758 = vadd.f32 %v2371, %v2757
          %2759 = vmatmul.f32.gmra.mxu0 %v2552
          %v2760 = vpop.f32.mrf.mxu0
          %v2761 = vadd.f32 %v2371, %v2760
          %2762 = vmatmul.f32.gmra.mxu0 %v2555
          %v2763 = vpop.f32.mrf.mxu0
          %v2764 = vadd.f32 %v2371, %v2763
          %2765 = vmatmul.f32.gmra.mxu0 %v2558
          %v2766 = vpop.f32.mrf.mxu0
          %v2767 = vadd.f32 %v2371, %v2766
          %2768 = vmatmul.f32.gmra.mxu0 %v2561
          %v2769 = vpop.f32.mrf.mxu0
          %v2770 = vadd.f32 %v2371, %v2769
          %2771 = vmatmul.f32.gmra.mxu0 %v2564
          %v2772 = vpop.f32.mrf.mxu0
          %v2773 = vadd.f32 %v2371, %v2772
          %2774 = vdwg.mxu0
          %vm2775 = vcmask 31744
          %2776 = vst.msk [vmem:[%s298] sm:$0xff] %vm2775, %v2584
          %2777 = vst.msk [vmem:[%s298 + $0x8] sm:$0xff] %vm2775, %v2587
          %2778 = vst.msk [vmem:[%s298 + $0x10] sm:$0xff] %vm2775, %v2590
          %2779 = vst.msk [vmem:[%s298 + $0x18] sm:$0xff] %vm2775, %v2593
          %2780 = vst.msk [vmem:[%s298 + $0x20] sm:$0xff] %vm2775, %v2596
          %2781 = vst.msk [vmem:[%s298 + $0x28] sm:$0xff] %vm2775, %v2599
          %2782 = vst.msk [vmem:[%s298 + $0x30] sm:$0xff] %vm2775, %v2602
          %2783 = vst.msk [vmem:[%s298 + $0x38] sm:$0xff] %vm2775, %v2605
          %2784 = vst.msk [vmem:[%s298 + $0x40] sm:$0xff] %vm2775, %v2608
          %2785 = vst.msk [vmem:[%s298 + $0x48] sm:$0xff] %vm2775, %v2611
          %2786 = vst.msk [vmem:[%s298 + $0x50] sm:$0xff] %vm2775, %v2614
          %2787 = vst.msk [vmem:[%s298 + $0x58] sm:$0xff] %vm2775, %v2617
          %2788 = vst.msk [vmem:[%s298 + $0x60] sm:$0xff] %vm2775, %v2620
          %2789 = vst.msk [vmem:[%s298 + $0x68] sm:$0xff] %vm2775, %v2623
          %2790 = vst.msk [vmem:[%s298 + $0x70] sm:$0xff] %vm2775, %v2626
          %2791 = vst.msk [vmem:[%s298 + $0x78] sm:$0xff] %vm2775, %v2629
          %2792 = vst.msk [vmem:[%s298 + $0x80] sm:$0xff] %vm2775, %v2632
          %2793 = vst.msk [vmem:[%s298 + $0x88] sm:$0xff] %vm2775, %v2635
          %2794 = vst.msk [vmem:[%s298 + $0x90] sm:$0xff] %vm2775, %v2638
          %2795 = vst.msk [vmem:[%s298 + $0x98] sm:$0xff] %vm2775, %v2641
          %2796 = vst.msk [vmem:[%s298 + $0xa0] sm:$0xff] %vm2775, %v2644
          %2797 = vst.msk [vmem:[%s298 + $0xa8] sm:$0xff] %vm2775, %v2647
          %2798 = vst.msk [vmem:[%s298 + $0xb0] sm:$0xff] %vm2775, %v2650
          %2799 = vst.msk [vmem:[%s298 + $0xb8] sm:$0xff] %vm2775, %v2653
          %2800 = vst.msk [vmem:[%s298 + $0xc0] sm:$0xff] %vm2775, %v2656
          %2801 = vst.msk [vmem:[%s298 + $0xc8] sm:$0xff] %vm2775, %v2659
          %2802 = vst.msk [vmem:[%s298 + $0xd0] sm:$0xff] %vm2775, %v2662
          %2803 = vst.msk [vmem:[%s298 + $0xd8] sm:$0xff] %vm2775, %v2665
          %2804 = vst.msk [vmem:[%s298 + $0xe0] sm:$0xff] %vm2775, %v2668
          %2805 = vst.msk [vmem:[%s298 + $0xe8] sm:$0xff] %vm2775, %v2671
          %2806 = vst.msk [vmem:[%s298 + $0xf0] sm:$0xff] %vm2775, %v2674
          %2807 = vst.msk [vmem:[%s298 + $0xf8] sm:$0xff] %vm2775, %v2677
          %2808 = vst.msk [vmem:[%s298 + $0x100] sm:$0xff] %vm2775, %v2680
          %2809 = vst.msk [vmem:[%s298 + $0x108] sm:$0xff] %vm2775, %v2683
          %2810 = vst.msk [vmem:[%s298 + $0x110] sm:$0xff] %vm2775, %v2686
          %2811 = vst.msk [vmem:[%s298 + $0x118] sm:$0xff] %vm2775, %v2689
          %2812 = vst.msk [vmem:[%s298 + $0x120] sm:$0xff] %vm2775, %v2692
          %2813 = vst.msk [vmem:[%s298 + $0x128] sm:$0xff] %vm2775, %v2695
          %2814 = vst.msk [vmem:[%s298 + $0x130] sm:$0xff] %vm2775, %v2698
          %2815 = vst.msk [vmem:[%s298 + $0x138] sm:$0xff] %vm2775, %v2701
          %2816 = vst.msk [vmem:[%s298 + $0x140] sm:$0xff] %vm2775, %v2704
          %2817 = vst.msk [vmem:[%s298 + $0x148] sm:$0xff] %vm2775, %v2707
          %2818 = vst.msk [vmem:[%s298 + $0x150] sm:$0xff] %vm2775, %v2710
          %2819 = vst.msk [vmem:[%s298 + $0x158] sm:$0xff] %vm2775, %v2713
          %2820 = vst.msk [vmem:[%s298 + $0x160] sm:$0xff] %vm2775, %v2716
          %2821 = vst.msk [vmem:[%s298 + $0x168] sm:$0xff] %vm2775, %v2719
          %2822 = vst.msk [vmem:[%s298 + $0x170] sm:$0xff] %vm2775, %v2722
          %2823 = vst.msk [vmem:[%s298 + $0x178] sm:$0xff] %vm2775, %v2725
          %2824 = vst.msk [vmem:[%s298 + $0x180] sm:$0xff] %vm2775, %v2728
          %2825 = vst.msk [vmem:[%s298 + $0x188] sm:$0xff] %vm2775, %v2731
          %2826 = vst.msk [vmem:[%s298 + $0x190] sm:$0xff] %vm2775, %v2734
          %2827 = vst.msk [vmem:[%s298 + $0x198] sm:$0xff] %vm2775, %v2737
          %2828 = vst.msk [vmem:[%s298 + $0x1a0] sm:$0xff] %vm2775, %v2740
          %2829 = vst.msk [vmem:[%s298 + $0x1a8] sm:$0xff] %vm2775, %v2743
          %2830 = vst.msk [vmem:[%s298 + $0x1b0] sm:$0xff] %vm2775, %v2746
          %2831 = vst.msk [vmem:[%s298 + $0x1b8] sm:$0xff] %vm2775, %v2749
          %2832 = vst.msk [vmem:[%s298 + $0x1c0] sm:$0xff] %vm2775, %v2752
          %2833 = vst.msk [vmem:[%s298 + $0x1c8] sm:$0xff] %vm2775, %v2755
          %2834 = vst.msk [vmem:[%s298 + $0x1d0] sm:$0xff] %vm2775, %v2758
          %2835 = vst.msk [vmem:[%s298 + $0x1d8] sm:$0xff] %vm2775, %v2761
          %2836 = vst.msk [vmem:[%s298 + $0x1e0] sm:$0xff] %vm2775, %v2764
          %2837 = vst.msk [vmem:[%s298 + $0x1e8] sm:$0xff] %vm2775, %v2767
          %2838 = vst.msk [vmem:[%s298 + $0x1f0] sm:$0xff] %vm2775, %v2770
          %2839 = vst.msk [vmem:[%s298 + $0x1f8] sm:$0xff] %vm2775, %v2773
        $region68: #{tpu_custom_call.1} parent=47 // pred_fallthru
          _
        %s2840 = sand.u32 %s196, 1
        %s2841 = sand.u32 %s196, 1
        %s2842 = smul.addr %s2841, 512
        %s2843 = scalar_lea.vmem [#allocation5], %s2842
        // Predicated region
        $region73: #{tpu_custom_call.1} parent=47 // pred_check
          %p2844 = pneg %p206
        $region74: #{tpu_custom_call.1} parent=47 // pred_check_branch
          %2846 = sbr.rel (%p2844) target = $region76
        $region75: #{tpu_custom_call.1} parent=47 // pred_region
          %s2847 = smul.u32 %s23, %s22
          %s2848 = smul.u32 64, %s2847
          %s2849 = ssub.s32 50, %s2848
          %s2850 = smul.u32 8, %s2849
          %p2851 = scmp.ne.s32.totalorder 0, %s2850
          %s2852 = smul.addr %s2848, 8
          %s2853 = scalar_lea.vmem %s7, %s2852
          // Predicated region
          $region77: #{tpu_custom_call.1} parent=75 // pred_check
            %p2854 = pneg %p2851
          $region78: #{tpu_custom_call.1} parent=75 // pred_check_branch
            %2856 = sbr.rel (%p2854) target = $region80
          $region79: #{tpu_custom_call.1} parent=75 // pred_region
            // Predicated region
            $region81: #{tpu_custom_call.1} parent=79 // pred_check
              _
            $region82: #{tpu_custom_call.1} parent=79 // pred_check_branch
              %2858 = sbr.rel (0) target = $region84
            $region83: #{tpu_custom_call.1} parent=79 // pred_region
              // Predicated region
              $region103: #{tpu_custom_call.1} parent=83 // pred_check
                _
              $region104: #{tpu_custom_call.1} parent=83 // pred_check_branch
                %2970 = sbr.rel (0) target = $region106
              $region105: #{tpu_custom_call.1} parent=83 // pred_region
                %s2971 = sshrl.u32 %s2849, 5
                // While loop
                $region107: #{tpu_custom_call.1} parent=105 // loop_pre_header
                  _
                $region108: #{tpu_custom_call.1} parent=105 // loop_header
                  %s2973 = sphi 0, %s2975
                  %p2974 = scmp.ge.s32.totalorder %s2973, %s2971
                  %s2978 = sphi 0, %s3047
                  %s2979 = sphi %s2843, %s3050
                  %s2980 = sphi %s2853, %s3051
                $region109: #{tpu_custom_call.1} parent=105 // loop_header_branch
                  %2977 = sbr.rel (%p2974) target = $region113
                $region110: #{tpu_custom_call.1} parent=105 // loop_body
                  %v2981 = vld [vmem:[%s2979] sm:$0xff]
                  %2982 = vst [vmem:[%s2980] sm:$0xff] %v2981
                  %v2983 = vld [vmem:[%s2979 + $0x8] sm:$0xff]
                  %2984 = vst [vmem:[%s2980 + $0x8] sm:$0xff] %v2983
                  %v2985 = vld [vmem:[%s2979 + $0x10] sm:$0xff]
                  %2986 = vst [vmem:[%s2980 + $0x10] sm:$0xff] %v2985
                  %v2987 = vld [vmem:[%s2979 + $0x18] sm:$0xff]
                  %2988 = vst [vmem:[%s2980 + $0x18] sm:$0xff] %v2987
                  %v2989 = vld [vmem:[%s2979 + $0x20] sm:$0xff]
                  %2990 = vst [vmem:[%s2980 + $0x20] sm:$0xff] %v2989
                  %v2991 = vld [vmem:[%s2979 + $0x28] sm:$0xff]
                  %2992 = vst [vmem:[%s2980 + $0x28] sm:$0xff] %v2991
                  %v2993 = vld [vmem:[%s2979 + $0x30] sm:$0xff]
                  %2994 = vst [vmem:[%s2980 + $0x30] sm:$0xff] %v2993
                  %v2995 = vld [vmem:[%s2979 + $0x38] sm:$0xff]
                  %2996 = vst [vmem:[%s2980 + $0x38] sm:$0xff] %v2995
                  %v2997 = vld [vmem:[%s2979 + $0x40] sm:$0xff]
                  %2998 = vst [vmem:[%s2980 + $0x40] sm:$0xff] %v2997
                  %v2999 = vld [vmem:[%s2979 + $0x48] sm:$0xff]
                  %3000 = vst [vmem:[%s2980 + $0x48] sm:$0xff] %v2999
                  %v3001 = vld [vmem:[%s2979 + $0x50] sm:$0xff]
                  %3002 = vst [vmem:[%s2980 + $0x50] sm:$0xff] %v3001
                  %v3003 = vld [vmem:[%s2979 + $0x58] sm:$0xff]
                  %3004 = vst [vmem:[%s2980 + $0x58] sm:$0xff] %v3003
                  %v3005 = vld [vmem:[%s2979 + $0x60] sm:$0xff]
                  %3006 = vst [vmem:[%s2980 + $0x60] sm:$0xff] %v3005
                  %v3007 = vld [vmem:[%s2979 + $0x68] sm:$0xff]
                  %3008 = vst [vmem:[%s2980 + $0x68] sm:$0xff] %v3007
                  %v3009 = vld [vmem:[%s2979 + $0x70] sm:$0xff]
                  %3010 = vst [vmem:[%s2980 + $0x70] sm:$0xff] %v3009
                  %v3011 = vld [vmem:[%s2979 + $0x78] sm:$0xff]
                  %3012 = vst [vmem:[%s2980 + $0x78] sm:$0xff] %v3011
                  %v3013 = vld [vmem:[%s2979 + $0x80] sm:$0xff]
                  %3014 = vst [vmem:[%s2980 + $0x80] sm:$0xff] %v3013
                  %v3015 = vld [vmem:[%s2979 + $0x88] sm:$0xff]
                  %3016 = vst [vmem:[%s2980 + $0x88] sm:$0xff] %v3015
                  %v3017 = vld [vmem:[%s2979 + $0x90] sm:$0xff]
                  %3018 = vst [vmem:[%s2980 + $0x90] sm:$0xff] %v3017
                  %v3019 = vld [vmem:[%s2979 + $0x98] sm:$0xff]
                  %3020 = vst [vmem:[%s2980 + $0x98] sm:$0xff] %v3019
                  %v3021 = vld [vmem:[%s2979 + $0xa0] sm:$0xff]
                  %3022 = vst [vmem:[%s2980 + $0xa0] sm:$0xff] %v3021
                  %v3023 = vld [vmem:[%s2979 + $0xa8] sm:$0xff]
                  %3024 = vst [vmem:[%s2980 + $0xa8] sm:$0xff] %v3023
                  %v3025 = vld [vmem:[%s2979 + $0xb0] sm:$0xff]
                  %3026 = vst [vmem:[%s2980 + $0xb0] sm:$0xff] %v3025
                  %v3027 = vld [vmem:[%s2979 + $0xb8] sm:$0xff]
                  %3028 = vst [vmem:[%s2980 + $0xb8] sm:$0xff] %v3027
                  %v3029 = vld [vmem:[%s2979 + $0xc0] sm:$0xff]
                  %3030 = vst [vmem:[%s2980 + $0xc0] sm:$0xff] %v3029
                  %v3031 = vld [vmem:[%s2979 + $0xc8] sm:$0xff]
                  %3032 = vst [vmem:[%s2980 + $0xc8] sm:$0xff] %v3031
                  %v3033 = vld [vmem:[%s2979 + $0xd0] sm:$0xff]
                  %3034 = vst [vmem:[%s2980 + $0xd0] sm:$0xff] %v3033
                  %v3035 = vld [vmem:[%s2979 + $0xd8] sm:$0xff]
                  %3036 = vst [vmem:[%s2980 + $0xd8] sm:$0xff] %v3035
                  %v3037 = vld [vmem:[%s2979 + $0xe0] sm:$0xff]
                  %3038 = vst [vmem:[%s2980 + $0xe0] sm:$0xff] %v3037
                  %v3039 = vld [vmem:[%s2979 + $0xe8] sm:$0xff]
                  %3040 = vst [vmem:[%s2980 + $0xe8] sm:$0xff] %v3039
                  %v3041 = vld [vmem:[%s2979 + $0xf0] sm:$0xff]
                  %3042 = vst [vmem:[%s2980 + $0xf0] sm:$0xff] %v3041
                  %v3043 = vld [vmem:[%s2979 + $0xf8] sm:$0xff]
                  %3044 = vst [vmem:[%s2980 + $0xf8] sm:$0xff] %v3043
                  %s3045 = sadd.s32 1, %s2978
                  %p3046 = scmp.ge.s32.totalorder %s3045, %s2971
                  %s3047 = scalar_select %p3046, 0, %s3045
                  %s3048 = smul.u32 %s3047, 256
                  %s3049 = smul.u32 %s3047, 256
                  %s3050 = scalar_lea.vmem %s2843, %s3048 [#allocation5]
                  %s3051 = scalar_lea.vmem %s2853, %s3049
                $region111: #{tpu_custom_call.1} parent=105 // loop_footer
                  %s2975 = sadd.s32 %s2973, 1
                $region112: #{tpu_custom_call.1} parent=105 // loop_footer_branch
                  %2972 = sbr.rel target = $region108
                $region113: #{tpu_custom_call.1} parent=105 // loop_exit
                  _
                %s3052 = sshrl.u32 %s2849, 5
                %s3053 = sand.u32 %s2849, 31
                %s3054 = smul.u32 %s3052, 32
                %s3055 = smul.u32 8, %s3054
                %s3056 = scalar_lea.vmem %s2843, %s3055 [#allocation5]
                %s3057 = smul.u32 8, %s3054
                %s3058 = scalar_lea.vmem %s2853, %s3057
                // While loop
                $region114: #{tpu_custom_call.1} parent=105 // loop_pre_header
                  _
                $region115: #{tpu_custom_call.1} parent=105 // loop_header
                  %s3060 = sphi 0, %s3062
                  %p3061 = scmp.ge.s32.totalorder %s3060, %s3053
                  %s3065 = sphi 0, %s3072
                  %s3066 = sphi %s3056, %s3075
                  %s3067 = sphi %s3058, %s3076
                $region116: #{tpu_custom_call.1} parent=105 // loop_header_branch
                  %3064 = sbr.rel (%p3061) target = $region120
                $region117: #{tpu_custom_call.1} parent=105 // loop_body
                  %v3068 = vld [vmem:[%s3066] sm:$0xff]
                  %3069 = vst [vmem:[%s3067] sm:$0xff] %v3068
                  %s3070 = sadd.s32 1, %s3065
                  %p3071 = scmp.ge.s32.totalorder %s3070, %s3053
                  %s3072 = scalar_select %p3071, 0, %s3070
                  %s3073 = smul.u32 %s3072, 8
                  %s3074 = smul.u32 %s3072, 8
                  %s3075 = scalar_lea.vmem %s3056, %s3073 [#allocation5]
                  %s3076 = scalar_lea.vmem %s3058, %s3074
                $region118: #{tpu_custom_call.1} parent=105 // loop_footer
                  %s3062 = sadd.s32 %s3060, 1
                $region119: #{tpu_custom_call.1} parent=105 // loop_footer_branch
                  %3059 = sbr.rel target = $region115
                $region120: #{tpu_custom_call.1} parent=105 // loop_exit
                  _
              $region106: #{tpu_custom_call.1} parent=83 // pred_fallthru
                _
              // Predicated region
              $region121: #{tpu_custom_call.1} parent=83 // pred_check
                _
              $region122: #{tpu_custom_call.1} parent=83 // pred_check_branch
                %3078 = sbr.rel target = $region124
              $region123: #{tpu_custom_call.1} parent=83 // pred_region
                _
              $region124: #{tpu_custom_call.1} parent=83 // pred_fallthru
                _
            $region84: #{tpu_custom_call.1} parent=79 // pred_fallthru
              _
            // Predicated region
            $region85: #{tpu_custom_call.1} parent=79 // pred_check
              _
            $region86: #{tpu_custom_call.1} parent=79 // pred_check_branch
              %2860 = sbr.rel target = $region88
            $region87: #{tpu_custom_call.1} parent=79 // pred_region
              %s2862 = ssub.s32 256, 1
              %s2863 = sshrl.u32 %s2849, 5
              // While loop
              $region89: #{tpu_custom_call.1} parent=87 // loop_pre_header
                _
              $region90: #{tpu_custom_call.1} parent=87 // loop_header
                %s2865 = sphi 0, %s2867
                %p2866 = scmp.ge.s32.totalorder %s2865, %s2863
                %s2870 = sphi 0, %s2939
                %s2871 = sphi %s2843, %s2942
                %s2872 = sphi %s2853, %s2943
              $region91: #{tpu_custom_call.1} parent=87 // loop_header_branch
                %2869 = sbr.rel (%p2866) target = $region95
              $region92: #{tpu_custom_call.1} parent=87 // loop_body
                %v2873 = vld [vmem:[%s2871] sm:%s2862]
                %2874 = vst [vmem:[%s2872] sm:%s2862] %v2873
                %v2875 = vld [vmem:[%s2871 + $0x8] sm:%s2862]
                %2876 = vst [vmem:[%s2872 + $0x8] sm:%s2862] %v2875
                %v2877 = vld [vmem:[%s2871 + $0x10] sm:%s2862]
                %2878 = vst [vmem:[%s2872 + $0x10] sm:%s2862] %v2877
                %v2879 = vld [vmem:[%s2871 + $0x18] sm:%s2862]
                %2880 = vst [vmem:[%s2872 + $0x18] sm:%s2862] %v2879
                %v2881 = vld [vmem:[%s2871 + $0x20] sm:%s2862]
                %2882 = vst [vmem:[%s2872 + $0x20] sm:%s2862] %v2881
                %v2883 = vld [vmem:[%s2871 + $0x28] sm:%s2862]
                %2884 = vst [vmem:[%s2872 + $0x28] sm:%s2862] %v2883
                %v2885 = vld [vmem:[%s2871 + $0x30] sm:%s2862]
                %2886 = vst [vmem:[%s2872 + $0x30] sm:%s2862] %v2885
                %v2887 = vld [vmem:[%s2871 + $0x38] sm:%s2862]
                %2888 = vst [vmem:[%s2872 + $0x38] sm:%s2862] %v2887
                %v2889 = vld [vmem:[%s2871 + $0x40] sm:%s2862]
                %2890 = vst [vmem:[%s2872 + $0x40] sm:%s2862] %v2889
                %v2891 = vld [vmem:[%s2871 + $0x48] sm:%s2862]
                %2892 = vst [vmem:[%s2872 + $0x48] sm:%s2862] %v2891
                %v2893 = vld [vmem:[%s2871 + $0x50] sm:%s2862]
                %2894 = vst [vmem:[%s2872 + $0x50] sm:%s2862] %v2893
                %v2895 = vld [vmem:[%s2871 + $0x58] sm:%s2862]
                %2896 = vst [vmem:[%s2872 + $0x58] sm:%s2862] %v2895
                %v2897 = vld [vmem:[%s2871 + $0x60] sm:%s2862]
                %2898 = vst [vmem:[%s2872 + $0x60] sm:%s2862] %v2897
                %v2899 = vld [vmem:[%s2871 + $0x68] sm:%s2862]
                %2900 = vst [vmem:[%s2872 + $0x68] sm:%s2862] %v2899
                %v2901 = vld [vmem:[%s2871 + $0x70] sm:%s2862]
                %2902 = vst [vmem:[%s2872 + $0x70] sm:%s2862] %v2901
                %v2903 = vld [vmem:[%s2871 + $0x78] sm:%s2862]
                %2904 = vst [vmem:[%s2872 + $0x78] sm:%s2862] %v2903
                %v2905 = vld [vmem:[%s2871 + $0x80] sm:%s2862]
                %2906 = vst [vmem:[%s2872 + $0x80] sm:%s2862] %v2905
                %v2907 = vld [vmem:[%s2871 + $0x88] sm:%s2862]
                %2908 = vst [vmem:[%s2872 + $0x88] sm:%s2862] %v2907
                %v2909 = vld [vmem:[%s2871 + $0x90] sm:%s2862]
                %2910 = vst [vmem:[%s2872 + $0x90] sm:%s2862] %v2909
                %v2911 = vld [vmem:[%s2871 + $0x98] sm:%s2862]
                %2912 = vst [vmem:[%s2872 + $0x98] sm:%s2862] %v2911
                %v2913 = vld [vmem:[%s2871 + $0xa0] sm:%s2862]
                %2914 = vst [vmem:[%s2872 + $0xa0] sm:%s2862] %v2913
                %v2915 = vld [vmem:[%s2871 + $0xa8] sm:%s2862]
                %2916 = vst [vmem:[%s2872 + $0xa8] sm:%s2862] %v2915
                %v2917 = vld [vmem:[%s2871 + $0xb0] sm:%s2862]
                %2918 = vst [vmem:[%s2872 + $0xb0] sm:%s2862] %v2917
                %v2919 = vld [vmem:[%s2871 + $0xb8] sm:%s2862]
                %2920 = vst [vmem:[%s2872 + $0xb8] sm:%s2862] %v2919
                %v2921 = vld [vmem:[%s2871 + $0xc0] sm:%s2862]
                %2922 = vst [vmem:[%s2872 + $0xc0] sm:%s2862] %v2921
                %v2923 = vld [vmem:[%s2871 + $0xc8] sm:%s2862]
                %2924 = vst [vmem:[%s2872 + $0xc8] sm:%s2862] %v2923
                %v2925 = vld [vmem:[%s2871 + $0xd0] sm:%s2862]
                %2926 = vst [vmem:[%s2872 + $0xd0] sm:%s2862] %v2925
                %v2927 = vld [vmem:[%s2871 + $0xd8] sm:%s2862]
                %2928 = vst [vmem:[%s2872 + $0xd8] sm:%s2862] %v2927
                %v2929 = vld [vmem:[%s2871 + $0xe0] sm:%s2862]
                %2930 = vst [vmem:[%s2872 + $0xe0] sm:%s2862] %v2929
                %v2931 = vld [vmem:[%s2871 + $0xe8] sm:%s2862]
                %2932 = vst [vmem:[%s2872 + $0xe8] sm:%s2862] %v2931
                %v2933 = vld [vmem:[%s2871 + $0xf0] sm:%s2862]
                %2934 = vst [vmem:[%s2872 + $0xf0] sm:%s2862] %v2933
                %v2935 = vld [vmem:[%s2871 + $0xf8] sm:%s2862]
                %2936 = vst [vmem:[%s2872 + $0xf8] sm:%s2862] %v2935
                %s2937 = sadd.s32 1, %s2870
                %p2938 = scmp.ge.s32.totalorder %s2937, %s2863
                %s2939 = scalar_select %p2938, 0, %s2937
                %s2940 = smul.u32 %s2939, 256
                %s2941 = smul.u32 %s2939, 256
                %s2942 = scalar_lea.vmem %s2843, %s2940 [#allocation5]
                %s2943 = scalar_lea.vmem %s2853, %s2941
              $region93: #{tpu_custom_call.1} parent=87 // loop_footer
                %s2867 = sadd.s32 %s2865, 1
              $region94: #{tpu_custom_call.1} parent=87 // loop_footer_branch
                %2864 = sbr.rel target = $region90
              $region95: #{tpu_custom_call.1} parent=87 // loop_exit
                _
              %s2944 = sshrl.u32 %s2849, 5
              %s2945 = sand.u32 %s2849, 31
              %s2946 = smul.u32 %s2944, 32
              %s2947 = smul.u32 8, %s2946
              %s2948 = scalar_lea.vmem %s2843, %s2947 [#allocation5]
              %s2949 = smul.u32 8, %s2946
              %s2950 = scalar_lea.vmem %s2853, %s2949
              // While loop
              $region96: #{tpu_custom_call.1} parent=87 // loop_pre_header
                _
              $region97: #{tpu_custom_call.1} parent=87 // loop_header
                %s2952 = sphi 0, %s2954
                %p2953 = scmp.ge.s32.totalorder %s2952, %s2945
                %s2957 = sphi 0, %s2964
                %s2958 = sphi %s2948, %s2967
                %s2959 = sphi %s2950, %s2968
              $region98: #{tpu_custom_call.1} parent=87 // loop_header_branch
                %2956 = sbr.rel (%p2953) target = $region102
              $region99: #{tpu_custom_call.1} parent=87 // loop_body
                %v2960 = vld [vmem:[%s2958] sm:%s2862]
                %2961 = vst [vmem:[%s2959] sm:%s2862] %v2960
                %s2962 = sadd.s32 1, %s2957
                %p2963 = scmp.ge.s32.totalorder %s2962, %s2945
                %s2964 = scalar_select %p2963, 0, %s2962
                %s2965 = smul.u32 %s2964, 8
                %s2966 = smul.u32 %s2964, 8
                %s2967 = scalar_lea.vmem %s2948, %s2965 [#allocation5]
                %s2968 = scalar_lea.vmem %s2950, %s2966
              $region100: #{tpu_custom_call.1} parent=87 // loop_footer
                %s2954 = sadd.s32 %s2952, 1
              $region101: #{tpu_custom_call.1} parent=87 // loop_footer_branch
                %2951 = sbr.rel target = $region97
              $region102: #{tpu_custom_call.1} parent=87 // loop_exit
                _
            $region88: #{tpu_custom_call.1} parent=79 // pred_fallthru
              _
          $region80: #{tpu_custom_call.1} parent=75 // pred_fallthru
            _
          %3079 = vnop
        $region76: #{tpu_custom_call.1} parent=47 // pred_fallthru
          _
      $region48: #{tpu_custom_call.1} parent=5 // pred_fallthru
        _
      %p3080 = scmp.le.s32.totalorder 2, %s13
      // Predicated region
      $region125: #{tpu_custom_call.1} parent=5 // pred_check
        %p3081 = pneg %p3080
      $region126: #{tpu_custom_call.1} parent=5 // pred_check_branch
        %3083 = sbr.rel (%p3081) target = $region128
      $region127: #{tpu_custom_call.1} parent=5 // pred_region
        %s3084 = ssub.s32 %s13, 2
        // Predicated region
        $region129: #{tpu_custom_call.1} parent=127 // pred_check
          %p3085 = pneg %p212
        $region130: #{tpu_custom_call.1} parent=127 // pred_check_branch
          %3087 = sbr.rel (%p3085) target = $region132
        $region131: #{tpu_custom_call.1} parent=127 // pred_region
          %s3088 = sand.u32 %s197, 1
          %s3089 = sand.u32 %s197, 1
          %s3090 = smul.addr %s3089, 512
          %s3091 = scalar_lea.vmem [#allocation5], %s3090
        $region132: #{tpu_custom_call.1} parent=127 // pred_fallthru
          _
      $region128: #{tpu_custom_call.1} parent=5 // pred_fallthru
        _
    $region6: #{tpu_custom_call.1} parent=1 // loop_footer
      %s17 = sadd.s32 1, %s13
    $region7: #{tpu_custom_call.1} parent=1 // loop_footer_branch
      %12 = sbr.rel target = $region3
    $region8: #{tpu_custom_call.1} parent=1 // loop_exit
      _

</llo_original>
